<compile_context>
chip_gen: v5e
topology: v5e:2x2
jax: 0.10.0
libtpu: 0.0.40
codegen_flags: <defaults>
</compile_context>

<pallas_src>
import jax
import jax.numpy as jnp
from jax.experimental import pallas as pl
from jax.experimental.pallas import tpu as pltpu


def se_conv_bn_kernel(x468_ref, w1_ref, b1_ref, x465_ref, w2_ref,
                      gamma_ref, beta_ref, o_ref):
    # ---- conv2d147 (1x1, 64 -> 1536) on the [1,1] spatial squeeze.
    # w1 kept in native [1536, 64] layout; x468 is a [1, 64] row.
    # Tiny (98K MACs): VPU multiply + XLU lane-reduce -> [1536, 1] column.
    s = jnp.sum(w1_ref[...] * x468_ref[...], axis=1, keepdims=True) + b1_ref[...]

    # ---- sigmoid gate (tanh form: EUP slot, numerically safe)        [1536, 1]
    gate = 0.5 * (jnp.tanh(0.5 * s) + 1.0)

    # ---- broadcast multiply with the native [1536, 49] feature map (f32 on VPU)
    xs = x465_ref[...] * gate                                          # [1536, 49]

    # ---- conv2d148 (1x1, 1536 -> 256, no bias): bf16 MXU matmul, f32 accumulate
    # w2 is native [256, 1536] (bf16); output is already channel-major [256, 49].
    y = jnp.dot(w2_ref[...], xs.astype(jnp.bfloat16),
                preferred_element_type=jnp.float32)                    # [256, 49]

    # ---- BatchNorm2d (training mode: biased batch stats per channel over N*H*W)
    mean = jnp.mean(y, axis=1, keepdims=True)                          # [256, 1]
    diff = y - mean
    var = jnp.mean(diff * diff, axis=1, keepdims=True)                 # [256, 1]
    inv = jax.lax.rsqrt(var + 0.001)
    o_ref[...] = gamma_ref[...] * diff * inv + beta_ref[...]           # [256, 49]


def prepare_params(w1, b1, w2, gamma, beta):
    """One-time parameter layout/dtype prep (weight-load time, NOT per call)."""
    C_mid, C_in = w1.shape[0], w1.shape[1]                 # 1536, 64
    C_out = w2.shape[0]                                    # 256
    w1_nat = w1.reshape(C_mid, C_in)                       # [1536, 64]  native layout
    b1_col = b1.reshape(C_mid, 1)                          # [1536, 1]
    w2_bf = w2.reshape(C_out, C_mid).astype(jnp.bfloat16)  # [256, 1536] native, bf16
    gamma_col = gamma.reshape(C_out, 1)                    # [256, 1]
    beta_col = beta.reshape(C_out, 1)                      # [256, 1]
    return w1_nat, b1_col, w2_bf, gamma_col, beta_col


def module_m_forward(x468, x465, params):
    """x468: [1,64,1,1], x465: [1,1536,7,7] (NCHW, f32). Returns [1,256,7,7]."""
    w1_nat, b1_col, w2_bf, gamma_col, beta_col = params
    N, C_in = x468.shape[0], x468.shape[1]                 # 1, 64
    _, C_mid, H, W = x465.shape                            # 1, 1536, 7, 7
    C_out = w2_bf.shape[0]                                 # 256
    HW = H * W                                             # 49

    # Pure reshapes only — no transposes, no extra HBM round trips.
    x468_row = x468.reshape(1, C_in)                       # [1, 64]
    x465_m = x465.reshape(C_mid, HW)                       # [1536, 49] (native NCHW order)

    cost = pl.CostEstimate(
        flops=2 * C_out * C_mid * HW + 2 * C_mid * C_in
              + C_mid * HW + 6 * C_out * HW,
        transcendentals=C_mid,
        bytes_accessed=(x465_m.size * 4 + x468_row.size * 4 + w1_nat.size * 4
                        + b1_col.size * 4 + w2_bf.size * 2
                        + gamma_col.size * 4 + beta_col.size * 4
                        + C_out * HW * 4),
    )

    out = pl.pallas_call(
        se_conv_bn_kernel,
        out_shape=jax.ShapeDtypeStruct((C_out, HW), jnp.float32),
        in_specs=[pl.BlockSpec(memory_space=pltpu.MemorySpace.VMEM)] * 7,
        out_specs=pl.BlockSpec(memory_space=pltpu.MemorySpace.VMEM),
        cost_estimate=cost,
    )(x468_row, w1_nat, b1_col, x465_m, w2_bf, gamma_col, beta_col)    # [256, 49]

    return out.reshape(N, C_out, H, W)                     # pure reshape back to NCHW


def reference_forward(x468, x465, w1, b1, w2, gamma, beta):
    """Pure-JAX f32 reference for correctness check (matches the PyTorch module)."""
    s = jnp.einsum('ncij,oc->noij', x468, w1.reshape(1536, 64)) + b1.reshape(1, 1536, 1, 1)
    gate = jax.nn.sigmoid(s)
    xs = gate * x465
    y = jnp.einsum('ncij,oc->noij', xs, w2.reshape(256, 1536))
    mean = jnp.mean(y, axis=(0, 2, 3), keepdims=True)
    var = jnp.mean((y - mean) ** 2, axis=(0, 2, 3), keepdims=True)
    return gamma.reshape(1, -1, 1, 1) * (y - mean) * jax.lax.rsqrt(var + 0.001) \
        + beta.reshape(1, -1, 1, 1)


if __name__ == "__main__":
    key = jax.random.PRNGKey(0)
    k1, k2, k3, k4, k5 = jax.random.split(key, 5)

    # Module-implied shapes (already small): x468 [1,64,1,1], x465 [1,1536,7,7]
    x468 = jax.random.normal(k1, (1, 64, 1, 1), dtype=jnp.float32)
    x465 = jax.random.normal(k2, (1, 1536, 7, 7), dtype=jnp.float32)

    # Deterministic parameter init (synthetic, not a checkpoint)
    w1 = jax.random.normal(k3, (1536, 64, 1, 1), dtype=jnp.float32) * 0.05   # conv2d147 weight
    b1 = jax.random.normal(k4, (1536,), dtype=jnp.float32) * 0.05            # conv2d147 bias
    w2 = jax.random.normal(k5, (256, 1536, 1, 1), dtype=jnp.float32) * 0.02  # conv2d148 weight
    gamma = jnp.ones((256,), dtype=jnp.float32)                              # BN weight
    beta = jnp.zeros((256,), dtype=jnp.float32)                              # BN bias

    # One-time layout/dtype prep (would live at weight-load time in a real model).
    params = prepare_params(w1, b1, w2, gamma, beta)

    fwd = jax.jit(module_m_forward)
    out = jax.block_until_ready(fwd(x468, x465, params))

    ref = reference_forward(x468, x465, w1, b1, w2, gamma, beta)
    assert out.shape == (1, 256, 7, 7)
    # bf16 storage of w2 (and bf16 MXU inputs for the 1536->256 matmul) gives ~1e-3
    # level deviations after BN normalization vs the full-f32 reference.
    assert jnp.allclose(out, ref, atol=2e-2, rtol=2e-2), "mismatch vs reference"

    print("KERNEL_OK")
</pallas_src>

<mosaic_0001>
module attributes {stable_mosaic.version = 11 : i64} {
  func.func @se_conv_bn_kernel(%arg0: memref<1x64xf32, #tpu.memory_space<vmem>>, %arg1: memref<1536x64xf32, #tpu.memory_space<vmem>>, %arg2: memref<1536x1xf32, #tpu.memory_space<vmem>>, %arg3: memref<1536x49xf32, #tpu.memory_space<vmem>>, %arg4: memref<256x1536xbf16, #tpu.memory_space<vmem>>, %arg5: memref<256x1xf32, #tpu.memory_space<vmem>>, %arg6: memref<256x1xf32, #tpu.memory_space<vmem>>, %arg7: memref<256x49xf32, #tpu.memory_space<vmem>>) attributes {dimension_semantics = [], scalar_prefetch = 0 : i64, scratch_operands = 0 : i64, tpu.core_type = #tpu.core_type<tc>} {
    %c0 = arith.constant 0 : index
    %c0_0 = arith.constant 0 : index
    %0 = vector.load %arg1[%c0, %c0_0] : memref<1536x64xf32, #tpu.memory_space<vmem>>, vector<1536x64xf32>
    %c0_1 = arith.constant 0 : index
    %c0_2 = arith.constant 0 : index
    %1 = vector.load %arg0[%c0_1, %c0_2] : memref<1x64xf32, #tpu.memory_space<vmem>>, vector<1x64xf32>
    %2 = vector.broadcast %1 : vector<1x64xf32> to vector<1536x64xf32>
    %3 = arith.mulf %0, %2 : vector<1536x64xf32>
    %cst = arith.constant dense<0.000000e+00> : vector<1536xf32>
    %4 = vector.multi_reduction <add>, %3, %cst [1] : vector<1536x64xf32> to vector<1536xf32>
    %5 = vector.shape_cast %4 : vector<1536xf32> to vector<1536x1xf32>
    %c0_3 = arith.constant 0 : index
    %c0_4 = arith.constant 0 : index
    %6 = vector.load %arg2[%c0_3, %c0_4] : memref<1536x1xf32, #tpu.memory_space<vmem>>, vector<1536x1xf32>
    %7 = arith.addf %5, %6 : vector<1536x1xf32>
    %cst_5 = arith.constant 5.000000e-01 : f32
    %8 = vector.broadcast %cst_5 : f32 to vector<1536x1xf32>
    %9 = arith.mulf %8, %7 : vector<1536x1xf32>
    %10 = math.tanh %9 : vector<1536x1xf32>
    %cst_6 = arith.constant 1.000000e+00 : f32
    %11 = vector.broadcast %cst_6 : f32 to vector<1536x1xf32>
    %12 = arith.addf %10, %11 : vector<1536x1xf32>
    %cst_7 = arith.constant 5.000000e-01 : f32
    %13 = vector.broadcast %cst_7 : f32 to vector<1536x1xf32>
    %14 = arith.mulf %13, %12 : vector<1536x1xf32>
    %c0_8 = arith.constant 0 : index
    %c0_9 = arith.constant 0 : index
    %15 = vector.load %arg3[%c0_8, %c0_9] : memref<1536x49xf32, #tpu.memory_space<vmem>>, vector<1536x49xf32>
    %16 = vector.broadcast %14 : vector<1536x1xf32> to vector<1536x49xf32>
    %17 = arith.mulf %15, %16 : vector<1536x49xf32>
    %c0_10 = arith.constant 0 : index
    %c0_11 = arith.constant 0 : index
    %18 = vector.load %arg4[%c0_10, %c0_11] : memref<256x1536xbf16, #tpu.memory_space<vmem>>, vector<256x1536xbf16>
    %19 = arith.truncf %17 : vector<1536x49xf32> to vector<1536x49xbf16>
    %cst_12 = arith.constant dense<0.000000e+00> : vector<256x49xf32>
    %20 = tpu.matmul %18, %19, %cst_12 {dimension_numbers = #tpu.dot_dimension_numbers<[1], [0], [0], [1], [0, 0, 1, 1], [], []>} : vector<256x1536xbf16>, vector<1536x49xbf16>, vector<256x49xf32> -> vector<256x49xf32>
    %cst_13 = arith.constant dense<0.000000e+00> : vector<256xf32>
    %21 = vector.multi_reduction <add>, %20, %cst_13 [1] : vector<256x49xf32> to vector<256xf32>
    %22 = vector.shape_cast %21 : vector<256xf32> to vector<256x1xf32>
    %cst_14 = arith.constant 4.900000e+01 : f32
    %23 = vector.broadcast %cst_14 : f32 to vector<256x1xf32>
    %24 = arith.divf %22, %23 : vector<256x1xf32>
    %25 = vector.broadcast %24 : vector<256x1xf32> to vector<256x49xf32>
    %26 = arith.subf %20, %25 : vector<256x49xf32>
    %27 = arith.mulf %26, %26 : vector<256x49xf32>
    %cst_15 = arith.constant dense<0.000000e+00> : vector<256xf32>
    %28 = vector.multi_reduction <add>, %27, %cst_15 [1] : vector<256x49xf32> to vector<256xf32>
    %29 = vector.shape_cast %28 : vector<256xf32> to vector<256x1xf32>
    %cst_16 = arith.constant 4.900000e+01 : f32
    %30 = vector.broadcast %cst_16 : f32 to vector<256x1xf32>
    %31 = arith.divf %29, %30 : vector<256x1xf32>
    %cst_17 = arith.constant 1.000000e-03 : f32
    %32 = vector.broadcast %cst_17 : f32 to vector<256x1xf32>
    %33 = arith.addf %31, %32 : vector<256x1xf32>
    %34 = math.rsqrt %33 : vector<256x1xf32>
    %c0_18 = arith.constant 0 : index
    %c0_19 = arith.constant 0 : index
    %35 = vector.load %arg5[%c0_18, %c0_19] : memref<256x1xf32, #tpu.memory_space<vmem>>, vector<256x1xf32>
    %36 = vector.broadcast %35 : vector<256x1xf32> to vector<256x49xf32>
    %37 = arith.mulf %36, %26 : vector<256x49xf32>
    %38 = vector.broadcast %34 : vector<256x1xf32> to vector<256x49xf32>
    %39 = arith.mulf %37, %38 : vector<256x49xf32>
    %c0_20 = arith.constant 0 : index
    %c0_21 = arith.constant 0 : index
    %40 = vector.load %arg6[%c0_20, %c0_21] : memref<256x1xf32, #tpu.memory_space<vmem>>, vector<256x1xf32>
    %41 = vector.broadcast %40 : vector<256x1xf32> to vector<256x49xf32>
    %42 = arith.addf %39, %41 : vector<256x49xf32>
    %c0_22 = arith.constant 0 : index
    %c0_23 = arith.constant 0 : index
    %43 = vector.load %arg7[%c0_22, %c0_23] : memref<256x49xf32, #tpu.memory_space<vmem>>, vector<256x49xf32>
    tpu.vector_store %arg7[%c0_22, %c0_23], %42 {strides = array<i32>} : memref<256x49xf32, #tpu.memory_space<vmem>>, vector<256x49xf32>,
    return
  }
}

</mosaic_0001>

<llo_original>
// kernel: module_m_forward.1
$region0: #{module_m_forward.1}
  #allocation0 [shape = 'u32[]', space=smem, size = 0x4, offset = 0x4, fixed_abs, tag = 'smem constant byte address 0x4 - core index']
  #allocation1 [shape = 'u32[72,128]{1,0:T(1,128)}', space=vmem, size = 0x9000, scoped, tag = 'internal scratch']
  %s0 = inlined_call_operand.vmem [shape: f32[1,64], index: 0, kind: input, shape index: {}]
  %s1 = inlined_call_operand.vmem [shape: f32[1536,64], index: 1, kind: input, shape index: {}]
  %s2 = inlined_call_operand.vmem [shape: f32[1536,1], index: 2, kind: input, shape index: {}]
  %s3 = inlined_call_operand.vmem [shape: f32[1536,49], index: 3, kind: input, shape index: {}]
  %s4 = inlined_call_operand.vmem [shape: bf16[256,1536], index: 4, kind: input, shape index: {}]
  %s5 = inlined_call_operand.vmem [shape: f32[256,1], index: 5, kind: input, shape index: {}]
  %s6 = inlined_call_operand.vmem [shape: f32[256,1], index: 6, kind: input, shape index: {}]
  %s7 = inlined_call_operand.vmem [shape: f32[256,49], index: 7, kind: output, shape index: {}]
  %s8 = sld [smem:[#allocation0]]
  $region38: #{module_m_forward.1} parent=0
    _
  %s10 = ssub.s32 1, %s8
  %s11 = scalar_select 0, %s10, %s8
  // Predicated region
  $region2: #{module_m_forward.1} parent=0 // pred_check
    _
  $region3: #{module_m_forward.1} parent=0 // pred_check_branch
    %13 = sbr.rel (0) target = $region5
  $region4: #{module_m_forward.1} parent=0 // pred_region
    _
  $region5: #{module_m_forward.1} parent=0 // pred_fallthru
    _
  // Predicated region
  $region6: #{module_m_forward.1} parent=0 // pred_check
    _
  $region7: #{module_m_forward.1} parent=0 // pred_check_branch
    %15 = sbr.rel (0) target = $region9
  $region8: #{module_m_forward.1} parent=0 // pred_region
    _
  $region9: #{module_m_forward.1} parent=0 // pred_fallthru
    _
  // Predicated region
  $region10: #{module_m_forward.1} parent=0 // pred_check
    _
  $region11: #{module_m_forward.1} parent=0 // pred_check_branch
    %17 = sbr.rel (0) target = $region13
  $region12: #{module_m_forward.1} parent=0 // pred_region
    _
  $region13: #{module_m_forward.1} parent=0 // pred_fallthru
    _
  // Predicated region
  $region14: #{module_m_forward.1} parent=0 // pred_check
    _
  $region15: #{module_m_forward.1} parent=0 // pred_check_branch
    %19 = sbr.rel (0) target = $region17
  $region16: #{module_m_forward.1} parent=0 // pred_region
    _
  $region17: #{module_m_forward.1} parent=0 // pred_fallthru
    _
  // Predicated region
  $region18: #{module_m_forward.1} parent=0 // pred_check
    _
  $region19: #{module_m_forward.1} parent=0 // pred_check_branch
    %21 = sbr.rel (0) target = $region21
  $region20: #{module_m_forward.1} parent=0 // pred_region
    _
  $region21: #{module_m_forward.1} parent=0 // pred_fallthru
    _
  // Predicated region
  $region22: #{module_m_forward.1} parent=0 // pred_check
    _
  $region23: #{module_m_forward.1} parent=0 // pred_check_branch
    %23 = sbr.rel (0) target = $region25
  $region24: #{module_m_forward.1} parent=0 // pred_region
    _
  $region25: #{module_m_forward.1} parent=0 // pred_fallthru
    _
  // Predicated region
  $region26: #{module_m_forward.1} parent=0 // pred_check
    _
  $region27: #{module_m_forward.1} parent=0 // pred_check_branch
    %25 = sbr.rel (0) target = $region29
  $region28: #{module_m_forward.1} parent=0 // pred_region
    _
  $region29: #{module_m_forward.1} parent=0 // pred_fallthru
    _
  %v26 = vld [vmem:[%s1] sm:$0xff]
  %v27 = vld [vmem:[%s1 + $0x8] sm:$0xff]
  %v28 = vld [vmem:[%s1 + $0x10] sm:$0xff]
  %v29 = vld [vmem:[%s1 + $0x18] sm:$0xff]
  %v30 = vld [vmem:[%s1 + $0x20] sm:$0xff]
  %v31 = vld [vmem:[%s1 + $0x28] sm:$0xff]
  %v32 = vld [vmem:[%s1 + $0x30] sm:$0xff]
  %v33 = vld [vmem:[%s1 + $0x38] sm:$0xff]
  %v34 = vld [vmem:[%s1 + $0x40] sm:$0xff]
  %v35 = vld [vmem:[%s1 + $0x48] sm:$0xff]
  %v36 = vld [vmem:[%s1 + $0x50] sm:$0xff]
  %v37 = vld [vmem:[%s1 + $0x58] sm:$0xff]
  %v38 = vld [vmem:[%s1 + $0x60] sm:$0xff]
  %v39 = vld [vmem:[%s1 + $0x68] sm:$0xff]
  %v40 = vld [vmem:[%s1 + $0x70] sm:$0xff]
  %v41 = vld [vmem:[%s1 + $0x78] sm:$0xff]
  %v42 = vld [vmem:[%s1 + $0x80] sm:$0xff]
  %v43 = vld [vmem:[%s1 + $0x88] sm:$0xff]
  %v44 = vld [vmem:[%s1 + $0x90] sm:$0xff]
  %v45 = vld [vmem:[%s1 + $0x98] sm:$0xff]
  %v46 = vld [vmem:[%s1 + $0xa0] sm:$0xff]
  %v47 = vld [vmem:[%s1 + $0xa8] sm:$0xff]
  %v48 = vld [vmem:[%s1 + $0xb0] sm:$0xff]
  %v49 = vld [vmem:[%s1 + $0xb8] sm:$0xff]
  %v50 = vld [vmem:[%s1 + $0xc0] sm:$0xff]
  %v51 = vld [vmem:[%s1 + $0xc8] sm:$0xff]
  %v52 = vld [vmem:[%s1 + $0xd0] sm:$0xff]
  %v53 = vld [vmem:[%s1 + $0xd8] sm:$0xff]
  %v54 = vld [vmem:[%s1 + $0xe0] sm:$0xff]
  %v55 = vld [vmem:[%s1 + $0xe8] sm:$0xff]
  %v56 = vld [vmem:[%s1 + $0xf0] sm:$0xff]
  %v57 = vld [vmem:[%s1 + $0xf8] sm:$0xff]
  %v58 = vld [vmem:[%s1 + $0x100] sm:$0xff]
  %v59 = vld [vmem:[%s1 + $0x108] sm:$0xff]
  %v60 = vld [vmem:[%s1 + $0x110] sm:$0xff]
  %v61 = vld [vmem:[%s1 + $0x118] sm:$0xff]
  %v62 = vld [vmem:[%s1 + $0x120] sm:$0xff]
  %v63 = vld [vmem:[%s1 + $0x128] sm:$0xff]
  %v64 = vld [vmem:[%s1 + $0x130] sm:$0xff]
  %v65 = vld [vmem:[%s1 + $0x138] sm:$0xff]
  %v66 = vld [vmem:[%s1 + $0x140] sm:$0xff]
  %v67 = vld [vmem:[%s1 + $0x148] sm:$0xff]
  %v68 = vld [vmem:[%s1 + $0x150] sm:$0xff]
  %v69 = vld [vmem:[%s1 + $0x158] sm:$0xff]
  %v70 = vld [vmem:[%s1 + $0x160] sm:$0xff]
  %v71 = vld [vmem:[%s1 + $0x168] sm:$0xff]
  %v72 = vld [vmem:[%s1 + $0x170] sm:$0xff]
  %v73 = vld [vmem:[%s1 + $0x178] sm:$0xff]
  %v74 = vld [vmem:[%s1 + $0x180] sm:$0xff]
  %v75 = vld [vmem:[%s1 + $0x188] sm:$0xff]
  %v76 = vld [vmem:[%s1 + $0x190] sm:$0xff]
  %v77 = vld [vmem:[%s1 + $0x198] sm:$0xff]
  %v78 = vld [vmem:[%s1 + $0x1a0] sm:$0xff]
  %v79 = vld [vmem:[%s1 + $0x1a8] sm:$0xff]
  %v80 = vld [vmem:[%s1 + $0x1b0] sm:$0xff]
  %v81 = vld [vmem:[%s1 + $0x1b8] sm:$0xff]
  %v82 = vld [vmem:[%s1 + $0x1c0] sm:$0xff]
  %v83 = vld [vmem:[%s1 + $0x1c8] sm:$0xff]
  %v84 = vld [vmem:[%s1 + $0x1d0] sm:$0xff]
  %v85 = vld [vmem:[%s1 + $0x1d8] sm:$0xff]
  %v86 = vld [vmem:[%s1 + $0x1e0] sm:$0xff]
  %v87 = vld [vmem:[%s1 + $0x1e8] sm:$0xff]
  %v88 = vld [vmem:[%s1 + $0x1f0] sm:$0xff]
  %v89 = vld [vmem:[%s1 + $0x1f8] sm:$0xff]
  %v90 = vld [vmem:[%s1 + $0x200] sm:$0xff]
  %v91 = vld [vmem:[%s1 + $0x208] sm:$0xff]
  %v92 = vld [vmem:[%s1 + $0x210] sm:$0xff]
  %v93 = vld [vmem:[%s1 + $0x218] sm:$0xff]
  %v94 = vld [vmem:[%s1 + $0x220] sm:$0xff]
  %v95 = vld [vmem:[%s1 + $0x228] sm:$0xff]
  %v96 = vld [vmem:[%s1 + $0x230] sm:$0xff]
  %v97 = vld [vmem:[%s1 + $0x238] sm:$0xff]
  %v98 = vld [vmem:[%s1 + $0x240] sm:$0xff]
  %v99 = vld [vmem:[%s1 + $0x248] sm:$0xff]
  %v100 = vld [vmem:[%s1 + $0x250] sm:$0xff]
  %v101 = vld [vmem:[%s1 + $0x258] sm:$0xff]
  %v102 = vld [vmem:[%s1 + $0x260] sm:$0xff]
  %v103 = vld [vmem:[%s1 + $0x268] sm:$0xff]
  %v104 = vld [vmem:[%s1 + $0x270] sm:$0xff]
  %v105 = vld [vmem:[%s1 + $0x278] sm:$0xff]
  %v106 = vld [vmem:[%s1 + $0x280] sm:$0xff]
  %v107 = vld [vmem:[%s1 + $0x288] sm:$0xff]
  %v108 = vld [vmem:[%s1 + $0x290] sm:$0xff]
  %v109 = vld [vmem:[%s1 + $0x298] sm:$0xff]
  %v110 = vld [vmem:[%s1 + $0x2a0] sm:$0xff]
  %v111 = vld [vmem:[%s1 + $0x2a8] sm:$0xff]
  %v112 = vld [vmem:[%s1 + $0x2b0] sm:$0xff]
  %v113 = vld [vmem:[%s1 + $0x2b8] sm:$0xff]
  %v114 = vld [vmem:[%s1 + $0x2c0] sm:$0xff]
  %v115 = vld [vmem:[%s1 + $0x2c8] sm:$0xff]
  %v116 = vld [vmem:[%s1 + $0x2d0] sm:$0xff]
  %v117 = vld [vmem:[%s1 + $0x2d8] sm:$0xff]
  %v118 = vld [vmem:[%s1 + $0x2e0] sm:$0xff]
  %v119 = vld [vmem:[%s1 + $0x2e8] sm:$0xff]
  %v120 = vld [vmem:[%s1 + $0x2f0] sm:$0xff]
  %v121 = vld [vmem:[%s1 + $0x2f8] sm:$0xff]
  %v122 = vld [vmem:[%s1 + $0x300] sm:$0xff]
  %v123 = vld [vmem:[%s1 + $0x308] sm:$0xff]
  %v124 = vld [vmem:[%s1 + $0x310] sm:$0xff]
  %v125 = vld [vmem:[%s1 + $0x318] sm:$0xff]
  %v126 = vld [vmem:[%s1 + $0x320] sm:$0xff]
  %v127 = vld [vmem:[%s1 + $0x328] sm:$0xff]
  %v128 = vld [vmem:[%s1 + $0x330] sm:$0xff]
  %v129 = vld [vmem:[%s1 + $0x338] sm:$0xff]
  %v130 = vld [vmem:[%s1 + $0x340] sm:$0xff]
  %v131 = vld [vmem:[%s1 + $0x348] sm:$0xff]
  %v132 = vld [vmem:[%s1 + $0x350] sm:$0xff]
  %v133 = vld [vmem:[%s1 + $0x358] sm:$0xff]
  %v134 = vld [vmem:[%s1 + $0x360] sm:$0xff]
  %v135 = vld [vmem:[%s1 + $0x368] sm:$0xff]
  %v136 = vld [vmem:[%s1 + $0x370] sm:$0xff]
  %v137 = vld [vmem:[%s1 + $0x378] sm:$0xff]
  %v138 = vld [vmem:[%s1 + $0x380] sm:$0xff]
  %v139 = vld [vmem:[%s1 + $0x388] sm:$0xff]
  %v140 = vld [vmem:[%s1 + $0x390] sm:$0xff]
  %v141 = vld [vmem:[%s1 + $0x398] sm:$0xff]
  %v142 = vld [vmem:[%s1 + $0x3a0] sm:$0xff]
  %v143 = vld [vmem:[%s1 + $0x3a8] sm:$0xff]
  %v144 = vld [vmem:[%s1 + $0x3b0] sm:$0xff]
  %v145 = vld [vmem:[%s1 + $0x3b8] sm:$0xff]
  %v146 = vld [vmem:[%s1 + $0x3c0] sm:$0xff]
  %v147 = vld [vmem:[%s1 + $0x3c8] sm:$0xff]
  %v148 = vld [vmem:[%s1 + $0x3d0] sm:$0xff]
  %v149 = vld [vmem:[%s1 + $0x3d8] sm:$0xff]
  %v150 = vld [vmem:[%s1 + $0x3e0] sm:$0xff]
  %v151 = vld [vmem:[%s1 + $0x3e8] sm:$0xff]
  %v152 = vld [vmem:[%s1 + $0x3f0] sm:$0xff]
  %v153 = vld [vmem:[%s1 + $0x3f8] sm:$0xff]
  %v154 = vld [vmem:[%s1 + $0x400] sm:$0xff]
  %v155 = vld [vmem:[%s1 + $0x408] sm:$0xff]
  %v156 = vld [vmem:[%s1 + $0x410] sm:$0xff]
  %v157 = vld [vmem:[%s1 + $0x418] sm:$0xff]
  %v158 = vld [vmem:[%s1 + $0x420] sm:$0xff]
  %v159 = vld [vmem:[%s1 + $0x428] sm:$0xff]
  %v160 = vld [vmem:[%s1 + $0x430] sm:$0xff]
  %v161 = vld [vmem:[%s1 + $0x438] sm:$0xff]
  %v162 = vld [vmem:[%s1 + $0x440] sm:$0xff]
  %v163 = vld [vmem:[%s1 + $0x448] sm:$0xff]
  %v164 = vld [vmem:[%s1 + $0x450] sm:$0xff]
  %v165 = vld [vmem:[%s1 + $0x458] sm:$0xff]
  %v166 = vld [vmem:[%s1 + $0x460] sm:$0xff]
  %v167 = vld [vmem:[%s1 + $0x468] sm:$0xff]
  %v168 = vld [vmem:[%s1 + $0x470] sm:$0xff]
  %v169 = vld [vmem:[%s1 + $0x478] sm:$0xff]
  %v170 = vld [vmem:[%s1 + $0x480] sm:$0xff]
  %v171 = vld [vmem:[%s1 + $0x488] sm:$0xff]
  %v172 = vld [vmem:[%s1 + $0x490] sm:$0xff]
  %v173 = vld [vmem:[%s1 + $0x498] sm:$0xff]
  %v174 = vld [vmem:[%s1 + $0x4a0] sm:$0xff]
  %v175 = vld [vmem:[%s1 + $0x4a8] sm:$0xff]
  %v176 = vld [vmem:[%s1 + $0x4b0] sm:$0xff]
  %v177 = vld [vmem:[%s1 + $0x4b8] sm:$0xff]
  %v178 = vld [vmem:[%s1 + $0x4c0] sm:$0xff]
  %v179 = vld [vmem:[%s1 + $0x4c8] sm:$0xff]
  %v180 = vld [vmem:[%s1 + $0x4d0] sm:$0xff]
  %v181 = vld [vmem:[%s1 + $0x4d8] sm:$0xff]
  %v182 = vld [vmem:[%s1 + $0x4e0] sm:$0xff]
  %v183 = vld [vmem:[%s1 + $0x4e8] sm:$0xff]
  %v184 = vld [vmem:[%s1 + $0x4f0] sm:$0xff]
  %v185 = vld [vmem:[%s1 + $0x4f8] sm:$0xff]
  %v186 = vld [vmem:[%s1 + $0x500] sm:$0xff]
  %v187 = vld [vmem:[%s1 + $0x508] sm:$0xff]
  %v188 = vld [vmem:[%s1 + $0x510] sm:$0xff]
  %v189 = vld [vmem:[%s1 + $0x518] sm:$0xff]
  %v190 = vld [vmem:[%s1 + $0x520] sm:$0xff]
  %v191 = vld [vmem:[%s1 + $0x528] sm:$0xff]
  %v192 = vld [vmem:[%s1 + $0x530] sm:$0xff]
  %v193 = vld [vmem:[%s1 + $0x538] sm:$0xff]
  %v194 = vld [vmem:[%s1 + $0x540] sm:$0xff]
  %v195 = vld [vmem:[%s1 + $0x548] sm:$0xff]
  %v196 = vld [vmem:[%s1 + $0x550] sm:$0xff]
  %v197 = vld [vmem:[%s1 + $0x558] sm:$0xff]
  %v198 = vld [vmem:[%s1 + $0x560] sm:$0xff]
  %v199 = vld [vmem:[%s1 + $0x568] sm:$0xff]
  %v200 = vld [vmem:[%s1 + $0x570] sm:$0xff]
  %v201 = vld [vmem:[%s1 + $0x578] sm:$0xff]
  %v202 = vld [vmem:[%s1 + $0x580] sm:$0xff]
  %v203 = vld [vmem:[%s1 + $0x588] sm:$0xff]
  %v204 = vld [vmem:[%s1 + $0x590] sm:$0xff]
  %v205 = vld [vmem:[%s1 + $0x598] sm:$0xff]
  %v206 = vld [vmem:[%s1 + $0x5a0] sm:$0xff]
  %v207 = vld [vmem:[%s1 + $0x5a8] sm:$0xff]
  %v208 = vld [vmem:[%s1 + $0x5b0] sm:$0xff]
  %v209 = vld [vmem:[%s1 + $0x5b8] sm:$0xff]
  %v210 = vld [vmem:[%s1 + $0x5c0] sm:$0xff]
  %v211 = vld [vmem:[%s1 + $0x5c8] sm:$0xff]
  %v212 = vld [vmem:[%s1 + $0x5d0] sm:$0xff]
  %v213 = vld [vmem:[%s1 + $0x5d8] sm:$0xff]
  %v214 = vld [vmem:[%s1 + $0x5e0] sm:$0xff]
  %v215 = vld [vmem:[%s1 + $0x5e8] sm:$0xff]
  %v216 = vld [vmem:[%s1 + $0x5f0] sm:$0xff]
  %v217 = vld [vmem:[%s1 + $0x5f8] sm:$0xff]
  %v218 = vld [vmem:[%s0] sm:$0x1]
  %v220 = vperm.slane %v218, 0
  %v222 = vmul.f32 %v26, %v220
  %v223 = vmul.f32 %v27, %v220
  %v224 = vmul.f32 %v28, %v220
  %v225 = vmul.f32 %v29, %v220
  %v226 = vmul.f32 %v30, %v220
  %v227 = vmul.f32 %v31, %v220
  %v228 = vmul.f32 %v32, %v220
  %v229 = vmul.f32 %v33, %v220
  %v230 = vmul.f32 %v34, %v220
  %v231 = vmul.f32 %v35, %v220
  %v232 = vmul.f32 %v36, %v220
  %v233 = vmul.f32 %v37, %v220
  %v234 = vmul.f32 %v38, %v220
  %v235 = vmul.f32 %v39, %v220
  %v236 = vmul.f32 %v40, %v220
  %v237 = vmul.f32 %v41, %v220
  %v238 = vmul.f32 %v42, %v220
  %v239 = vmul.f32 %v43, %v220
  %v240 = vmul.f32 %v44, %v220
  %v241 = vmul.f32 %v45, %v220
  %v242 = vmul.f32 %v46, %v220
  %v243 = vmul.f32 %v47, %v220
  %v244 = vmul.f32 %v48, %v220
  %v245 = vmul.f32 %v49, %v220
  %v246 = vmul.f32 %v50, %v220
  %v247 = vmul.f32 %v51, %v220
  %v248 = vmul.f32 %v52, %v220
  %v249 = vmul.f32 %v53, %v220
  %v250 = vmul.f32 %v54, %v220
  %v251 = vmul.f32 %v55, %v220
  %v252 = vmul.f32 %v56, %v220
  %v253 = vmul.f32 %v57, %v220
  %v254 = vmul.f32 %v58, %v220
  %v255 = vmul.f32 %v59, %v220
  %v256 = vmul.f32 %v60, %v220
  %v257 = vmul.f32 %v61, %v220
  %v258 = vmul.f32 %v62, %v220
  %v259 = vmul.f32 %v63, %v220
  %v260 = vmul.f32 %v64, %v220
  %v261 = vmul.f32 %v65, %v220
  %v262 = vmul.f32 %v66, %v220
  %v263 = vmul.f32 %v67, %v220
  %v264 = vmul.f32 %v68, %v220
  %v265 = vmul.f32 %v69, %v220
  %v266 = vmul.f32 %v70, %v220
  %v267 = vmul.f32 %v71, %v220
  %v268 = vmul.f32 %v72, %v220
  %v269 = vmul.f32 %v73, %v220
  %v270 = vmul.f32 %v74, %v220
  %v271 = vmul.f32 %v75, %v220
  %v272 = vmul.f32 %v76, %v220
  %v273 = vmul.f32 %v77, %v220
  %v274 = vmul.f32 %v78, %v220
  %v275 = vmul.f32 %v79, %v220
  %v276 = vmul.f32 %v80, %v220
  %v277 = vmul.f32 %v81, %v220
  %v278 = vmul.f32 %v82, %v220
  %v279 = vmul.f32 %v83, %v220
  %v280 = vmul.f32 %v84, %v220
  %v281 = vmul.f32 %v85, %v220
  %v282 = vmul.f32 %v86, %v220
  %v283 = vmul.f32 %v87, %v220
  %v284 = vmul.f32 %v88, %v220
  %v285 = vmul.f32 %v89, %v220
  %v286 = vmul.f32 %v90, %v220
  %v287 = vmul.f32 %v91, %v220
  %v288 = vmul.f32 %v92, %v220
  %v289 = vmul.f32 %v93, %v220
  %v290 = vmul.f32 %v94, %v220
  %v291 = vmul.f32 %v95, %v220
  %v292 = vmul.f32 %v96, %v220
  %v293 = vmul.f32 %v97, %v220
  %v294 = vmul.f32 %v98, %v220
  %v295 = vmul.f32 %v99, %v220
  %v296 = vmul.f32 %v100, %v220
  %v297 = vmul.f32 %v101, %v220
  %v298 = vmul.f32 %v102, %v220
  %v299 = vmul.f32 %v103, %v220
  %v300 = vmul.f32 %v104, %v220
  %v301 = vmul.f32 %v105, %v220
  %v302 = vmul.f32 %v106, %v220
  %v303 = vmul.f32 %v107, %v220
  %v304 = vmul.f32 %v108, %v220
  %v305 = vmul.f32 %v109, %v220
  %v306 = vmul.f32 %v110, %v220
  %v307 = vmul.f32 %v111, %v220
  %v308 = vmul.f32 %v112, %v220
  %v309 = vmul.f32 %v113, %v220
  %v310 = vmul.f32 %v114, %v220
  %v311 = vmul.f32 %v115, %v220
  %v312 = vmul.f32 %v116, %v220
  %v313 = vmul.f32 %v117, %v220
  %v314 = vmul.f32 %v118, %v220
  %v315 = vmul.f32 %v119, %v220
  %v316 = vmul.f32 %v120, %v220
  %v317 = vmul.f32 %v121, %v220
  %v318 = vmul.f32 %v122, %v220
  %v319 = vmul.f32 %v123, %v220
  %v320 = vmul.f32 %v124, %v220
  %v321 = vmul.f32 %v125, %v220
  %v322 = vmul.f32 %v126, %v220
  %v323 = vmul.f32 %v127, %v220
  %v324 = vmul.f32 %v128, %v220
  %v325 = vmul.f32 %v129, %v220
  %v326 = vmul.f32 %v130, %v220
  %v327 = vmul.f32 %v131, %v220
  %v328 = vmul.f32 %v132, %v220
  %v329 = vmul.f32 %v133, %v220
  %v330 = vmul.f32 %v134, %v220
  %v331 = vmul.f32 %v135, %v220
  %v332 = vmul.f32 %v136, %v220
  %v333 = vmul.f32 %v137, %v220
  %v334 = vmul.f32 %v138, %v220
  %v335 = vmul.f32 %v139, %v220
  %v336 = vmul.f32 %v140, %v220
  %v337 = vmul.f32 %v141, %v220
  %v338 = vmul.f32 %v142, %v220
  %v339 = vmul.f32 %v143, %v220
  %v340 = vmul.f32 %v144, %v220
  %v341 = vmul.f32 %v145, %v220
  %v342 = vmul.f32 %v146, %v220
  %v343 = vmul.f32 %v147, %v220
  %v344 = vmul.f32 %v148, %v220
  %v345 = vmul.f32 %v149, %v220
  %v346 = vmul.f32 %v150, %v220
  %v347 = vmul.f32 %v151, %v220
  %v348 = vmul.f32 %v152, %v220
  %v349 = vmul.f32 %v153, %v220
  %v350 = vmul.f32 %v154, %v220
  %v351 = vmul.f32 %v155, %v220
  %v352 = vmul.f32 %v156, %v220
  %v353 = vmul.f32 %v157, %v220
  %v354 = vmul.f32 %v158, %v220
  %v355 = vmul.f32 %v159, %v220
  %v356 = vmul.f32 %v160, %v220
  %v357 = vmul.f32 %v161, %v220
  %v358 = vmul.f32 %v162, %v220
  %v359 = vmul.f32 %v163, %v220
  %v360 = vmul.f32 %v164, %v220
  %v361 = vmul.f32 %v165, %v220
  %v362 = vmul.f32 %v166, %v220
  %v363 = vmul.f32 %v167, %v220
  %v364 = vmul.f32 %v168, %v220
  %v365 = vmul.f32 %v169, %v220
  %v366 = vmul.f32 %v170, %v220
  %v367 = vmul.f32 %v171, %v220
  %v368 = vmul.f32 %v172, %v220
  %v369 = vmul.f32 %v173, %v220
  %v370 = vmul.f32 %v174, %v220
  %v371 = vmul.f32 %v175, %v220
  %v372 = vmul.f32 %v176, %v220
  %v373 = vmul.f32 %v177, %v220
  %v374 = vmul.f32 %v178, %v220
  %v375 = vmul.f32 %v179, %v220
  %v376 = vmul.f32 %v180, %v220
  %v377 = vmul.f32 %v181, %v220
  %v378 = vmul.f32 %v182, %v220
  %v379 = vmul.f32 %v183, %v220
  %v380 = vmul.f32 %v184, %v220
  %v381 = vmul.f32 %v185, %v220
  %v382 = vmul.f32 %v186, %v220
  %v383 = vmul.f32 %v187, %v220
  %v384 = vmul.f32 %v188, %v220
  %v385 = vmul.f32 %v189, %v220
  %v386 = vmul.f32 %v190, %v220
  %v387 = vmul.f32 %v191, %v220
  %v388 = vmul.f32 %v192, %v220
  %v389 = vmul.f32 %v193, %v220
  %v390 = vmul.f32 %v194, %v220
  %v391 = vmul.f32 %v195, %v220
  %v392 = vmul.f32 %v196, %v220
  %v393 = vmul.f32 %v197, %v220
  %v394 = vmul.f32 %v198, %v220
  %v395 = vmul.f32 %v199, %v220
  %v396 = vmul.f32 %v200, %v220
  %v397 = vmul.f32 %v201, %v220
  %v398 = vmul.f32 %v202, %v220
  %v399 = vmul.f32 %v203, %v220
  %v400 = vmul.f32 %v204, %v220
  %v401 = vmul.f32 %v205, %v220
  %v402 = vmul.f32 %v206, %v220
  %v403 = vmul.f32 %v207, %v220
  %v404 = vmul.f32 %v208, %v220
  %v405 = vmul.f32 %v209, %v220
  %v406 = vmul.f32 %v210, %v220
  %v407 = vmul.f32 %v211, %v220
  %v408 = vmul.f32 %v212, %v220
  %v409 = vmul.f32 %v213, %v220
  %v410 = vmul.f32 %v214, %v220
  %v411 = vmul.f32 %v215, %v220
  %v412 = vmul.f32 %v216, %v220
  %v413 = vmul.f32 %v217, %v220
  %vm414 = vcmask 523264
  %v415 = vsel %vm414, %v222, 0.0
  %416 = vadd.xlane.f32.xlu0 %v415
  %v417 = vpop.xlane.xlu0 %416
  %v418 = vsel %vm414, %v223, 0.0
  %419 = vadd.xlane.f32.xlu0 %v418
  %v420 = vpop.xlane.xlu0 %419
  %v421 = vsel %vm414, %v224, 0.0
  %422 = vadd.xlane.f32.xlu0 %v421
  %v423 = vpop.xlane.xlu0 %422
  %v424 = vsel %vm414, %v225, 0.0
  %425 = vadd.xlane.f32.xlu0 %v424
  %v426 = vpop.xlane.xlu0 %425
  %v427 = vsel %vm414, %v226, 0.0
  %428 = vadd.xlane.f32.xlu0 %v427
  %v429 = vpop.xlane.xlu0 %428
  %v430 = vsel %vm414, %v227, 0.0
  %431 = vadd.xlane.f32.xlu0 %v430
  %v432 = vpop.xlane.xlu0 %431
  %v433 = vsel %vm414, %v228, 0.0
  %434 = vadd.xlane.f32.xlu0 %v433
  %v435 = vpop.xlane.xlu0 %434
  %v436 = vsel %vm414, %v229, 0.0
  %437 = vadd.xlane.f32.xlu0 %v436
  %v438 = vpop.xlane.xlu0 %437
  %v439 = vsel %vm414, %v230, 0.0
  %440 = vadd.xlane.f32.xlu0 %v439
  %v441 = vpop.xlane.xlu0 %440
  %v442 = vsel %vm414, %v231, 0.0
  %443 = vadd.xlane.f32.xlu0 %v442
  %v444 = vpop.xlane.xlu0 %443
  %v445 = vsel %vm414, %v232, 0.0
  %446 = vadd.xlane.f32.xlu0 %v445
  %v447 = vpop.xlane.xlu0 %446
  %v448 = vsel %vm414, %v233, 0.0
  %449 = vadd.xlane.f32.xlu0 %v448
  %v450 = vpop.xlane.xlu0 %449
  %v451 = vsel %vm414, %v234, 0.0
  %452 = vadd.xlane.f32.xlu0 %v451
  %v453 = vpop.xlane.xlu0 %452
  %v454 = vsel %vm414, %v235, 0.0
  %455 = vadd.xlane.f32.xlu0 %v454
  %v456 = vpop.xlane.xlu0 %455
  %v457 = vsel %vm414, %v236, 0.0
  %458 = vadd.xlane.f32.xlu0 %v457
  %v459 = vpop.xlane.xlu0 %458
  %v460 = vsel %vm414, %v237, 0.0
  %461 = vadd.xlane.f32.xlu0 %v460
  %v462 = vpop.xlane.xlu0 %461
  %v463 = vsel %vm414, %v238, 0.0
  %464 = vadd.xlane.f32.xlu0 %v463
  %v465 = vpop.xlane.xlu0 %464
  %v466 = vsel %vm414, %v239, 0.0
  %467 = vadd.xlane.f32.xlu0 %v466
  %v468 = vpop.xlane.xlu0 %467
  %v469 = vsel %vm414, %v240, 0.0
  %470 = vadd.xlane.f32.xlu0 %v469
  %v471 = vpop.xlane.xlu0 %470
  %v472 = vsel %vm414, %v241, 0.0
  %473 = vadd.xlane.f32.xlu0 %v472
  %v474 = vpop.xlane.xlu0 %473
  %v475 = vsel %vm414, %v242, 0.0
  %476 = vadd.xlane.f32.xlu0 %v475
  %v477 = vpop.xlane.xlu0 %476
  %v478 = vsel %vm414, %v243, 0.0
  %479 = vadd.xlane.f32.xlu0 %v478
  %v480 = vpop.xlane.xlu0 %479
  %v481 = vsel %vm414, %v244, 0.0
  %482 = vadd.xlane.f32.xlu0 %v481
  %v483 = vpop.xlane.xlu0 %482
  %v484 = vsel %vm414, %v245, 0.0
  %485 = vadd.xlane.f32.xlu0 %v484
  %v486 = vpop.xlane.xlu0 %485
  %v487 = vsel %vm414, %v246, 0.0
  %488 = vadd.xlane.f32.xlu0 %v487
  %v489 = vpop.xlane.xlu0 %488
  %v490 = vsel %vm414, %v247, 0.0
  %491 = vadd.xlane.f32.xlu0 %v490
  %v492 = vpop.xlane.xlu0 %491
  %v493 = vsel %vm414, %v248, 0.0
  %494 = vadd.xlane.f32.xlu0 %v493
  %v495 = vpop.xlane.xlu0 %494
  %v496 = vsel %vm414, %v249, 0.0
  %497 = vadd.xlane.f32.xlu0 %v496
  %v498 = vpop.xlane.xlu0 %497
  %v499 = vsel %vm414, %v250, 0.0
  %500 = vadd.xlane.f32.xlu0 %v499
  %v501 = vpop.xlane.xlu0 %500
  %v502 = vsel %vm414, %v251, 0.0
  %503 = vadd.xlane.f32.xlu0 %v502
  %v504 = vpop.xlane.xlu0 %503
  %v505 = vsel %vm414, %v252, 0.0
  %506 = vadd.xlane.f32.xlu0 %v505
  %v507 = vpop.xlane.xlu0 %506
  %v508 = vsel %vm414, %v253, 0.0
  %509 = vadd.xlane.f32.xlu0 %v508
  %v510 = vpop.xlane.xlu0 %509
  %v511 = vsel %vm414, %v254, 0.0
  %512 = vadd.xlane.f32.xlu0 %v511
  %v513 = vpop.xlane.xlu0 %512
  %v514 = vsel %vm414, %v255, 0.0
  %515 = vadd.xlane.f32.xlu0 %v514
  %v516 = vpop.xlane.xlu0 %515
  %v517 = vsel %vm414, %v256, 0.0
  %518 = vadd.xlane.f32.xlu0 %v517
  %v519 = vpop.xlane.xlu0 %518
  %v520 = vsel %vm414, %v257, 0.0
  %521 = vadd.xlane.f32.xlu0 %v520
  %v522 = vpop.xlane.xlu0 %521
  %v523 = vsel %vm414, %v258, 0.0
  %524 = vadd.xlane.f32.xlu0 %v523
  %v525 = vpop.xlane.xlu0 %524
  %v526 = vsel %vm414, %v259, 0.0
  %527 = vadd.xlane.f32.xlu0 %v526
  %v528 = vpop.xlane.xlu0 %527
  %v529 = vsel %vm414, %v260, 0.0
  %530 = vadd.xlane.f32.xlu0 %v529
  %v531 = vpop.xlane.xlu0 %530
  %v532 = vsel %vm414, %v261, 0.0
  %533 = vadd.xlane.f32.xlu0 %v532
  %v534 = vpop.xlane.xlu0 %533
  %v535 = vsel %vm414, %v262, 0.0
  %536 = vadd.xlane.f32.xlu0 %v535
  %v537 = vpop.xlane.xlu0 %536
  %v538 = vsel %vm414, %v263, 0.0
  %539 = vadd.xlane.f32.xlu0 %v538
  %v540 = vpop.xlane.xlu0 %539
  %v541 = vsel %vm414, %v264, 0.0
  %542 = vadd.xlane.f32.xlu0 %v541
  %v543 = vpop.xlane.xlu0 %542
  %v544 = vsel %vm414, %v265, 0.0
  %545 = vadd.xlane.f32.xlu0 %v544
  %v546 = vpop.xlane.xlu0 %545
  %v547 = vsel %vm414, %v266, 0.0
  %548 = vadd.xlane.f32.xlu0 %v547
  %v549 = vpop.xlane.xlu0 %548
  %v550 = vsel %vm414, %v267, 0.0
  %551 = vadd.xlane.f32.xlu0 %v550
  %v552 = vpop.xlane.xlu0 %551
  %v553 = vsel %vm414, %v268, 0.0
  %554 = vadd.xlane.f32.xlu0 %v553
  %v555 = vpop.xlane.xlu0 %554
  %v556 = vsel %vm414, %v269, 0.0
  %557 = vadd.xlane.f32.xlu0 %v556
  %v558 = vpop.xlane.xlu0 %557
  %v559 = vsel %vm414, %v270, 0.0
  %560 = vadd.xlane.f32.xlu0 %v559
  %v561 = vpop.xlane.xlu0 %560
  %v562 = vsel %vm414, %v271, 0.0
  %563 = vadd.xlane.f32.xlu0 %v562
  %v564 = vpop.xlane.xlu0 %563
  %v565 = vsel %vm414, %v272, 0.0
  %566 = vadd.xlane.f32.xlu0 %v565
  %v567 = vpop.xlane.xlu0 %566
  %v568 = vsel %vm414, %v273, 0.0
  %569 = vadd.xlane.f32.xlu0 %v568
  %v570 = vpop.xlane.xlu0 %569
  %v571 = vsel %vm414, %v274, 0.0
  %572 = vadd.xlane.f32.xlu0 %v571
  %v573 = vpop.xlane.xlu0 %572
  %v574 = vsel %vm414, %v275, 0.0
  %575 = vadd.xlane.f32.xlu0 %v574
  %v576 = vpop.xlane.xlu0 %575
  %v577 = vsel %vm414, %v276, 0.0
  %578 = vadd.xlane.f32.xlu0 %v577
  %v579 = vpop.xlane.xlu0 %578
  %v580 = vsel %vm414, %v277, 0.0
  %581 = vadd.xlane.f32.xlu0 %v580
  %v582 = vpop.xlane.xlu0 %581
  %v583 = vsel %vm414, %v278, 0.0
  %584 = vadd.xlane.f32.xlu0 %v583
  %v585 = vpop.xlane.xlu0 %584
  %v586 = vsel %vm414, %v279, 0.0
  %587 = vadd.xlane.f32.xlu0 %v586
  %v588 = vpop.xlane.xlu0 %587
  %v589 = vsel %vm414, %v280, 0.0
  %590 = vadd.xlane.f32.xlu0 %v589
  %v591 = vpop.xlane.xlu0 %590
  %v592 = vsel %vm414, %v281, 0.0
  %593 = vadd.xlane.f32.xlu0 %v592
  %v594 = vpop.xlane.xlu0 %593
  %v595 = vsel %vm414, %v282, 0.0
  %596 = vadd.xlane.f32.xlu0 %v595
  %v597 = vpop.xlane.xlu0 %596
  %v598 = vsel %vm414, %v283, 0.0
  %599 = vadd.xlane.f32.xlu0 %v598
  %v600 = vpop.xlane.xlu0 %599
  %v601 = vsel %vm414, %v284, 0.0
  %602 = vadd.xlane.f32.xlu0 %v601
  %v603 = vpop.xlane.xlu0 %602
  %v604 = vsel %vm414, %v285, 0.0
  %605 = vadd.xlane.f32.xlu0 %v604
  %v606 = vpop.xlane.xlu0 %605
  %v607 = vsel %vm414, %v286, 0.0
  %608 = vadd.xlane.f32.xlu0 %v607
  %v609 = vpop.xlane.xlu0 %608
  %v610 = vsel %vm414, %v287, 0.0
  %611 = vadd.xlane.f32.xlu0 %v610
  %v612 = vpop.xlane.xlu0 %611
  %v613 = vsel %vm414, %v288, 0.0
  %614 = vadd.xlane.f32.xlu0 %v613
  %v615 = vpop.xlane.xlu0 %614
  %v616 = vsel %vm414, %v289, 0.0
  %617 = vadd.xlane.f32.xlu0 %v616
  %v618 = vpop.xlane.xlu0 %617
  %v619 = vsel %vm414, %v290, 0.0
  %620 = vadd.xlane.f32.xlu0 %v619
  %v621 = vpop.xlane.xlu0 %620
  %v622 = vsel %vm414, %v291, 0.0
  %623 = vadd.xlane.f32.xlu0 %v622
  %v624 = vpop.xlane.xlu0 %623
  %v625 = vsel %vm414, %v292, 0.0
  %626 = vadd.xlane.f32.xlu0 %v625
  %v627 = vpop.xlane.xlu0 %626
  %v628 = vsel %vm414, %v293, 0.0
  %629 = vadd.xlane.f32.xlu0 %v628
  %v630 = vpop.xlane.xlu0 %629
  %v631 = vsel %vm414, %v294, 0.0
  %632 = vadd.xlane.f32.xlu0 %v631
  %v633 = vpop.xlane.xlu0 %632
  %v634 = vsel %vm414, %v295, 0.0
  %635 = vadd.xlane.f32.xlu0 %v634
  %v636 = vpop.xlane.xlu0 %635
  %v637 = vsel %vm414, %v296, 0.0
  %638 = vadd.xlane.f32.xlu0 %v637
  %v639 = vpop.xlane.xlu0 %638
  %v640 = vsel %vm414, %v297, 0.0
  %641 = vadd.xlane.f32.xlu0 %v640
  %v642 = vpop.xlane.xlu0 %641
  %v643 = vsel %vm414, %v298, 0.0
  %644 = vadd.xlane.f32.xlu0 %v643
  %v645 = vpop.xlane.xlu0 %644
  %v646 = vsel %vm414, %v299, 0.0
  %647 = vadd.xlane.f32.xlu0 %v646
  %v648 = vpop.xlane.xlu0 %647
  %v649 = vsel %vm414, %v300, 0.0
  %650 = vadd.xlane.f32.xlu0 %v649
  %v651 = vpop.xlane.xlu0 %650
  %v652 = vsel %vm414, %v301, 0.0
  %653 = vadd.xlane.f32.xlu0 %v652
  %v654 = vpop.xlane.xlu0 %653
  %v655 = vsel %vm414, %v302, 0.0
  %656 = vadd.xlane.f32.xlu0 %v655
  %v657 = vpop.xlane.xlu0 %656
  %v658 = vsel %vm414, %v303, 0.0
  %659 = vadd.xlane.f32.xlu0 %v658
  %v660 = vpop.xlane.xlu0 %659
  %v661 = vsel %vm414, %v304, 0.0
  %662 = vadd.xlane.f32.xlu0 %v661
  %v663 = vpop.xlane.xlu0 %662
  %v664 = vsel %vm414, %v305, 0.0
  %665 = vadd.xlane.f32.xlu0 %v664
  %v666 = vpop.xlane.xlu0 %665
  %v667 = vsel %vm414, %v306, 0.0
  %668 = vadd.xlane.f32.xlu0 %v667
  %v669 = vpop.xlane.xlu0 %668
  %v670 = vsel %vm414, %v307, 0.0
  %671 = vadd.xlane.f32.xlu0 %v670
  %v672 = vpop.xlane.xlu0 %671
  %v673 = vsel %vm414, %v308, 0.0
  %674 = vadd.xlane.f32.xlu0 %v673
  %v675 = vpop.xlane.xlu0 %674
  %v676 = vsel %vm414, %v309, 0.0
  %677 = vadd.xlane.f32.xlu0 %v676
  %v678 = vpop.xlane.xlu0 %677
  %v679 = vsel %vm414, %v310, 0.0
  %680 = vadd.xlane.f32.xlu0 %v679
  %v681 = vpop.xlane.xlu0 %680
  %v682 = vsel %vm414, %v311, 0.0
  %683 = vadd.xlane.f32.xlu0 %v682
  %v684 = vpop.xlane.xlu0 %683
  %v685 = vsel %vm414, %v312, 0.0
  %686 = vadd.xlane.f32.xlu0 %v685
  %v687 = vpop.xlane.xlu0 %686
  %v688 = vsel %vm414, %v313, 0.0
  %689 = vadd.xlane.f32.xlu0 %v688
  %v690 = vpop.xlane.xlu0 %689
  %v691 = vsel %vm414, %v314, 0.0
  %692 = vadd.xlane.f32.xlu0 %v691
  %v693 = vpop.xlane.xlu0 %692
  %v694 = vsel %vm414, %v315, 0.0
  %695 = vadd.xlane.f32.xlu0 %v694
  %v696 = vpop.xlane.xlu0 %695
  %v697 = vsel %vm414, %v316, 0.0
  %698 = vadd.xlane.f32.xlu0 %v697
  %v699 = vpop.xlane.xlu0 %698
  %v700 = vsel %vm414, %v317, 0.0
  %701 = vadd.xlane.f32.xlu0 %v700
  %v702 = vpop.xlane.xlu0 %701
  %v703 = vsel %vm414, %v318, 0.0
  %704 = vadd.xlane.f32.xlu0 %v703
  %v705 = vpop.xlane.xlu0 %704
  %v706 = vsel %vm414, %v319, 0.0
  %707 = vadd.xlane.f32.xlu0 %v706
  %v708 = vpop.xlane.xlu0 %707
  %v709 = vsel %vm414, %v320, 0.0
  %710 = vadd.xlane.f32.xlu0 %v709
  %v711 = vpop.xlane.xlu0 %710
  %v712 = vsel %vm414, %v321, 0.0
  %713 = vadd.xlane.f32.xlu0 %v712
  %v714 = vpop.xlane.xlu0 %713
  %v715 = vsel %vm414, %v322, 0.0
  %716 = vadd.xlane.f32.xlu0 %v715
  %v717 = vpop.xlane.xlu0 %716
  %v718 = vsel %vm414, %v323, 0.0
  %719 = vadd.xlane.f32.xlu0 %v718
  %v720 = vpop.xlane.xlu0 %719
  %v721 = vsel %vm414, %v324, 0.0
  %722 = vadd.xlane.f32.xlu0 %v721
  %v723 = vpop.xlane.xlu0 %722
  %v724 = vsel %vm414, %v325, 0.0
  %725 = vadd.xlane.f32.xlu0 %v724
  %v726 = vpop.xlane.xlu0 %725
  %v727 = vsel %vm414, %v326, 0.0
  %728 = vadd.xlane.f32.xlu0 %v727
  %v729 = vpop.xlane.xlu0 %728
  %v730 = vsel %vm414, %v327, 0.0
  %731 = vadd.xlane.f32.xlu0 %v730
  %v732 = vpop.xlane.xlu0 %731
  %v733 = vsel %vm414, %v328, 0.0
  %734 = vadd.xlane.f32.xlu0 %v733
  %v735 = vpop.xlane.xlu0 %734
  %v736 = vsel %vm414, %v329, 0.0
  %737 = vadd.xlane.f32.xlu0 %v736
  %v738 = vpop.xlane.xlu0 %737
  %v739 = vsel %vm414, %v330, 0.0
  %740 = vadd.xlane.f32.xlu0 %v739
  %v741 = vpop.xlane.xlu0 %740
  %v742 = vsel %vm414, %v331, 0.0
  %743 = vadd.xlane.f32.xlu0 %v742
  %v744 = vpop.xlane.xlu0 %743
  %v745 = vsel %vm414, %v332, 0.0
  %746 = vadd.xlane.f32.xlu0 %v745
  %v747 = vpop.xlane.xlu0 %746
  %v748 = vsel %vm414, %v333, 0.0
  %749 = vadd.xlane.f32.xlu0 %v748
  %v750 = vpop.xlane.xlu0 %749
  %v751 = vsel %vm414, %v334, 0.0
  %752 = vadd.xlane.f32.xlu0 %v751
  %v753 = vpop.xlane.xlu0 %752
  %v754 = vsel %vm414, %v335, 0.0
  %755 = vadd.xlane.f32.xlu0 %v754
  %v756 = vpop.xlane.xlu0 %755
  %v757 = vsel %vm414, %v336, 0.0
  %758 = vadd.xlane.f32.xlu0 %v757
  %v759 = vpop.xlane.xlu0 %758
  %v760 = vsel %vm414, %v337, 0.0
  %761 = vadd.xlane.f32.xlu0 %v760
  %v762 = vpop.xlane.xlu0 %761
  %v763 = vsel %vm414, %v338, 0.0
  %764 = vadd.xlane.f32.xlu0 %v763
  %v765 = vpop.xlane.xlu0 %764
  %v766 = vsel %vm414, %v339, 0.0
  %767 = vadd.xlane.f32.xlu0 %v766
  %v768 = vpop.xlane.xlu0 %767
  %v769 = vsel %vm414, %v340, 0.0
  %770 = vadd.xlane.f32.xlu0 %v769
  %v771 = vpop.xlane.xlu0 %770
  %v772 = vsel %vm414, %v341, 0.0
  %773 = vadd.xlane.f32.xlu0 %v772
  %v774 = vpop.xlane.xlu0 %773
  %v775 = vsel %vm414, %v342, 0.0
  %776 = vadd.xlane.f32.xlu0 %v775
  %v777 = vpop.xlane.xlu0 %776
  %v778 = vsel %vm414, %v343, 0.0
  %779 = vadd.xlane.f32.xlu0 %v778
  %v780 = vpop.xlane.xlu0 %779
  %v781 = vsel %vm414, %v344, 0.0
  %782 = vadd.xlane.f32.xlu0 %v781
  %v783 = vpop.xlane.xlu0 %782
  %v784 = vsel %vm414, %v345, 0.0
  %785 = vadd.xlane.f32.xlu0 %v784
  %v786 = vpop.xlane.xlu0 %785
  %v787 = vsel %vm414, %v346, 0.0
  %788 = vadd.xlane.f32.xlu0 %v787
  %v789 = vpop.xlane.xlu0 %788
  %v790 = vsel %vm414, %v347, 0.0
  %791 = vadd.xlane.f32.xlu0 %v790
  %v792 = vpop.xlane.xlu0 %791
  %v793 = vsel %vm414, %v348, 0.0
  %794 = vadd.xlane.f32.xlu0 %v793
  %v795 = vpop.xlane.xlu0 %794
  %v796 = vsel %vm414, %v349, 0.0
  %797 = vadd.xlane.f32.xlu0 %v796
  %v798 = vpop.xlane.xlu0 %797
  %v799 = vsel %vm414, %v350, 0.0
  %800 = vadd.xlane.f32.xlu0 %v799
  %v801 = vpop.xlane.xlu0 %800
  %v802 = vsel %vm414, %v351, 0.0
  %803 = vadd.xlane.f32.xlu0 %v802
  %v804 = vpop.xlane.xlu0 %803
  %v805 = vsel %vm414, %v352, 0.0
  %806 = vadd.xlane.f32.xlu0 %v805
  %v807 = vpop.xlane.xlu0 %806
  %v808 = vsel %vm414, %v353, 0.0
  %809 = vadd.xlane.f32.xlu0 %v808
  %v810 = vpop.xlane.xlu0 %809
  %v811 = vsel %vm414, %v354, 0.0
  %812 = vadd.xlane.f32.xlu0 %v811
  %v813 = vpop.xlane.xlu0 %812
  %v814 = vsel %vm414, %v355, 0.0
  %815 = vadd.xlane.f32.xlu0 %v814
  %v816 = vpop.xlane.xlu0 %815
  %v817 = vsel %vm414, %v356, 0.0
  %818 = vadd.xlane.f32.xlu0 %v817
  %v819 = vpop.xlane.xlu0 %818
  %v820 = vsel %vm414, %v357, 0.0
  %821 = vadd.xlane.f32.xlu0 %v820
  %v822 = vpop.xlane.xlu0 %821
  %v823 = vsel %vm414, %v358, 0.0
  %824 = vadd.xlane.f32.xlu0 %v823
  %v825 = vpop.xlane.xlu0 %824
  %v826 = vsel %vm414, %v359, 0.0
  %827 = vadd.xlane.f32.xlu0 %v826
  %v828 = vpop.xlane.xlu0 %827
  %v829 = vsel %vm414, %v360, 0.0
  %830 = vadd.xlane.f32.xlu0 %v829
  %v831 = vpop.xlane.xlu0 %830
  %v832 = vsel %vm414, %v361, 0.0
  %833 = vadd.xlane.f32.xlu0 %v832
  %v834 = vpop.xlane.xlu0 %833
  %v835 = vsel %vm414, %v362, 0.0
  %836 = vadd.xlane.f32.xlu0 %v835
  %v837 = vpop.xlane.xlu0 %836
  %v838 = vsel %vm414, %v363, 0.0
  %839 = vadd.xlane.f32.xlu0 %v838
  %v840 = vpop.xlane.xlu0 %839
  %v841 = vsel %vm414, %v364, 0.0
  %842 = vadd.xlane.f32.xlu0 %v841
  %v843 = vpop.xlane.xlu0 %842
  %v844 = vsel %vm414, %v365, 0.0
  %845 = vadd.xlane.f32.xlu0 %v844
  %v846 = vpop.xlane.xlu0 %845
  %v847 = vsel %vm414, %v366, 0.0
  %848 = vadd.xlane.f32.xlu0 %v847
  %v849 = vpop.xlane.xlu0 %848
  %v850 = vsel %vm414, %v367, 0.0
  %851 = vadd.xlane.f32.xlu0 %v850
  %v852 = vpop.xlane.xlu0 %851
  %v853 = vsel %vm414, %v368, 0.0
  %854 = vadd.xlane.f32.xlu0 %v853
  %v855 = vpop.xlane.xlu0 %854
  %v856 = vsel %vm414, %v369, 0.0
  %857 = vadd.xlane.f32.xlu0 %v856
  %v858 = vpop.xlane.xlu0 %857
  %v859 = vsel %vm414, %v370, 0.0
  %860 = vadd.xlane.f32.xlu0 %v859
  %v861 = vpop.xlane.xlu0 %860
  %v862 = vsel %vm414, %v371, 0.0
  %863 = vadd.xlane.f32.xlu0 %v862
  %v864 = vpop.xlane.xlu0 %863
  %v865 = vsel %vm414, %v372, 0.0
  %866 = vadd.xlane.f32.xlu0 %v865
  %v867 = vpop.xlane.xlu0 %866
  %v868 = vsel %vm414, %v373, 0.0
  %869 = vadd.xlane.f32.xlu0 %v868
  %v870 = vpop.xlane.xlu0 %869
  %v871 = vsel %vm414, %v374, 0.0
  %872 = vadd.xlane.f32.xlu0 %v871
  %v873 = vpop.xlane.xlu0 %872
  %v874 = vsel %vm414, %v375, 0.0
  %875 = vadd.xlane.f32.xlu0 %v874
  %v876 = vpop.xlane.xlu0 %875
  %v877 = vsel %vm414, %v376, 0.0
  %878 = vadd.xlane.f32.xlu0 %v877
  %v879 = vpop.xlane.xlu0 %878
  %v880 = vsel %vm414, %v377, 0.0
  %881 = vadd.xlane.f32.xlu0 %v880
  %v882 = vpop.xlane.xlu0 %881
  %v883 = vsel %vm414, %v378, 0.0
  %884 = vadd.xlane.f32.xlu0 %v883
  %v885 = vpop.xlane.xlu0 %884
  %v886 = vsel %vm414, %v379, 0.0
  %887 = vadd.xlane.f32.xlu0 %v886
  %v888 = vpop.xlane.xlu0 %887
  %v889 = vsel %vm414, %v380, 0.0
  %890 = vadd.xlane.f32.xlu0 %v889
  %v891 = vpop.xlane.xlu0 %890
  %v892 = vsel %vm414, %v381, 0.0
  %893 = vadd.xlane.f32.xlu0 %v892
  %v894 = vpop.xlane.xlu0 %893
  %v895 = vsel %vm414, %v382, 0.0
  %896 = vadd.xlane.f32.xlu0 %v895
  %v897 = vpop.xlane.xlu0 %896
  %v898 = vsel %vm414, %v383, 0.0
  %899 = vadd.xlane.f32.xlu0 %v898
  %v900 = vpop.xlane.xlu0 %899
  %v901 = vsel %vm414, %v384, 0.0
  %902 = vadd.xlane.f32.xlu0 %v901
  %v903 = vpop.xlane.xlu0 %902
  %v904 = vsel %vm414, %v385, 0.0
  %905 = vadd.xlane.f32.xlu0 %v904
  %v906 = vpop.xlane.xlu0 %905
  %v907 = vsel %vm414, %v386, 0.0
  %908 = vadd.xlane.f32.xlu0 %v907
  %v909 = vpop.xlane.xlu0 %908
  %v910 = vsel %vm414, %v387, 0.0
  %911 = vadd.xlane.f32.xlu0 %v910
  %v912 = vpop.xlane.xlu0 %911
  %v913 = vsel %vm414, %v388, 0.0
  %914 = vadd.xlane.f32.xlu0 %v913
  %v915 = vpop.xlane.xlu0 %914
  %v916 = vsel %vm414, %v389, 0.0
  %917 = vadd.xlane.f32.xlu0 %v916
  %v918 = vpop.xlane.xlu0 %917
  %v919 = vsel %vm414, %v390, 0.0
  %920 = vadd.xlane.f32.xlu0 %v919
  %v921 = vpop.xlane.xlu0 %920
  %v922 = vsel %vm414, %v391, 0.0
  %923 = vadd.xlane.f32.xlu0 %v922
  %v924 = vpop.xlane.xlu0 %923
  %v925 = vsel %vm414, %v392, 0.0
  %926 = vadd.xlane.f32.xlu0 %v925
  %v927 = vpop.xlane.xlu0 %926
  %v928 = vsel %vm414, %v393, 0.0
  %929 = vadd.xlane.f32.xlu0 %v928
  %v930 = vpop.xlane.xlu0 %929
  %v931 = vsel %vm414, %v394, 0.0
  %932 = vadd.xlane.f32.xlu0 %v931
  %v933 = vpop.xlane.xlu0 %932
  %v934 = vsel %vm414, %v395, 0.0
  %935 = vadd.xlane.f32.xlu0 %v934
  %v936 = vpop.xlane.xlu0 %935
  %v937 = vsel %vm414, %v396, 0.0
  %938 = vadd.xlane.f32.xlu0 %v937
  %v939 = vpop.xlane.xlu0 %938
  %v940 = vsel %vm414, %v397, 0.0
  %941 = vadd.xlane.f32.xlu0 %v940
  %v942 = vpop.xlane.xlu0 %941
  %v943 = vsel %vm414, %v398, 0.0
  %944 = vadd.xlane.f32.xlu0 %v943
  %v945 = vpop.xlane.xlu0 %944
  %v946 = vsel %vm414, %v399, 0.0
  %947 = vadd.xlane.f32.xlu0 %v946
  %v948 = vpop.xlane.xlu0 %947
  %v949 = vsel %vm414, %v400, 0.0
  %950 = vadd.xlane.f32.xlu0 %v949
  %v951 = vpop.xlane.xlu0 %950
  %v952 = vsel %vm414, %v401, 0.0
  %953 = vadd.xlane.f32.xlu0 %v952
  %v954 = vpop.xlane.xlu0 %953
  %v955 = vsel %vm414, %v402, 0.0
  %956 = vadd.xlane.f32.xlu0 %v955
  %v957 = vpop.xlane.xlu0 %956
  %v958 = vsel %vm414, %v403, 0.0
  %959 = vadd.xlane.f32.xlu0 %v958
  %v960 = vpop.xlane.xlu0 %959
  %v961 = vsel %vm414, %v404, 0.0
  %962 = vadd.xlane.f32.xlu0 %v961
  %v963 = vpop.xlane.xlu0 %962
  %v964 = vsel %vm414, %v405, 0.0
  %965 = vadd.xlane.f32.xlu0 %v964
  %v966 = vpop.xlane.xlu0 %965
  %v967 = vsel %vm414, %v406, 0.0
  %968 = vadd.xlane.f32.xlu0 %v967
  %v969 = vpop.xlane.xlu0 %968
  %v970 = vsel %vm414, %v407, 0.0
  %971 = vadd.xlane.f32.xlu0 %v970
  %v972 = vpop.xlane.xlu0 %971
  %v973 = vsel %vm414, %v408, 0.0
  %974 = vadd.xlane.f32.xlu0 %v973
  %v975 = vpop.xlane.xlu0 %974
  %v976 = vsel %vm414, %v409, 0.0
  %977 = vadd.xlane.f32.xlu0 %v976
  %v978 = vpop.xlane.xlu0 %977
  %v979 = vsel %vm414, %v410, 0.0
  %980 = vadd.xlane.f32.xlu0 %v979
  %v981 = vpop.xlane.xlu0 %980
  %v982 = vsel %vm414, %v411, 0.0
  %983 = vadd.xlane.f32.xlu0 %v982
  %v984 = vpop.xlane.xlu0 %983
  %v985 = vsel %vm414, %v412, 0.0
  %986 = vadd.xlane.f32.xlu0 %v985
  %v987 = vpop.xlane.xlu0 %986
  %v988 = vsel %vm414, %v413, 0.0
  %989 = vadd.xlane.f32.xlu0 %v988
  %v990 = vpop.xlane.xlu0 %989
  %v991 = vld [vmem:[%s2] sm:$0xff]
  %v992 = vld [vmem:[%s2 + $0x8] sm:$0xff]
  %v993 = vld [vmem:[%s2 + $0x10] sm:$0xff]
  %v994 = vld [vmem:[%s2 + $0x18] sm:$0xff]
  %v995 = vld [vmem:[%s2 + $0x20] sm:$0xff]
  %v996 = vld [vmem:[%s2 + $0x28] sm:$0xff]
  %v997 = vld [vmem:[%s2 + $0x30] sm:$0xff]
  %v998 = vld [vmem:[%s2 + $0x38] sm:$0xff]
  %v999 = vld [vmem:[%s2 + $0x40] sm:$0xff]
  %v1000 = vld [vmem:[%s2 + $0x48] sm:$0xff]
  %v1001 = vld [vmem:[%s2 + $0x50] sm:$0xff]
  %v1002 = vld [vmem:[%s2 + $0x58] sm:$0xff]
  %v1003 = vld [vmem:[%s2 + $0x60] sm:$0xff]
  %v1004 = vld [vmem:[%s2 + $0x68] sm:$0xff]
  %v1005 = vld [vmem:[%s2 + $0x70] sm:$0xff]
  %v1006 = vld [vmem:[%s2 + $0x78] sm:$0xff]
  %v1007 = vld [vmem:[%s2 + $0x80] sm:$0xff]
  %v1008 = vld [vmem:[%s2 + $0x88] sm:$0xff]
  %v1009 = vld [vmem:[%s2 + $0x90] sm:$0xff]
  %v1010 = vld [vmem:[%s2 + $0x98] sm:$0xff]
  %v1011 = vld [vmem:[%s2 + $0xa0] sm:$0xff]
  %v1012 = vld [vmem:[%s2 + $0xa8] sm:$0xff]
  %v1013 = vld [vmem:[%s2 + $0xb0] sm:$0xff]
  %v1014 = vld [vmem:[%s2 + $0xb8] sm:$0xff]
  %v1015 = vld [vmem:[%s2 + $0xc0] sm:$0xff]
  %v1016 = vld [vmem:[%s2 + $0xc8] sm:$0xff]
  %v1017 = vld [vmem:[%s2 + $0xd0] sm:$0xff]
  %v1018 = vld [vmem:[%s2 + $0xd8] sm:$0xff]
  %v1019 = vld [vmem:[%s2 + $0xe0] sm:$0xff]
  %v1020 = vld [vmem:[%s2 + $0xe8] sm:$0xff]
  %v1021 = vld [vmem:[%s2 + $0xf0] sm:$0xff]
  %v1022 = vld [vmem:[%s2 + $0xf8] sm:$0xff]
  %v1023 = vld [vmem:[%s2 + $0x100] sm:$0xff]
  %v1024 = vld [vmem:[%s2 + $0x108] sm:$0xff]
  %v1025 = vld [vmem:[%s2 + $0x110] sm:$0xff]
  %v1026 = vld [vmem:[%s2 + $0x118] sm:$0xff]
  %v1027 = vld [vmem:[%s2 + $0x120] sm:$0xff]
  %v1028 = vld [vmem:[%s2 + $0x128] sm:$0xff]
  %v1029 = vld [vmem:[%s2 + $0x130] sm:$0xff]
  %v1030 = vld [vmem:[%s2 + $0x138] sm:$0xff]
  %v1031 = vld [vmem:[%s2 + $0x140] sm:$0xff]
  %v1032 = vld [vmem:[%s2 + $0x148] sm:$0xff]
  %v1033 = vld [vmem:[%s2 + $0x150] sm:$0xff]
  %v1034 = vld [vmem:[%s2 + $0x158] sm:$0xff]
  %v1035 = vld [vmem:[%s2 + $0x160] sm:$0xff]
  %v1036 = vld [vmem:[%s2 + $0x168] sm:$0xff]
  %v1037 = vld [vmem:[%s2 + $0x170] sm:$0xff]
  %v1038 = vld [vmem:[%s2 + $0x178] sm:$0xff]
  %v1039 = vld [vmem:[%s2 + $0x180] sm:$0xff]
  %v1040 = vld [vmem:[%s2 + $0x188] sm:$0xff]
  %v1041 = vld [vmem:[%s2 + $0x190] sm:$0xff]
  %v1042 = vld [vmem:[%s2 + $0x198] sm:$0xff]
  %v1043 = vld [vmem:[%s2 + $0x1a0] sm:$0xff]
  %v1044 = vld [vmem:[%s2 + $0x1a8] sm:$0xff]
  %v1045 = vld [vmem:[%s2 + $0x1b0] sm:$0xff]
  %v1046 = vld [vmem:[%s2 + $0x1b8] sm:$0xff]
  %v1047 = vld [vmem:[%s2 + $0x1c0] sm:$0xff]
  %v1048 = vld [vmem:[%s2 + $0x1c8] sm:$0xff]
  %v1049 = vld [vmem:[%s2 + $0x1d0] sm:$0xff]
  %v1050 = vld [vmem:[%s2 + $0x1d8] sm:$0xff]
  %v1051 = vld [vmem:[%s2 + $0x1e0] sm:$0xff]
  %v1052 = vld [vmem:[%s2 + $0x1e8] sm:$0xff]
  %v1053 = vld [vmem:[%s2 + $0x1f0] sm:$0xff]
  %v1054 = vld [vmem:[%s2 + $0x1f8] sm:$0xff]
  %v1055 = vld [vmem:[%s2 + $0x200] sm:$0xff]
  %v1056 = vld [vmem:[%s2 + $0x208] sm:$0xff]
  %v1057 = vld [vmem:[%s2 + $0x210] sm:$0xff]
  %v1058 = vld [vmem:[%s2 + $0x218] sm:$0xff]
  %v1059 = vld [vmem:[%s2 + $0x220] sm:$0xff]
  %v1060 = vld [vmem:[%s2 + $0x228] sm:$0xff]
  %v1061 = vld [vmem:[%s2 + $0x230] sm:$0xff]
  %v1062 = vld [vmem:[%s2 + $0x238] sm:$0xff]
  %v1063 = vld [vmem:[%s2 + $0x240] sm:$0xff]
  %v1064 = vld [vmem:[%s2 + $0x248] sm:$0xff]
  %v1065 = vld [vmem:[%s2 + $0x250] sm:$0xff]
  %v1066 = vld [vmem:[%s2 + $0x258] sm:$0xff]
  %v1067 = vld [vmem:[%s2 + $0x260] sm:$0xff]
  %v1068 = vld [vmem:[%s2 + $0x268] sm:$0xff]
  %v1069 = vld [vmem:[%s2 + $0x270] sm:$0xff]
  %v1070 = vld [vmem:[%s2 + $0x278] sm:$0xff]
  %v1071 = vld [vmem:[%s2 + $0x280] sm:$0xff]
  %v1072 = vld [vmem:[%s2 + $0x288] sm:$0xff]
  %v1073 = vld [vmem:[%s2 + $0x290] sm:$0xff]
  %v1074 = vld [vmem:[%s2 + $0x298] sm:$0xff]
  %v1075 = vld [vmem:[%s2 + $0x2a0] sm:$0xff]
  %v1076 = vld [vmem:[%s2 + $0x2a8] sm:$0xff]
  %v1077 = vld [vmem:[%s2 + $0x2b0] sm:$0xff]
  %v1078 = vld [vmem:[%s2 + $0x2b8] sm:$0xff]
  %v1079 = vld [vmem:[%s2 + $0x2c0] sm:$0xff]
  %v1080 = vld [vmem:[%s2 + $0x2c8] sm:$0xff]
  %v1081 = vld [vmem:[%s2 + $0x2d0] sm:$0xff]
  %v1082 = vld [vmem:[%s2 + $0x2d8] sm:$0xff]
  %v1083 = vld [vmem:[%s2 + $0x2e0] sm:$0xff]
  %v1084 = vld [vmem:[%s2 + $0x2e8] sm:$0xff]
  %v1085 = vld [vmem:[%s2 + $0x2f0] sm:$0xff]
  %v1086 = vld [vmem:[%s2 + $0x2f8] sm:$0xff]
  %v1087 = vld [vmem:[%s2 + $0x300] sm:$0xff]
  %v1088 = vld [vmem:[%s2 + $0x308] sm:$0xff]
  %v1089 = vld [vmem:[%s2 + $0x310] sm:$0xff]
  %v1090 = vld [vmem:[%s2 + $0x318] sm:$0xff]
  %v1091 = vld [vmem:[%s2 + $0x320] sm:$0xff]
  %v1092 = vld [vmem:[%s2 + $0x328] sm:$0xff]
  %v1093 = vld [vmem:[%s2 + $0x330] sm:$0xff]
  %v1094 = vld [vmem:[%s2 + $0x338] sm:$0xff]
  %v1095 = vld [vmem:[%s2 + $0x340] sm:$0xff]
  %v1096 = vld [vmem:[%s2 + $0x348] sm:$0xff]
  %v1097 = vld [vmem:[%s2 + $0x350] sm:$0xff]
  %v1098 = vld [vmem:[%s2 + $0x358] sm:$0xff]
  %v1099 = vld [vmem:[%s2 + $0x360] sm:$0xff]
  %v1100 = vld [vmem:[%s2 + $0x368] sm:$0xff]
  %v1101 = vld [vmem:[%s2 + $0x370] sm:$0xff]
  %v1102 = vld [vmem:[%s2 + $0x378] sm:$0xff]
  %v1103 = vld [vmem:[%s2 + $0x380] sm:$0xff]
  %v1104 = vld [vmem:[%s2 + $0x388] sm:$0xff]
  %v1105 = vld [vmem:[%s2 + $0x390] sm:$0xff]
  %v1106 = vld [vmem:[%s2 + $0x398] sm:$0xff]
  %v1107 = vld [vmem:[%s2 + $0x3a0] sm:$0xff]
  %v1108 = vld [vmem:[%s2 + $0x3a8] sm:$0xff]
  %v1109 = vld [vmem:[%s2 + $0x3b0] sm:$0xff]
  %v1110 = vld [vmem:[%s2 + $0x3b8] sm:$0xff]
  %v1111 = vld [vmem:[%s2 + $0x3c0] sm:$0xff]
  %v1112 = vld [vmem:[%s2 + $0x3c8] sm:$0xff]
  %v1113 = vld [vmem:[%s2 + $0x3d0] sm:$0xff]
  %v1114 = vld [vmem:[%s2 + $0x3d8] sm:$0xff]
  %v1115 = vld [vmem:[%s2 + $0x3e0] sm:$0xff]
  %v1116 = vld [vmem:[%s2 + $0x3e8] sm:$0xff]
  %v1117 = vld [vmem:[%s2 + $0x3f0] sm:$0xff]
  %v1118 = vld [vmem:[%s2 + $0x3f8] sm:$0xff]
  %v1119 = vld [vmem:[%s2 + $0x400] sm:$0xff]
  %v1120 = vld [vmem:[%s2 + $0x408] sm:$0xff]
  %v1121 = vld [vmem:[%s2 + $0x410] sm:$0xff]
  %v1122 = vld [vmem:[%s2 + $0x418] sm:$0xff]
  %v1123 = vld [vmem:[%s2 + $0x420] sm:$0xff]
  %v1124 = vld [vmem:[%s2 + $0x428] sm:$0xff]
  %v1125 = vld [vmem:[%s2 + $0x430] sm:$0xff]
  %v1126 = vld [vmem:[%s2 + $0x438] sm:$0xff]
  %v1127 = vld [vmem:[%s2 + $0x440] sm:$0xff]
  %v1128 = vld [vmem:[%s2 + $0x448] sm:$0xff]
  %v1129 = vld [vmem:[%s2 + $0x450] sm:$0xff]
  %v1130 = vld [vmem:[%s2 + $0x458] sm:$0xff]
  %v1131 = vld [vmem:[%s2 + $0x460] sm:$0xff]
  %v1132 = vld [vmem:[%s2 + $0x468] sm:$0xff]
  %v1133 = vld [vmem:[%s2 + $0x470] sm:$0xff]
  %v1134 = vld [vmem:[%s2 + $0x478] sm:$0xff]
  %v1135 = vld [vmem:[%s2 + $0x480] sm:$0xff]
  %v1136 = vld [vmem:[%s2 + $0x488] sm:$0xff]
  %v1137 = vld [vmem:[%s2 + $0x490] sm:$0xff]
  %v1138 = vld [vmem:[%s2 + $0x498] sm:$0xff]
  %v1139 = vld [vmem:[%s2 + $0x4a0] sm:$0xff]
  %v1140 = vld [vmem:[%s2 + $0x4a8] sm:$0xff]
  %v1141 = vld [vmem:[%s2 + $0x4b0] sm:$0xff]
  %v1142 = vld [vmem:[%s2 + $0x4b8] sm:$0xff]
  %v1143 = vld [vmem:[%s2 + $0x4c0] sm:$0xff]
  %v1144 = vld [vmem:[%s2 + $0x4c8] sm:$0xff]
  %v1145 = vld [vmem:[%s2 + $0x4d0] sm:$0xff]
  %v1146 = vld [vmem:[%s2 + $0x4d8] sm:$0xff]
  %v1147 = vld [vmem:[%s2 + $0x4e0] sm:$0xff]
  %v1148 = vld [vmem:[%s2 + $0x4e8] sm:$0xff]
  %v1149 = vld [vmem:[%s2 + $0x4f0] sm:$0xff]
  %v1150 = vld [vmem:[%s2 + $0x4f8] sm:$0xff]
  %v1151 = vld [vmem:[%s2 + $0x500] sm:$0xff]
  %v1152 = vld [vmem:[%s2 + $0x508] sm:$0xff]
  %v1153 = vld [vmem:[%s2 + $0x510] sm:$0xff]
  %v1154 = vld [vmem:[%s2 + $0x518] sm:$0xff]
  %v1155 = vld [vmem:[%s2 + $0x520] sm:$0xff]
  %v1156 = vld [vmem:[%s2 + $0x528] sm:$0xff]
  %v1157 = vld [vmem:[%s2 + $0x530] sm:$0xff]
  %v1158 = vld [vmem:[%s2 + $0x538] sm:$0xff]
  %v1159 = vld [vmem:[%s2 + $0x540] sm:$0xff]
  %v1160 = vld [vmem:[%s2 + $0x548] sm:$0xff]
  %v1161 = vld [vmem:[%s2 + $0x550] sm:$0xff]
  %v1162 = vld [vmem:[%s2 + $0x558] sm:$0xff]
  %v1163 = vld [vmem:[%s2 + $0x560] sm:$0xff]
  %v1164 = vld [vmem:[%s2 + $0x568] sm:$0xff]
  %v1165 = vld [vmem:[%s2 + $0x570] sm:$0xff]
  %v1166 = vld [vmem:[%s2 + $0x578] sm:$0xff]
  %v1167 = vld [vmem:[%s2 + $0x580] sm:$0xff]
  %v1168 = vld [vmem:[%s2 + $0x588] sm:$0xff]
  %v1169 = vld [vmem:[%s2 + $0x590] sm:$0xff]
  %v1170 = vld [vmem:[%s2 + $0x598] sm:$0xff]
  %v1171 = vld [vmem:[%s2 + $0x5a0] sm:$0xff]
  %v1172 = vld [vmem:[%s2 + $0x5a8] sm:$0xff]
  %v1173 = vld [vmem:[%s2 + $0x5b0] sm:$0xff]
  %v1174 = vld [vmem:[%s2 + $0x5b8] sm:$0xff]
  %v1175 = vld [vmem:[%s2 + $0x5c0] sm:$0xff]
  %v1176 = vld [vmem:[%s2 + $0x5c8] sm:$0xff]
  %v1177 = vld [vmem:[%s2 + $0x5d0] sm:$0xff]
  %v1178 = vld [vmem:[%s2 + $0x5d8] sm:$0xff]
  %v1179 = vld [vmem:[%s2 + $0x5e0] sm:$0xff]
  %v1180 = vld [vmem:[%s2 + $0x5e8] sm:$0xff]
  %v1181 = vld [vmem:[%s2 + $0x5f0] sm:$0xff]
  %v1182 = vld [vmem:[%s2 + $0x5f8] sm:$0xff]
  %v1183 = vadd.f32 %v417, %v991
  %v1184 = vadd.f32 %v420, %v992
  %v1185 = vadd.f32 %v423, %v993
  %v1186 = vadd.f32 %v426, %v994
  %v1187 = vadd.f32 %v429, %v995
  %v1188 = vadd.f32 %v432, %v996
  %v1189 = vadd.f32 %v435, %v997
  %v1190 = vadd.f32 %v438, %v998
  %v1191 = vadd.f32 %v441, %v999
  %v1192 = vadd.f32 %v444, %v1000
  %v1193 = vadd.f32 %v447, %v1001
  %v1194 = vadd.f32 %v450, %v1002
  %v1195 = vadd.f32 %v453, %v1003
  %v1196 = vadd.f32 %v456, %v1004
  %v1197 = vadd.f32 %v459, %v1005
  %v1198 = vadd.f32 %v462, %v1006
  %v1199 = vadd.f32 %v465, %v1007
  %v1200 = vadd.f32 %v468, %v1008
  %v1201 = vadd.f32 %v471, %v1009
  %v1202 = vadd.f32 %v474, %v1010
  %v1203 = vadd.f32 %v477, %v1011
  %v1204 = vadd.f32 %v480, %v1012
  %v1205 = vadd.f32 %v483, %v1013
  %v1206 = vadd.f32 %v486, %v1014
  %v1207 = vadd.f32 %v489, %v1015
  %v1208 = vadd.f32 %v492, %v1016
  %v1209 = vadd.f32 %v495, %v1017
  %v1210 = vadd.f32 %v498, %v1018
  %v1211 = vadd.f32 %v501, %v1019
  %v1212 = vadd.f32 %v504, %v1020
  %v1213 = vadd.f32 %v507, %v1021
  %v1214 = vadd.f32 %v510, %v1022
  %v1215 = vadd.f32 %v513, %v1023
  %v1216 = vadd.f32 %v516, %v1024
  %v1217 = vadd.f32 %v519, %v1025
  %v1218 = vadd.f32 %v522, %v1026
  %v1219 = vadd.f32 %v525, %v1027
  %v1220 = vadd.f32 %v528, %v1028
  %v1221 = vadd.f32 %v531, %v1029
  %v1222 = vadd.f32 %v534, %v1030
  %v1223 = vadd.f32 %v537, %v1031
  %v1224 = vadd.f32 %v540, %v1032
  %v1225 = vadd.f32 %v543, %v1033
  %v1226 = vadd.f32 %v546, %v1034
  %v1227 = vadd.f32 %v549, %v1035
  %v1228 = vadd.f32 %v552, %v1036
  %v1229 = vadd.f32 %v555, %v1037
  %v1230 = vadd.f32 %v558, %v1038
  %v1231 = vadd.f32 %v561, %v1039
  %v1232 = vadd.f32 %v564, %v1040
  %v1233 = vadd.f32 %v567, %v1041
  %v1234 = vadd.f32 %v570, %v1042
  %v1235 = vadd.f32 %v573, %v1043
  %v1236 = vadd.f32 %v576, %v1044
  %v1237 = vadd.f32 %v579, %v1045
  %v1238 = vadd.f32 %v582, %v1046
  %v1239 = vadd.f32 %v585, %v1047
  %v1240 = vadd.f32 %v588, %v1048
  %v1241 = vadd.f32 %v591, %v1049
  %v1242 = vadd.f32 %v594, %v1050
  %v1243 = vadd.f32 %v597, %v1051
  %v1244 = vadd.f32 %v600, %v1052
  %v1245 = vadd.f32 %v603, %v1053
  %v1246 = vadd.f32 %v606, %v1054
  %v1247 = vadd.f32 %v609, %v1055
  %v1248 = vadd.f32 %v612, %v1056
  %v1249 = vadd.f32 %v615, %v1057
  %v1250 = vadd.f32 %v618, %v1058
  %v1251 = vadd.f32 %v621, %v1059
  %v1252 = vadd.f32 %v624, %v1060
  %v1253 = vadd.f32 %v627, %v1061
  %v1254 = vadd.f32 %v630, %v1062
  %v1255 = vadd.f32 %v633, %v1063
  %v1256 = vadd.f32 %v636, %v1064
  %v1257 = vadd.f32 %v639, %v1065
  %v1258 = vadd.f32 %v642, %v1066
  %v1259 = vadd.f32 %v645, %v1067
  %v1260 = vadd.f32 %v648, %v1068
  %v1261 = vadd.f32 %v651, %v1069
  %v1262 = vadd.f32 %v654, %v1070
  %v1263 = vadd.f32 %v657, %v1071
  %v1264 = vadd.f32 %v660, %v1072
  %v1265 = vadd.f32 %v663, %v1073
  %v1266 = vadd.f32 %v666, %v1074
  %v1267 = vadd.f32 %v669, %v1075
  %v1268 = vadd.f32 %v672, %v1076
  %v1269 = vadd.f32 %v675, %v1077
  %v1270 = vadd.f32 %v678, %v1078
  %v1271 = vadd.f32 %v681, %v1079
  %v1272 = vadd.f32 %v684, %v1080
  %v1273 = vadd.f32 %v687, %v1081
  %v1274 = vadd.f32 %v690, %v1082
  %v1275 = vadd.f32 %v693, %v1083
  %v1276 = vadd.f32 %v696, %v1084
  %v1277 = vadd.f32 %v699, %v1085
  %v1278 = vadd.f32 %v702, %v1086
  %v1279 = vadd.f32 %v705, %v1087
  %v1280 = vadd.f32 %v708, %v1088
  %v1281 = vadd.f32 %v711, %v1089
  %v1282 = vadd.f32 %v714, %v1090
  %v1283 = vadd.f32 %v717, %v1091
  %v1284 = vadd.f32 %v720, %v1092
  %v1285 = vadd.f32 %v723, %v1093
  %v1286 = vadd.f32 %v726, %v1094
  %v1287 = vadd.f32 %v729, %v1095
  %v1288 = vadd.f32 %v732, %v1096
  %v1289 = vadd.f32 %v735, %v1097
  %v1290 = vadd.f32 %v738, %v1098
  %v1291 = vadd.f32 %v741, %v1099
  %v1292 = vadd.f32 %v744, %v1100
  %v1293 = vadd.f32 %v747, %v1101
  %v1294 = vadd.f32 %v750, %v1102
  %v1295 = vadd.f32 %v753, %v1103
  %v1296 = vadd.f32 %v756, %v1104
  %v1297 = vadd.f32 %v759, %v1105
  %v1298 = vadd.f32 %v762, %v1106
  %v1299 = vadd.f32 %v765, %v1107
  %v1300 = vadd.f32 %v768, %v1108
  %v1301 = vadd.f32 %v771, %v1109
  %v1302 = vadd.f32 %v774, %v1110
  %v1303 = vadd.f32 %v777, %v1111
  %v1304 = vadd.f32 %v780, %v1112
  %v1305 = vadd.f32 %v783, %v1113
  %v1306 = vadd.f32 %v786, %v1114
  %v1307 = vadd.f32 %v789, %v1115
  %v1308 = vadd.f32 %v792, %v1116
  %v1309 = vadd.f32 %v795, %v1117
  %v1310 = vadd.f32 %v798, %v1118
  %v1311 = vadd.f32 %v801, %v1119
  %v1312 = vadd.f32 %v804, %v1120
  %v1313 = vadd.f32 %v807, %v1121
  %v1314 = vadd.f32 %v810, %v1122
  %v1315 = vadd.f32 %v813, %v1123
  %v1316 = vadd.f32 %v816, %v1124
  %v1317 = vadd.f32 %v819, %v1125
  %v1318 = vadd.f32 %v822, %v1126
  %v1319 = vadd.f32 %v825, %v1127
  %v1320 = vadd.f32 %v828, %v1128
  %v1321 = vadd.f32 %v831, %v1129
  %v1322 = vadd.f32 %v834, %v1130
  %v1323 = vadd.f32 %v837, %v1131
  %v1324 = vadd.f32 %v840, %v1132
  %v1325 = vadd.f32 %v843, %v1133
  %v1326 = vadd.f32 %v846, %v1134
  %v1327 = vadd.f32 %v849, %v1135
  %v1328 = vadd.f32 %v852, %v1136
  %v1329 = vadd.f32 %v855, %v1137
  %v1330 = vadd.f32 %v858, %v1138
  %v1331 = vadd.f32 %v861, %v1139
  %v1332 = vadd.f32 %v864, %v1140
  %v1333 = vadd.f32 %v867, %v1141
  %v1334 = vadd.f32 %v870, %v1142
  %v1335 = vadd.f32 %v873, %v1143
  %v1336 = vadd.f32 %v876, %v1144
  %v1337 = vadd.f32 %v879, %v1145
  %v1338 = vadd.f32 %v882, %v1146
  %v1339 = vadd.f32 %v885, %v1147
  %v1340 = vadd.f32 %v888, %v1148
  %v1341 = vadd.f32 %v891, %v1149
  %v1342 = vadd.f32 %v894, %v1150
  %v1343 = vadd.f32 %v897, %v1151
  %v1344 = vadd.f32 %v900, %v1152
  %v1345 = vadd.f32 %v903, %v1153
  %v1346 = vadd.f32 %v906, %v1154
  %v1347 = vadd.f32 %v909, %v1155
  %v1348 = vadd.f32 %v912, %v1156
  %v1349 = vadd.f32 %v915, %v1157
  %v1350 = vadd.f32 %v918, %v1158
  %v1351 = vadd.f32 %v921, %v1159
  %v1352 = vadd.f32 %v924, %v1160
  %v1353 = vadd.f32 %v927, %v1161
  %v1354 = vadd.f32 %v930, %v1162
  %v1355 = vadd.f32 %v933, %v1163
  %v1356 = vadd.f32 %v936, %v1164
  %v1357 = vadd.f32 %v939, %v1165
  %v1358 = vadd.f32 %v942, %v1166
  %v1359 = vadd.f32 %v945, %v1167
  %v1360 = vadd.f32 %v948, %v1168
  %v1361 = vadd.f32 %v951, %v1169
  %v1362 = vadd.f32 %v954, %v1170
  %v1363 = vadd.f32 %v957, %v1171
  %v1364 = vadd.f32 %v960, %v1172
  %v1365 = vadd.f32 %v963, %v1173
  %v1366 = vadd.f32 %v966, %v1174
  %v1367 = vadd.f32 %v969, %v1175
  %v1368 = vadd.f32 %v972, %v1176
  %v1369 = vadd.f32 %v975, %v1177
  %v1370 = vadd.f32 %v978, %v1178
  %v1371 = vadd.f32 %v981, %v1179
  %v1372 = vadd.f32 %v984, %v1180
  %v1373 = vadd.f32 %v987, %v1181
  %v1374 = vadd.f32 %v990, %v1182
  %v1375 = vmul.f32 %v1183, 0.5
  %v1376 = vmul.f32 %v1184, 0.5
  %v1377 = vmul.f32 %v1185, 0.5
  %v1378 = vmul.f32 %v1186, 0.5
  %v1379 = vmul.f32 %v1187, 0.5
  %v1380 = vmul.f32 %v1188, 0.5
  %v1381 = vmul.f32 %v1189, 0.5
  %v1382 = vmul.f32 %v1190, 0.5
  %v1383 = vmul.f32 %v1191, 0.5
  %v1384 = vmul.f32 %v1192, 0.5
  %v1385 = vmul.f32 %v1193, 0.5
  %v1386 = vmul.f32 %v1194, 0.5
  %v1387 = vmul.f32 %v1195, 0.5
  %v1388 = vmul.f32 %v1196, 0.5
  %v1389 = vmul.f32 %v1197, 0.5
  %v1390 = vmul.f32 %v1198, 0.5
  %v1391 = vmul.f32 %v1199, 0.5
  %v1392 = vmul.f32 %v1200, 0.5
  %v1393 = vmul.f32 %v1201, 0.5
  %v1394 = vmul.f32 %v1202, 0.5
  %v1395 = vmul.f32 %v1203, 0.5
  %v1396 = vmul.f32 %v1204, 0.5
  %v1397 = vmul.f32 %v1205, 0.5
  %v1398 = vmul.f32 %v1206, 0.5
  %v1399 = vmul.f32 %v1207, 0.5
  %v1400 = vmul.f32 %v1208, 0.5
  %v1401 = vmul.f32 %v1209, 0.5
  %v1402 = vmul.f32 %v1210, 0.5
  %v1403 = vmul.f32 %v1211, 0.5
  %v1404 = vmul.f32 %v1212, 0.5
  %v1405 = vmul.f32 %v1213, 0.5
  %v1406 = vmul.f32 %v1214, 0.5
  %v1407 = vmul.f32 %v1215, 0.5
  %v1408 = vmul.f32 %v1216, 0.5
  %v1409 = vmul.f32 %v1217, 0.5
  %v1410 = vmul.f32 %v1218, 0.5
  %v1411 = vmul.f32 %v1219, 0.5
  %v1412 = vmul.f32 %v1220, 0.5
  %v1413 = vmul.f32 %v1221, 0.5
  %v1414 = vmul.f32 %v1222, 0.5
  %v1415 = vmul.f32 %v1223, 0.5
  %v1416 = vmul.f32 %v1224, 0.5
  %v1417 = vmul.f32 %v1225, 0.5
  %v1418 = vmul.f32 %v1226, 0.5
  %v1419 = vmul.f32 %v1227, 0.5
  %v1420 = vmul.f32 %v1228, 0.5
  %v1421 = vmul.f32 %v1229, 0.5
  %v1422 = vmul.f32 %v1230, 0.5
  %v1423 = vmul.f32 %v1231, 0.5
  %v1424 = vmul.f32 %v1232, 0.5
  %v1425 = vmul.f32 %v1233, 0.5
  %v1426 = vmul.f32 %v1234, 0.5
  %v1427 = vmul.f32 %v1235, 0.5
  %v1428 = vmul.f32 %v1236, 0.5
  %v1429 = vmul.f32 %v1237, 0.5
  %v1430 = vmul.f32 %v1238, 0.5
  %v1431 = vmul.f32 %v1239, 0.5
  %v1432 = vmul.f32 %v1240, 0.5
  %v1433 = vmul.f32 %v1241, 0.5
  %v1434 = vmul.f32 %v1242, 0.5
  %v1435 = vmul.f32 %v1243, 0.5
  %v1436 = vmul.f32 %v1244, 0.5
  %v1437 = vmul.f32 %v1245, 0.5
  %v1438 = vmul.f32 %v1246, 0.5
  %v1439 = vmul.f32 %v1247, 0.5
  %v1440 = vmul.f32 %v1248, 0.5
  %v1441 = vmul.f32 %v1249, 0.5
  %v1442 = vmul.f32 %v1250, 0.5
  %v1443 = vmul.f32 %v1251, 0.5
  %v1444 = vmul.f32 %v1252, 0.5
  %v1445 = vmul.f32 %v1253, 0.5
  %v1446 = vmul.f32 %v1254, 0.5
  %v1447 = vmul.f32 %v1255, 0.5
  %v1448 = vmul.f32 %v1256, 0.5
  %v1449 = vmul.f32 %v1257, 0.5
  %v1450 = vmul.f32 %v1258, 0.5
  %v1451 = vmul.f32 %v1259, 0.5
  %v1452 = vmul.f32 %v1260, 0.5
  %v1453 = vmul.f32 %v1261, 0.5
  %v1454 = vmul.f32 %v1262, 0.5
  %v1455 = vmul.f32 %v1263, 0.5
  %v1456 = vmul.f32 %v1264, 0.5
  %v1457 = vmul.f32 %v1265, 0.5
  %v1458 = vmul.f32 %v1266, 0.5
  %v1459 = vmul.f32 %v1267, 0.5
  %v1460 = vmul.f32 %v1268, 0.5
  %v1461 = vmul.f32 %v1269, 0.5
  %v1462 = vmul.f32 %v1270, 0.5
  %v1463 = vmul.f32 %v1271, 0.5
  %v1464 = vmul.f32 %v1272, 0.5
  %v1465 = vmul.f32 %v1273, 0.5
  %v1466 = vmul.f32 %v1274, 0.5
  %v1467 = vmul.f32 %v1275, 0.5
  %v1468 = vmul.f32 %v1276, 0.5
  %v1469 = vmul.f32 %v1277, 0.5
  %v1470 = vmul.f32 %v1278, 0.5
  %v1471 = vmul.f32 %v1279, 0.5
  %v1472 = vmul.f32 %v1280, 0.5
  %v1473 = vmul.f32 %v1281, 0.5
  %v1474 = vmul.f32 %v1282, 0.5
  %v1475 = vmul.f32 %v1283, 0.5
  %v1476 = vmul.f32 %v1284, 0.5
  %v1477 = vmul.f32 %v1285, 0.5
  %v1478 = vmul.f32 %v1286, 0.5
  %v1479 = vmul.f32 %v1287, 0.5
  %v1480 = vmul.f32 %v1288, 0.5
  %v1481 = vmul.f32 %v1289, 0.5
  %v1482 = vmul.f32 %v1290, 0.5
  %v1483 = vmul.f32 %v1291, 0.5
  %v1484 = vmul.f32 %v1292, 0.5
  %v1485 = vmul.f32 %v1293, 0.5
  %v1486 = vmul.f32 %v1294, 0.5
  %v1487 = vmul.f32 %v1295, 0.5
  %v1488 = vmul.f32 %v1296, 0.5
  %v1489 = vmul.f32 %v1297, 0.5
  %v1490 = vmul.f32 %v1298, 0.5
  %v1491 = vmul.f32 %v1299, 0.5
  %v1492 = vmul.f32 %v1300, 0.5
  %v1493 = vmul.f32 %v1301, 0.5
  %v1494 = vmul.f32 %v1302, 0.5
  %v1495 = vmul.f32 %v1303, 0.5
  %v1496 = vmul.f32 %v1304, 0.5
  %v1497 = vmul.f32 %v1305, 0.5
  %v1498 = vmul.f32 %v1306, 0.5
  %v1499 = vmul.f32 %v1307, 0.5
  %v1500 = vmul.f32 %v1308, 0.5
  %v1501 = vmul.f32 %v1309, 0.5
  %v1502 = vmul.f32 %v1310, 0.5
  %v1503 = vmul.f32 %v1311, 0.5
  %v1504 = vmul.f32 %v1312, 0.5
  %v1505 = vmul.f32 %v1313, 0.5
  %v1506 = vmul.f32 %v1314, 0.5
  %v1507 = vmul.f32 %v1315, 0.5
  %v1508 = vmul.f32 %v1316, 0.5
  %v1509 = vmul.f32 %v1317, 0.5
  %v1510 = vmul.f32 %v1318, 0.5
  %v1511 = vmul.f32 %v1319, 0.5
  %v1512 = vmul.f32 %v1320, 0.5
  %v1513 = vmul.f32 %v1321, 0.5
  %v1514 = vmul.f32 %v1322, 0.5
  %v1515 = vmul.f32 %v1323, 0.5
  %v1516 = vmul.f32 %v1324, 0.5
  %v1517 = vmul.f32 %v1325, 0.5
  %v1518 = vmul.f32 %v1326, 0.5
  %v1519 = vmul.f32 %v1327, 0.5
  %v1520 = vmul.f32 %v1328, 0.5
  %v1521 = vmul.f32 %v1329, 0.5
  %v1522 = vmul.f32 %v1330, 0.5
  %v1523 = vmul.f32 %v1331, 0.5
  %v1524 = vmul.f32 %v1332, 0.5
  %v1525 = vmul.f32 %v1333, 0.5
  %v1526 = vmul.f32 %v1334, 0.5
  %v1527 = vmul.f32 %v1335, 0.5
  %v1528 = vmul.f32 %v1336, 0.5
  %v1529 = vmul.f32 %v1337, 0.5
  %v1530 = vmul.f32 %v1338, 0.5
  %v1531 = vmul.f32 %v1339, 0.5
  %v1532 = vmul.f32 %v1340, 0.5
  %v1533 = vmul.f32 %v1341, 0.5
  %v1534 = vmul.f32 %v1342, 0.5
  %v1535 = vmul.f32 %v1343, 0.5
  %v1536 = vmul.f32 %v1344, 0.5
  %v1537 = vmul.f32 %v1345, 0.5
  %v1538 = vmul.f32 %v1346, 0.5
  %v1539 = vmul.f32 %v1347, 0.5
  %v1540 = vmul.f32 %v1348, 0.5
  %v1541 = vmul.f32 %v1349, 0.5
  %v1542 = vmul.f32 %v1350, 0.5
  %v1543 = vmul.f32 %v1351, 0.5
  %v1544 = vmul.f32 %v1352, 0.5
  %v1545 = vmul.f32 %v1353, 0.5
  %v1546 = vmul.f32 %v1354, 0.5
  %v1547 = vmul.f32 %v1355, 0.5
  %v1548 = vmul.f32 %v1356, 0.5
  %v1549 = vmul.f32 %v1357, 0.5
  %v1550 = vmul.f32 %v1358, 0.5
  %v1551 = vmul.f32 %v1359, 0.5
  %v1552 = vmul.f32 %v1360, 0.5
  %v1553 = vmul.f32 %v1361, 0.5
  %v1554 = vmul.f32 %v1362, 0.5
  %v1555 = vmul.f32 %v1363, 0.5
  %v1556 = vmul.f32 %v1364, 0.5
  %v1557 = vmul.f32 %v1365, 0.5
  %v1558 = vmul.f32 %v1366, 0.5
  %v1559 = vmul.f32 %v1367, 0.5
  %v1560 = vmul.f32 %v1368, 0.5
  %v1561 = vmul.f32 %v1369, 0.5
  %v1562 = vmul.f32 %v1370, 0.5
  %v1563 = vmul.f32 %v1371, 0.5
  %v1564 = vmul.f32 %v1372, 0.5
  %v1565 = vmul.f32 %v1373, 0.5
  %v1566 = vmul.f32 %v1374, 0.5
  %v1567 = vtanh.pop %v1375
  %v1568 = vtanh.pop %v1376
  %v1569 = vtanh.pop %v1377
  %v1570 = vtanh.pop %v1378
  %v1571 = vtanh.pop %v1379
  %v1572 = vtanh.pop %v1380
  %v1573 = vtanh.pop %v1381
  %v1574 = vtanh.pop %v1382
  %v1575 = vtanh.pop %v1383
  %v1576 = vtanh.pop %v1384
  %v1577 = vtanh.pop %v1385
  %v1578 = vtanh.pop %v1386
  %v1579 = vtanh.pop %v1387
  %v1580 = vtanh.pop %v1388
  %v1581 = vtanh.pop %v1389
  %v1582 = vtanh.pop %v1390
  %v1583 = vtanh.pop %v1391
  %v1584 = vtanh.pop %v1392
  %v1585 = vtanh.pop %v1393
  %v1586 = vtanh.pop %v1394
  %v1587 = vtanh.pop %v1395
  %v1588 = vtanh.pop %v1396
  %v1589 = vtanh.pop %v1397
  %v1590 = vtanh.pop %v1398
  %v1591 = vtanh.pop %v1399
  %v1592 = vtanh.pop %v1400
  %v1593 = vtanh.pop %v1401
  %v1594 = vtanh.pop %v1402
  %v1595 = vtanh.pop %v1403
  %v1596 = vtanh.pop %v1404
  %v1597 = vtanh.pop %v1405
  %v1598 = vtanh.pop %v1406
  %v1599 = vtanh.pop %v1407
  %v1600 = vtanh.pop %v1408
  %v1601 = vtanh.pop %v1409
  %v1602 = vtanh.pop %v1410
  %v1603 = vtanh.pop %v1411
  %v1604 = vtanh.pop %v1412
  %v1605 = vtanh.pop %v1413
  %v1606 = vtanh.pop %v1414
  %v1607 = vtanh.pop %v1415
  %v1608 = vtanh.pop %v1416
  %v1609 = vtanh.pop %v1417
  %v1610 = vtanh.pop %v1418
  %v1611 = vtanh.pop %v1419
  %v1612 = vtanh.pop %v1420
  %v1613 = vtanh.pop %v1421
  %v1614 = vtanh.pop %v1422
  %v1615 = vtanh.pop %v1423
  %v1616 = vtanh.pop %v1424
  %v1617 = vtanh.pop %v1425
  %v1618 = vtanh.pop %v1426
  %v1619 = vtanh.pop %v1427
  %v1620 = vtanh.pop %v1428
  %v1621 = vtanh.pop %v1429
  %v1622 = vtanh.pop %v1430
  %v1623 = vtanh.pop %v1431
  %v1624 = vtanh.pop %v1432
  %v1625 = vtanh.pop %v1433
  %v1626 = vtanh.pop %v1434
  %v1627 = vtanh.pop %v1435
  %v1628 = vtanh.pop %v1436
  %v1629 = vtanh.pop %v1437
  %v1630 = vtanh.pop %v1438
  %v1631 = vtanh.pop %v1439
  %v1632 = vtanh.pop %v1440
  %v1633 = vtanh.pop %v1441
  %v1634 = vtanh.pop %v1442
  %v1635 = vtanh.pop %v1443
  %v1636 = vtanh.pop %v1444
  %v1637 = vtanh.pop %v1445
  %v1638 = vtanh.pop %v1446
  %v1639 = vtanh.pop %v1447
  %v1640 = vtanh.pop %v1448
  %v1641 = vtanh.pop %v1449
  %v1642 = vtanh.pop %v1450
  %v1643 = vtanh.pop %v1451
  %v1644 = vtanh.pop %v1452
  %v1645 = vtanh.pop %v1453
  %v1646 = vtanh.pop %v1454
  %v1647 = vtanh.pop %v1455
  %v1648 = vtanh.pop %v1456
  %v1649 = vtanh.pop %v1457
  %v1650 = vtanh.pop %v1458
  %v1651 = vtanh.pop %v1459
  %v1652 = vtanh.pop %v1460
  %v1653 = vtanh.pop %v1461
  %v1654 = vtanh.pop %v1462
  %v1655 = vtanh.pop %v1463
  %v1656 = vtanh.pop %v1464
  %v1657 = vtanh.pop %v1465
  %v1658 = vtanh.pop %v1466
  %v1659 = vtanh.pop %v1467
  %v1660 = vtanh.pop %v1468
  %v1661 = vtanh.pop %v1469
  %v1662 = vtanh.pop %v1470
  %v1663 = vtanh.pop %v1471
  %v1664 = vtanh.pop %v1472
  %v1665 = vtanh.pop %v1473
  %v1666 = vtanh.pop %v1474
  %v1667 = vtanh.pop %v1475
  %v1668 = vtanh.pop %v1476
  %v1669 = vtanh.pop %v1477
  %v1670 = vtanh.pop %v1478
  %v1671 = vtanh.pop %v1479
  %v1672 = vtanh.pop %v1480
  %v1673 = vtanh.pop %v1481
  %v1674 = vtanh.pop %v1482
  %v1675 = vtanh.pop %v1483
  %v1676 = vtanh.pop %v1484
  %v1677 = vtanh.pop %v1485
  %v1678 = vtanh.pop %v1486
  %v1679 = vtanh.pop %v1487
  %v1680 = vtanh.pop %v1488
  %v1681 = vtanh.pop %v1489
  %v1682 = vtanh.pop %v1490
  %v1683 = vtanh.pop %v1491
  %v1684 = vtanh.pop %v1492
  %v1685 = vtanh.pop %v1493
  %v1686 = vtanh.pop %v1494
  %v1687 = vtanh.pop %v1495
  %v1688 = vtanh.pop %v1496
  %v1689 = vtanh.pop %v1497
  %v1690 = vtanh.pop %v1498
  %v1691 = vtanh.pop %v1499
  %v1692 = vtanh.pop %v1500
  %v1693 = vtanh.pop %v1501
  %v1694 = vtanh.pop %v1502
  %v1695 = vtanh.pop %v1503
  %v1696 = vtanh.pop %v1504
  %v1697 = vtanh.pop %v1505
  %v1698 = vtanh.pop %v1506
  %v1699 = vtanh.pop %v1507
  %v1700 = vtanh.pop %v1508
  %v1701 = vtanh.pop %v1509
  %v1702 = vtanh.pop %v1510
  %v1703 = vtanh.pop %v1511
  %v1704 = vtanh.pop %v1512
  %v1705 = vtanh.pop %v1513
  %v1706 = vtanh.pop %v1514
  %v1707 = vtanh.pop %v1515
  %v1708 = vtanh.pop %v1516
  %v1709 = vtanh.pop %v1517
  %v1710 = vtanh.pop %v1518
  %v1711 = vtanh.pop %v1519
  %v1712 = vtanh.pop %v1520
  %v1713 = vtanh.pop %v1521
  %v1714 = vtanh.pop %v1522
  %v1715 = vtanh.pop %v1523
  %v1716 = vtanh.pop %v1524
  %v1717 = vtanh.pop %v1525
  %v1718 = vtanh.pop %v1526
  %v1719 = vtanh.pop %v1527
  %v1720 = vtanh.pop %v1528
  %v1721 = vtanh.pop %v1529
  %v1722 = vtanh.pop %v1530
  %v1723 = vtanh.pop %v1531
  %v1724 = vtanh.pop %v1532
  %v1725 = vtanh.pop %v1533
  %v1726 = vtanh.pop %v1534
  %v1727 = vtanh.pop %v1535
  %v1728 = vtanh.pop %v1536
  %v1729 = vtanh.pop %v1537
  %v1730 = vtanh.pop %v1538
  %v1731 = vtanh.pop %v1539
  %v1732 = vtanh.pop %v1540
  %v1733 = vtanh.pop %v1541
  %v1734 = vtanh.pop %v1542
  %v1735 = vtanh.pop %v1543
  %v1736 = vtanh.pop %v1544
  %v1737 = vtanh.pop %v1545
  %v1738 = vtanh.pop %v1546
  %v1739 = vtanh.pop %v1547
  %v1740 = vtanh.pop %v1548
  %v1741 = vtanh.pop %v1549
  %v1742 = vtanh.pop %v1550
  %v1743 = vtanh.pop %v1551
  %v1744 = vtanh.pop %v1552
  %v1745 = vtanh.pop %v1553
  %v1746 = vtanh.pop %v1554
  %v1747 = vtanh.pop %v1555
  %v1748 = vtanh.pop %v1556
  %v1749 = vtanh.pop %v1557
  %v1750 = vtanh.pop %v1558
  %v1751 = vtanh.pop %v1559
  %v1752 = vtanh.pop %v1560
  %v1753 = vtanh.pop %v1561
  %v1754 = vtanh.pop %v1562
  %v1755 = vtanh.pop %v1563
  %v1756 = vtanh.pop %v1564
  %v1757 = vtanh.pop %v1565
  %v1758 = vtanh.pop %v1566
  %v1759 = vadd.f32 %v1567, 1.0
  %v1760 = vadd.f32 %v1568, 1.0
  %v1761 = vadd.f32 %v1569, 1.0
  %v1762 = vadd.f32 %v1570, 1.0
  %v1763 = vadd.f32 %v1571, 1.0
  %v1764 = vadd.f32 %v1572, 1.0
  %v1765 = vadd.f32 %v1573, 1.0
  %v1766 = vadd.f32 %v1574, 1.0
  %v1767 = vadd.f32 %v1575, 1.0
  %v1768 = vadd.f32 %v1576, 1.0
  %v1769 = vadd.f32 %v1577, 1.0
  %v1770 = vadd.f32 %v1578, 1.0
  %v1771 = vadd.f32 %v1579, 1.0
  %v1772 = vadd.f32 %v1580, 1.0
  %v1773 = vadd.f32 %v1581, 1.0
  %v1774 = vadd.f32 %v1582, 1.0
  %v1775 = vadd.f32 %v1583, 1.0
  %v1776 = vadd.f32 %v1584, 1.0
  %v1777 = vadd.f32 %v1585, 1.0
  %v1778 = vadd.f32 %v1586, 1.0
  %v1779 = vadd.f32 %v1587, 1.0
  %v1780 = vadd.f32 %v1588, 1.0
  %v1781 = vadd.f32 %v1589, 1.0
  %v1782 = vadd.f32 %v1590, 1.0
  %v1783 = vadd.f32 %v1591, 1.0
  %v1784 = vadd.f32 %v1592, 1.0
  %v1785 = vadd.f32 %v1593, 1.0
  %v1786 = vadd.f32 %v1594, 1.0
  %v1787 = vadd.f32 %v1595, 1.0
  %v1788 = vadd.f32 %v1596, 1.0
  %v1789 = vadd.f32 %v1597, 1.0
  %v1790 = vadd.f32 %v1598, 1.0
  %v1791 = vadd.f32 %v1599, 1.0
  %v1792 = vadd.f32 %v1600, 1.0
  %v1793 = vadd.f32 %v1601, 1.0
  %v1794 = vadd.f32 %v1602, 1.0
  %v1795 = vadd.f32 %v1603, 1.0
  %v1796 = vadd.f32 %v1604, 1.0
  %v1797 = vadd.f32 %v1605, 1.0
  %v1798 = vadd.f32 %v1606, 1.0
  %v1799 = vadd.f32 %v1607, 1.0
  %v1800 = vadd.f32 %v1608, 1.0
  %v1801 = vadd.f32 %v1609, 1.0
  %v1802 = vadd.f32 %v1610, 1.0
  %v1803 = vadd.f32 %v1611, 1.0
  %v1804 = vadd.f32 %v1612, 1.0
  %v1805 = vadd.f32 %v1613, 1.0
  %v1806 = vadd.f32 %v1614, 1.0
  %v1807 = vadd.f32 %v1615, 1.0
  %v1808 = vadd.f32 %v1616, 1.0
  %v1809 = vadd.f32 %v1617, 1.0
  %v1810 = vadd.f32 %v1618, 1.0
  %v1811 = vadd.f32 %v1619, 1.0
  %v1812 = vadd.f32 %v1620, 1.0
  %v1813 = vadd.f32 %v1621, 1.0
  %v1814 = vadd.f32 %v1622, 1.0
  %v1815 = vadd.f32 %v1623, 1.0
  %v1816 = vadd.f32 %v1624, 1.0
  %v1817 = vadd.f32 %v1625, 1.0
  %v1818 = vadd.f32 %v1626, 1.0
  %v1819 = vadd.f32 %v1627, 1.0
  %v1820 = vadd.f32 %v1628, 1.0
  %v1821 = vadd.f32 %v1629, 1.0
  %v1822 = vadd.f32 %v1630, 1.0
  %v1823 = vadd.f32 %v1631, 1.0
  %v1824 = vadd.f32 %v1632, 1.0
  %v1825 = vadd.f32 %v1633, 1.0
  %v1826 = vadd.f32 %v1634, 1.0
  %v1827 = vadd.f32 %v1635, 1.0
  %v1828 = vadd.f32 %v1636, 1.0
  %v1829 = vadd.f32 %v1637, 1.0
  %v1830 = vadd.f32 %v1638, 1.0
  %v1831 = vadd.f32 %v1639, 1.0
  %v1832 = vadd.f32 %v1640, 1.0
  %v1833 = vadd.f32 %v1641, 1.0
  %v1834 = vadd.f32 %v1642, 1.0
  %v1835 = vadd.f32 %v1643, 1.0
  %v1836 = vadd.f32 %v1644, 1.0
  %v1837 = vadd.f32 %v1645, 1.0
  %v1838 = vadd.f32 %v1646, 1.0
  %v1839 = vadd.f32 %v1647, 1.0
  %v1840 = vadd.f32 %v1648, 1.0
  %v1841 = vadd.f32 %v1649, 1.0
  %v1842 = vadd.f32 %v1650, 1.0
  %v1843 = vadd.f32 %v1651, 1.0
  %v1844 = vadd.f32 %v1652, 1.0
  %v1845 = vadd.f32 %v1653, 1.0
  %v1846 = vadd.f32 %v1654, 1.0
  %v1847 = vadd.f32 %v1655, 1.0
  %v1848 = vadd.f32 %v1656, 1.0
  %v1849 = vadd.f32 %v1657, 1.0
  %v1850 = vadd.f32 %v1658, 1.0
  %v1851 = vadd.f32 %v1659, 1.0
  %v1852 = vadd.f32 %v1660, 1.0
  %v1853 = vadd.f32 %v1661, 1.0
  %v1854 = vadd.f32 %v1662, 1.0
  %v1855 = vadd.f32 %v1663, 1.0
  %v1856 = vadd.f32 %v1664, 1.0
  %v1857 = vadd.f32 %v1665, 1.0
  %v1858 = vadd.f32 %v1666, 1.0
  %v1859 = vadd.f32 %v1667, 1.0
  %v1860 = vadd.f32 %v1668, 1.0
  %v1861 = vadd.f32 %v1669, 1.0
  %v1862 = vadd.f32 %v1670, 1.0
  %v1863 = vadd.f32 %v1671, 1.0
  %v1864 = vadd.f32 %v1672, 1.0
  %v1865 = vadd.f32 %v1673, 1.0
  %v1866 = vadd.f32 %v1674, 1.0
  %v1867 = vadd.f32 %v1675, 1.0
  %v1868 = vadd.f32 %v1676, 1.0
  %v1869 = vadd.f32 %v1677, 1.0
  %v1870 = vadd.f32 %v1678, 1.0
  %v1871 = vadd.f32 %v1679, 1.0
  %v1872 = vadd.f32 %v1680, 1.0
  %v1873 = vadd.f32 %v1681, 1.0
  %v1874 = vadd.f32 %v1682, 1.0
  %v1875 = vadd.f32 %v1683, 1.0
  %v1876 = vadd.f32 %v1684, 1.0
  %v1877 = vadd.f32 %v1685, 1.0
  %v1878 = vadd.f32 %v1686, 1.0
  %v1879 = vadd.f32 %v1687, 1.0
  %v1880 = vadd.f32 %v1688, 1.0
  %v1881 = vadd.f32 %v1689, 1.0
  %v1882 = vadd.f32 %v1690, 1.0
  %v1883 = vadd.f32 %v1691, 1.0
  %v1884 = vadd.f32 %v1692, 1.0
  %v1885 = vadd.f32 %v1693, 1.0
  %v1886 = vadd.f32 %v1694, 1.0
  %v1887 = vadd.f32 %v1695, 1.0
  %v1888 = vadd.f32 %v1696, 1.0
  %v1889 = vadd.f32 %v1697, 1.0
  %v1890 = vadd.f32 %v1698, 1.0
  %v1891 = vadd.f32 %v1699, 1.0
  %v1892 = vadd.f32 %v1700, 1.0
  %v1893 = vadd.f32 %v1701, 1.0
  %v1894 = vadd.f32 %v1702, 1.0
  %v1895 = vadd.f32 %v1703, 1.0
  %v1896 = vadd.f32 %v1704, 1.0
  %v1897 = vadd.f32 %v1705, 1.0
  %v1898 = vadd.f32 %v1706, 1.0
  %v1899 = vadd.f32 %v1707, 1.0
  %v1900 = vadd.f32 %v1708, 1.0
  %v1901 = vadd.f32 %v1709, 1.0
  %v1902 = vadd.f32 %v1710, 1.0
  %v1903 = vadd.f32 %v1711, 1.0
  %v1904 = vadd.f32 %v1712, 1.0
  %v1905 = vadd.f32 %v1713, 1.0
  %v1906 = vadd.f32 %v1714, 1.0
  %v1907 = vadd.f32 %v1715, 1.0
  %v1908 = vadd.f32 %v1716, 1.0
  %v1909 = vadd.f32 %v1717, 1.0
  %v1910 = vadd.f32 %v1718, 1.0
  %v1911 = vadd.f32 %v1719, 1.0
  %v1912 = vadd.f32 %v1720, 1.0
  %v1913 = vadd.f32 %v1721, 1.0
  %v1914 = vadd.f32 %v1722, 1.0
  %v1915 = vadd.f32 %v1723, 1.0
  %v1916 = vadd.f32 %v1724, 1.0
  %v1917 = vadd.f32 %v1725, 1.0
  %v1918 = vadd.f32 %v1726, 1.0
  %v1919 = vadd.f32 %v1727, 1.0
  %v1920 = vadd.f32 %v1728, 1.0
  %v1921 = vadd.f32 %v1729, 1.0
  %v1922 = vadd.f32 %v1730, 1.0
  %v1923 = vadd.f32 %v1731, 1.0
  %v1924 = vadd.f32 %v1732, 1.0
  %v1925 = vadd.f32 %v1733, 1.0
  %v1926 = vadd.f32 %v1734, 1.0
  %v1927 = vadd.f32 %v1735, 1.0
  %v1928 = vadd.f32 %v1736, 1.0
  %v1929 = vadd.f32 %v1737, 1.0
  %v1930 = vadd.f32 %v1738, 1.0
  %v1931 = vadd.f32 %v1739, 1.0
  %v1932 = vadd.f32 %v1740, 1.0
  %v1933 = vadd.f32 %v1741, 1.0
  %v1934 = vadd.f32 %v1742, 1.0
  %v1935 = vadd.f32 %v1743, 1.0
  %v1936 = vadd.f32 %v1744, 1.0
  %v1937 = vadd.f32 %v1745, 1.0
  %v1938 = vadd.f32 %v1746, 1.0
  %v1939 = vadd.f32 %v1747, 1.0
  %v1940 = vadd.f32 %v1748, 1.0
  %v1941 = vadd.f32 %v1749, 1.0
  %v1942 = vadd.f32 %v1750, 1.0
  %v1943 = vadd.f32 %v1751, 1.0
  %v1944 = vadd.f32 %v1752, 1.0
  %v1945 = vadd.f32 %v1753, 1.0
  %v1946 = vadd.f32 %v1754, 1.0
  %v1947 = vadd.f32 %v1755, 1.0
  %v1948 = vadd.f32 %v1756, 1.0
  %v1949 = vadd.f32 %v1757, 1.0
  %v1950 = vadd.f32 %v1758, 1.0
  %v1951 = vmul.f32 %v1759, 0.5
  %v1952 = vmul.f32 %v1760, 0.5
  %v1953 = vmul.f32 %v1761, 0.5
  %v1954 = vmul.f32 %v1762, 0.5
  %v1955 = vmul.f32 %v1763, 0.5
  %v1956 = vmul.f32 %v1764, 0.5
  %v1957 = vmul.f32 %v1765, 0.5
  %v1958 = vmul.f32 %v1766, 0.5
  %v1959 = vmul.f32 %v1767, 0.5
  %v1960 = vmul.f32 %v1768, 0.5
  %v1961 = vmul.f32 %v1769, 0.5
  %v1962 = vmul.f32 %v1770, 0.5
  %v1963 = vmul.f32 %v1771, 0.5
  %v1964 = vmul.f32 %v1772, 0.5
  %v1965 = vmul.f32 %v1773, 0.5
  %v1966 = vmul.f32 %v1774, 0.5
  %v1967 = vmul.f32 %v1775, 0.5
  %v1968 = vmul.f32 %v1776, 0.5
  %v1969 = vmul.f32 %v1777, 0.5
  %v1970 = vmul.f32 %v1778, 0.5
  %v1971 = vmul.f32 %v1779, 0.5
  %v1972 = vmul.f32 %v1780, 0.5
  %v1973 = vmul.f32 %v1781, 0.5
  %v1974 = vmul.f32 %v1782, 0.5
  %v1975 = vmul.f32 %v1783, 0.5
  %v1976 = vmul.f32 %v1784, 0.5
  %v1977 = vmul.f32 %v1785, 0.5
  %v1978 = vmul.f32 %v1786, 0.5
  %v1979 = vmul.f32 %v1787, 0.5
  %v1980 = vmul.f32 %v1788, 0.5
  %v1981 = vmul.f32 %v1789, 0.5
  %v1982 = vmul.f32 %v1790, 0.5
  %v1983 = vmul.f32 %v1791, 0.5
  %v1984 = vmul.f32 %v1792, 0.5
  %v1985 = vmul.f32 %v1793, 0.5
  %v1986 = vmul.f32 %v1794, 0.5
  %v1987 = vmul.f32 %v1795, 0.5
  %v1988 = vmul.f32 %v1796, 0.5
  %v1989 = vmul.f32 %v1797, 0.5
  %v1990 = vmul.f32 %v1798, 0.5
  %v1991 = vmul.f32 %v1799, 0.5
  %v1992 = vmul.f32 %v1800, 0.5
  %v1993 = vmul.f32 %v1801, 0.5
  %v1994 = vmul.f32 %v1802, 0.5
  %v1995 = vmul.f32 %v1803, 0.5
  %v1996 = vmul.f32 %v1804, 0.5
  %v1997 = vmul.f32 %v1805, 0.5
  %v1998 = vmul.f32 %v1806, 0.5
  %v1999 = vmul.f32 %v1807, 0.5
  %v2000 = vmul.f32 %v1808, 0.5
  %v2001 = vmul.f32 %v1809, 0.5
  %v2002 = vmul.f32 %v1810, 0.5
  %v2003 = vmul.f32 %v1811, 0.5
  %v2004 = vmul.f32 %v1812, 0.5
  %v2005 = vmul.f32 %v1813, 0.5
  %v2006 = vmul.f32 %v1814, 0.5
  %v2007 = vmul.f32 %v1815, 0.5
  %v2008 = vmul.f32 %v1816, 0.5
  %v2009 = vmul.f32 %v1817, 0.5
  %v2010 = vmul.f32 %v1818, 0.5
  %v2011 = vmul.f32 %v1819, 0.5
  %v2012 = vmul.f32 %v1820, 0.5
  %v2013 = vmul.f32 %v1821, 0.5
  %v2014 = vmul.f32 %v1822, 0.5
  %v2015 = vmul.f32 %v1823, 0.5
  %v2016 = vmul.f32 %v1824, 0.5
  %v2017 = vmul.f32 %v1825, 0.5
  %v2018 = vmul.f32 %v1826, 0.5
  %v2019 = vmul.f32 %v1827, 0.5
  %v2020 = vmul.f32 %v1828, 0.5
  %v2021 = vmul.f32 %v1829, 0.5
  %v2022 = vmul.f32 %v1830, 0.5
  %v2023 = vmul.f32 %v1831, 0.5
  %v2024 = vmul.f32 %v1832, 0.5
  %v2025 = vmul.f32 %v1833, 0.5
  %v2026 = vmul.f32 %v1834, 0.5
  %v2027 = vmul.f32 %v1835, 0.5
  %v2028 = vmul.f32 %v1836, 0.5
  %v2029 = vmul.f32 %v1837, 0.5
  %v2030 = vmul.f32 %v1838, 0.5
  %v2031 = vmul.f32 %v1839, 0.5
  %v2032 = vmul.f32 %v1840, 0.5
  %v2033 = vmul.f32 %v1841, 0.5
  %v2034 = vmul.f32 %v1842, 0.5
  %v2035 = vmul.f32 %v1843, 0.5
  %v2036 = vmul.f32 %v1844, 0.5
  %v2037 = vmul.f32 %v1845, 0.5
  %v2038 = vmul.f32 %v1846, 0.5
  %v2039 = vmul.f32 %v1847, 0.5
  %v2040 = vmul.f32 %v1848, 0.5
  %v2041 = vmul.f32 %v1849, 0.5
  %v2042 = vmul.f32 %v1850, 0.5
  %v2043 = vmul.f32 %v1851, 0.5
  %v2044 = vmul.f32 %v1852, 0.5
  %v2045 = vmul.f32 %v1853, 0.5
  %v2046 = vmul.f32 %v1854, 0.5
  %v2047 = vmul.f32 %v1855, 0.5
  %v2048 = vmul.f32 %v1856, 0.5
  %v2049 = vmul.f32 %v1857, 0.5
  %v2050 = vmul.f32 %v1858, 0.5
  %v2051 = vmul.f32 %v1859, 0.5
  %v2052 = vmul.f32 %v1860, 0.5
  %v2053 = vmul.f32 %v1861, 0.5
  %v2054 = vmul.f32 %v1862, 0.5
  %v2055 = vmul.f32 %v1863, 0.5
  %v2056 = vmul.f32 %v1864, 0.5
  %v2057 = vmul.f32 %v1865, 0.5
  %v2058 = vmul.f32 %v1866, 0.5
  %v2059 = vmul.f32 %v1867, 0.5
  %v2060 = vmul.f32 %v1868, 0.5
  %v2061 = vmul.f32 %v1869, 0.5
  %v2062 = vmul.f32 %v1870, 0.5
  %v2063 = vmul.f32 %v1871, 0.5
  %v2064 = vmul.f32 %v1872, 0.5
  %v2065 = vmul.f32 %v1873, 0.5
  %v2066 = vmul.f32 %v1874, 0.5
  %v2067 = vmul.f32 %v1875, 0.5
  %v2068 = vmul.f32 %v1876, 0.5
  %v2069 = vmul.f32 %v1877, 0.5
  %v2070 = vmul.f32 %v1878, 0.5
  %v2071 = vmul.f32 %v1879, 0.5
  %v2072 = vmul.f32 %v1880, 0.5
  %v2073 = vmul.f32 %v1881, 0.5
  %v2074 = vmul.f32 %v1882, 0.5
  %v2075 = vmul.f32 %v1883, 0.5
  %v2076 = vmul.f32 %v1884, 0.5
  %v2077 = vmul.f32 %v1885, 0.5
  %v2078 = vmul.f32 %v1886, 0.5
  %v2079 = vmul.f32 %v1887, 0.5
  %v2080 = vmul.f32 %v1888, 0.5
  %v2081 = vmul.f32 %v1889, 0.5
  %v2082 = vmul.f32 %v1890, 0.5
  %v2083 = vmul.f32 %v1891, 0.5
  %v2084 = vmul.f32 %v1892, 0.5
  %v2085 = vmul.f32 %v1893, 0.5
  %v2086 = vmul.f32 %v1894, 0.5
  %v2087 = vmul.f32 %v1895, 0.5
  %v2088 = vmul.f32 %v1896, 0.5
  %v2089 = vmul.f32 %v1897, 0.5
  %v2090 = vmul.f32 %v1898, 0.5
  %v2091 = vmul.f32 %v1899, 0.5
  %v2092 = vmul.f32 %v1900, 0.5
  %v2093 = vmul.f32 %v1901, 0.5
  %v2094 = vmul.f32 %v1902, 0.5
  %v2095 = vmul.f32 %v1903, 0.5
  %v2096 = vmul.f32 %v1904, 0.5
  %v2097 = vmul.f32 %v1905, 0.5
  %v2098 = vmul.f32 %v1906, 0.5
  %v2099 = vmul.f32 %v1907, 0.5
  %v2100 = vmul.f32 %v1908, 0.5
  %v2101 = vmul.f32 %v1909, 0.5
  %v2102 = vmul.f32 %v1910, 0.5
  %v2103 = vmul.f32 %v1911, 0.5
  %v2104 = vmul.f32 %v1912, 0.5
  %v2105 = vmul.f32 %v1913, 0.5
  %v2106 = vmul.f32 %v1914, 0.5
  %v2107 = vmul.f32 %v1915, 0.5
  %v2108 = vmul.f32 %v1916, 0.5
  %v2109 = vmul.f32 %v1917, 0.5
  %v2110 = vmul.f32 %v1918, 0.5
  %v2111 = vmul.f32 %v1919, 0.5
  %v2112 = vmul.f32 %v1920, 0.5
  %v2113 = vmul.f32 %v1921, 0.5
  %v2114 = vmul.f32 %v1922, 0.5
  %v2115 = vmul.f32 %v1923, 0.5
  %v2116 = vmul.f32 %v1924, 0.5
  %v2117 = vmul.f32 %v1925, 0.5
  %v2118 = vmul.f32 %v1926, 0.5
  %v2119 = vmul.f32 %v1927, 0.5
  %v2120 = vmul.f32 %v1928, 0.5
  %v2121 = vmul.f32 %v1929, 0.5
  %v2122 = vmul.f32 %v1930, 0.5
  %v2123 = vmul.f32 %v1931, 0.5
  %v2124 = vmul.f32 %v1932, 0.5
  %v2125 = vmul.f32 %v1933, 0.5
  %v2126 = vmul.f32 %v1934, 0.5
  %v2127 = vmul.f32 %v1935, 0.5
  %v2128 = vmul.f32 %v1936, 0.5
  %v2129 = vmul.f32 %v1937, 0.5
  %v2130 = vmul.f32 %v1938, 0.5
  %v2131 = vmul.f32 %v1939, 0.5
  %v2132 = vmul.f32 %v1940, 0.5
  %v2133 = vmul.f32 %v1941, 0.5
  %v2134 = vmul.f32 %v1942, 0.5
  %v2135 = vmul.f32 %v1943, 0.5
  %v2136 = vmul.f32 %v1944, 0.5
  %v2137 = vmul.f32 %v1945, 0.5
  %v2138 = vmul.f32 %v1946, 0.5
  %v2139 = vmul.f32 %v1947, 0.5
  %v2140 = vmul.f32 %v1948, 0.5
  %v2141 = vmul.f32 %v1949, 0.5
  %v2142 = vmul.f32 %v1950, 0.5
  %v2143 = vld [vmem:[%s3] sm:$0xff]
  %v2144 = vld [vmem:[%s3 + $0x8] sm:$0xff]
  %v2145 = vld [vmem:[%s3 + $0x10] sm:$0xff]
  %v2146 = vld [vmem:[%s3 + $0x18] sm:$0xff]
  %v2147 = vld [vmem:[%s3 + $0x20] sm:$0xff]
  %v2148 = vld [vmem:[%s3 + $0x28] sm:$0xff]
  %v2149 = vld [vmem:[%s3 + $0x30] sm:$0xff]
  %v2150 = vld [vmem:[%s3 + $0x38] sm:$0xff]
  %v2151 = vld [vmem:[%s3 + $0x40] sm:$0xff]
  %v2152 = vld [vmem:[%s3 + $0x48] sm:$0xff]
  %v2153 = vld [vmem:[%s3 + $0x50] sm:$0xff]
  %v2154 = vld [vmem:[%s3 + $0x58] sm:$0xff]
  %v2155 = vld [vmem:[%s3 + $0x60] sm:$0xff]
  %v2156 = vld [vmem:[%s3 + $0x68] sm:$0xff]
  %v2157 = vld [vmem:[%s3 + $0x70] sm:$0xff]
  %v2158 = vld [vmem:[%s3 + $0x78] sm:$0xff]
  %v2159 = vld [vmem:[%s3 + $0x80] sm:$0xff]
  %v2160 = vld [vmem:[%s3 + $0x88] sm:$0xff]
  %v2161 = vld [vmem:[%s3 + $0x90] sm:$0xff]
  %v2162 = vld [vmem:[%s3 + $0x98] sm:$0xff]
  %v2163 = vld [vmem:[%s3 + $0xa0] sm:$0xff]
  %v2164 = vld [vmem:[%s3 + $0xa8] sm:$0xff]
  %v2165 = vld [vmem:[%s3 + $0xb0] sm:$0xff]
  %v2166 = vld [vmem:[%s3 + $0xb8] sm:$0xff]
  %v2167 = vld [vmem:[%s3 + $0xc0] sm:$0xff]
  %v2168 = vld [vmem:[%s3 + $0xc8] sm:$0xff]
  %v2169 = vld [vmem:[%s3 + $0xd0] sm:$0xff]
  %v2170 = vld [vmem:[%s3 + $0xd8] sm:$0xff]
  %v2171 = vld [vmem:[%s3 + $0xe0] sm:$0xff]
  %v2172 = vld [vmem:[%s3 + $0xe8] sm:$0xff]
  %v2173 = vld [vmem:[%s3 + $0xf0] sm:$0xff]
  %v2174 = vld [vmem:[%s3 + $0xf8] sm:$0xff]
  %v2175 = vld [vmem:[%s3 + $0x100] sm:$0xff]
  %v2176 = vld [vmem:[%s3 + $0x108] sm:$0xff]
  %v2177 = vld [vmem:[%s3 + $0x110] sm:$0xff]
  %v2178 = vld [vmem:[%s3 + $0x118] sm:$0xff]
  %v2179 = vld [vmem:[%s3 + $0x120] sm:$0xff]
  %v2180 = vld [vmem:[%s3 + $0x128] sm:$0xff]
  %v2181 = vld [vmem:[%s3 + $0x130] sm:$0xff]
  %v2182 = vld [vmem:[%s3 + $0x138] sm:$0xff]
  %v2183 = vld [vmem:[%s3 + $0x140] sm:$0xff]
  %v2184 = vld [vmem:[%s3 + $0x148] sm:$0xff]
  %v2185 = vld [vmem:[%s3 + $0x150] sm:$0xff]
  %v2186 = vld [vmem:[%s3 + $0x158] sm:$0xff]
  %v2187 = vld [vmem:[%s3 + $0x160] sm:$0xff]
  %v2188 = vld [vmem:[%s3 + $0x168] sm:$0xff]
  %v2189 = vld [vmem:[%s3 + $0x170] sm:$0xff]
  %v2190 = vld [vmem:[%s3 + $0x178] sm:$0xff]
  %v2191 = vld [vmem:[%s3 + $0x180] sm:$0xff]
  %v2192 = vld [vmem:[%s3 + $0x188] sm:$0xff]
  %v2193 = vld [vmem:[%s3 + $0x190] sm:$0xff]
  %v2194 = vld [vmem:[%s3 + $0x198] sm:$0xff]
  %v2195 = vld [vmem:[%s3 + $0x1a0] sm:$0xff]
  %v2196 = vld [vmem:[%s3 + $0x1a8] sm:$0xff]
  %v2197 = vld [vmem:[%s3 + $0x1b0] sm:$0xff]
  %v2198 = vld [vmem:[%s3 + $0x1b8] sm:$0xff]
  %v2199 = vld [vmem:[%s3 + $0x1c0] sm:$0xff]
  %v2200 = vld [vmem:[%s3 + $0x1c8] sm:$0xff]
  %v2201 = vld [vmem:[%s3 + $0x1d0] sm:$0xff]
  %v2202 = vld [vmem:[%s3 + $0x1d8] sm:$0xff]
  %v2203 = vld [vmem:[%s3 + $0x1e0] sm:$0xff]
  %v2204 = vld [vmem:[%s3 + $0x1e8] sm:$0xff]
  %v2205 = vld [vmem:[%s3 + $0x1f0] sm:$0xff]
  %v2206 = vld [vmem:[%s3 + $0x1f8] sm:$0xff]
  %v2207 = vld [vmem:[%s3 + $0x200] sm:$0xff]
  %v2208 = vld [vmem:[%s3 + $0x208] sm:$0xff]
  %v2209 = vld [vmem:[%s3 + $0x210] sm:$0xff]
  %v2210 = vld [vmem:[%s3 + $0x218] sm:$0xff]
  %v2211 = vld [vmem:[%s3 + $0x220] sm:$0xff]
  %v2212 = vld [vmem:[%s3 + $0x228] sm:$0xff]
  %v2213 = vld [vmem:[%s3 + $0x230] sm:$0xff]
  %v2214 = vld [vmem:[%s3 + $0x238] sm:$0xff]
  %v2215 = vld [vmem:[%s3 + $0x240] sm:$0xff]
  %v2216 = vld [vmem:[%s3 + $0x248] sm:$0xff]
  %v2217 = vld [vmem:[%s3 + $0x250] sm:$0xff]
  %v2218 = vld [vmem:[%s3 + $0x258] sm:$0xff]
  %v2219 = vld [vmem:[%s3 + $0x260] sm:$0xff]
  %v2220 = vld [vmem:[%s3 + $0x268] sm:$0xff]
  %v2221 = vld [vmem:[%s3 + $0x270] sm:$0xff]
  %v2222 = vld [vmem:[%s3 + $0x278] sm:$0xff]
  %v2223 = vld [vmem:[%s3 + $0x280] sm:$0xff]
  %v2224 = vld [vmem:[%s3 + $0x288] sm:$0xff]
  %v2225 = vld [vmem:[%s3 + $0x290] sm:$0xff]
  %v2226 = vld [vmem:[%s3 + $0x298] sm:$0xff]
  %v2227 = vld [vmem:[%s3 + $0x2a0] sm:$0xff]
  %v2228 = vld [vmem:[%s3 + $0x2a8] sm:$0xff]
  %v2229 = vld [vmem:[%s3 + $0x2b0] sm:$0xff]
  %v2230 = vld [vmem:[%s3 + $0x2b8] sm:$0xff]
  %v2231 = vld [vmem:[%s3 + $0x2c0] sm:$0xff]
  %v2232 = vld [vmem:[%s3 + $0x2c8] sm:$0xff]
  %v2233 = vld [vmem:[%s3 + $0x2d0] sm:$0xff]
  %v2234 = vld [vmem:[%s3 + $0x2d8] sm:$0xff]
  %v2235 = vld [vmem:[%s3 + $0x2e0] sm:$0xff]
  %v2236 = vld [vmem:[%s3 + $0x2e8] sm:$0xff]
  %v2237 = vld [vmem:[%s3 + $0x2f0] sm:$0xff]
  %v2238 = vld [vmem:[%s3 + $0x2f8] sm:$0xff]
  %v2239 = vld [vmem:[%s3 + $0x300] sm:$0xff]
  %v2240 = vld [vmem:[%s3 + $0x308] sm:$0xff]
  %v2241 = vld [vmem:[%s3 + $0x310] sm:$0xff]
  %v2242 = vld [vmem:[%s3 + $0x318] sm:$0xff]
  %v2243 = vld [vmem:[%s3 + $0x320] sm:$0xff]
  %v2244 = vld [vmem:[%s3 + $0x328] sm:$0xff]
  %v2245 = vld [vmem:[%s3 + $0x330] sm:$0xff]
  %v2246 = vld [vmem:[%s3 + $0x338] sm:$0xff]
  %v2247 = vld [vmem:[%s3 + $0x340] sm:$0xff]
  %v2248 = vld [vmem:[%s3 + $0x348] sm:$0xff]
  %v2249 = vld [vmem:[%s3 + $0x350] sm:$0xff]
  %v2250 = vld [vmem:[%s3 + $0x358] sm:$0xff]
  %v2251 = vld [vmem:[%s3 + $0x360] sm:$0xff]
  %v2252 = vld [vmem:[%s3 + $0x368] sm:$0xff]
  %v2253 = vld [vmem:[%s3 + $0x370] sm:$0xff]
  %v2254 = vld [vmem:[%s3 + $0x378] sm:$0xff]
  %v2255 = vld [vmem:[%s3 + $0x380] sm:$0xff]
  %v2256 = vld [vmem:[%s3 + $0x388] sm:$0xff]
  %v2257 = vld [vmem:[%s3 + $0x390] sm:$0xff]
  %v2258 = vld [vmem:[%s3 + $0x398] sm:$0xff]
  %v2259 = vld [vmem:[%s3 + $0x3a0] sm:$0xff]
  %v2260 = vld [vmem:[%s3 + $0x3a8] sm:$0xff]
  %v2261 = vld [vmem:[%s3 + $0x3b0] sm:$0xff]
  %v2262 = vld [vmem:[%s3 + $0x3b8] sm:$0xff]
  %v2263 = vld [vmem:[%s3 + $0x3c0] sm:$0xff]
  %v2264 = vld [vmem:[%s3 + $0x3c8] sm:$0xff]
  %v2265 = vld [vmem:[%s3 + $0x3d0] sm:$0xff]
  %v2266 = vld [vmem:[%s3 + $0x3d8] sm:$0xff]
  %v2267 = vld [vmem:[%s3 + $0x3e0] sm:$0xff]
  %v2268 = vld [vmem:[%s3 + $0x3e8] sm:$0xff]
  %v2269 = vld [vmem:[%s3 + $0x3f0] sm:$0xff]
  %v2270 = vld [vmem:[%s3 + $0x3f8] sm:$0xff]
  %v2271 = vld [vmem:[%s3 + $0x400] sm:$0xff]
  %v2272 = vld [vmem:[%s3 + $0x408] sm:$0xff]
  %v2273 = vld [vmem:[%s3 + $0x410] sm:$0xff]
  %v2274 = vld [vmem:[%s3 + $0x418] sm:$0xff]
  %v2275 = vld [vmem:[%s3 + $0x420] sm:$0xff]
  %v2276 = vld [vmem:[%s3 + $0x428] sm:$0xff]
  %v2277 = vld [vmem:[%s3 + $0x430] sm:$0xff]
  %v2278 = vld [vmem:[%s3 + $0x438] sm:$0xff]
  %v2279 = vld [vmem:[%s3 + $0x440] sm:$0xff]
  %v2280 = vld [vmem:[%s3 + $0x448] sm:$0xff]
  %v2281 = vld [vmem:[%s3 + $0x450] sm:$0xff]
  %v2282 = vld [vmem:[%s3 + $0x458] sm:$0xff]
  %v2283 = vld [vmem:[%s3 + $0x460] sm:$0xff]
  %v2284 = vld [vmem:[%s3 + $0x468] sm:$0xff]
  %v2285 = vld [vmem:[%s3 + $0x470] sm:$0xff]
  %v2286 = vld [vmem:[%s3 + $0x478] sm:$0xff]
  %v2287 = vld [vmem:[%s3 + $0x480] sm:$0xff]
  %v2288 = vld [vmem:[%s3 + $0x488] sm:$0xff]
  %v2289 = vld [vmem:[%s3 + $0x490] sm:$0xff]
  %v2290 = vld [vmem:[%s3 + $0x498] sm:$0xff]
  %v2291 = vld [vmem:[%s3 + $0x4a0] sm:$0xff]
  %v2292 = vld [vmem:[%s3 + $0x4a8] sm:$0xff]
  %v2293 = vld [vmem:[%s3 + $0x4b0] sm:$0xff]
  %v2294 = vld [vmem:[%s3 + $0x4b8] sm:$0xff]
  %v2295 = vld [vmem:[%s3 + $0x4c0] sm:$0xff]
  %v2296 = vld [vmem:[%s3 + $0x4c8] sm:$0xff]
  %v2297 = vld [vmem:[%s3 + $0x4d0] sm:$0xff]
  %v2298 = vld [vmem:[%s3 + $0x4d8] sm:$0xff]
  %v2299 = vld [vmem:[%s3 + $0x4e0] sm:$0xff]
  %v2300 = vld [vmem:[%s3 + $0x4e8] sm:$0xff]
  %v2301 = vld [vmem:[%s3 + $0x4f0] sm:$0xff]
  %v2302 = vld [vmem:[%s3 + $0x4f8] sm:$0xff]
  %v2303 = vld [vmem:[%s3 + $0x500] sm:$0xff]
  %v2304 = vld [vmem:[%s3 + $0x508] sm:$0xff]
  %v2305 = vld [vmem:[%s3 + $0x510] sm:$0xff]
  %v2306 = vld [vmem:[%s3 + $0x518] sm:$0xff]
  %v2307 = vld [vmem:[%s3 + $0x520] sm:$0xff]
  %v2308 = vld [vmem:[%s3 + $0x528] sm:$0xff]
  %v2309 = vld [vmem:[%s3 + $0x530] sm:$0xff]
  %v2310 = vld [vmem:[%s3 + $0x538] sm:$0xff]
  %v2311 = vld [vmem:[%s3 + $0x540] sm:$0xff]
  %v2312 = vld [vmem:[%s3 + $0x548] sm:$0xff]
  %v2313 = vld [vmem:[%s3 + $0x550] sm:$0xff]
  %v2314 = vld [vmem:[%s3 + $0x558] sm:$0xff]
  %v2315 = vld [vmem:[%s3 + $0x560] sm:$0xff]
  %v2316 = vld [vmem:[%s3 + $0x568] sm:$0xff]
  %v2317 = vld [vmem:[%s3 + $0x570] sm:$0xff]
  %v2318 = vld [vmem:[%s3 + $0x578] sm:$0xff]
  %v2319 = vld [vmem:[%s3 + $0x580] sm:$0xff]
  %v2320 = vld [vmem:[%s3 + $0x588] sm:$0xff]
  %v2321 = vld [vmem:[%s3 + $0x590] sm:$0xff]
  %v2322 = vld [vmem:[%s3 + $0x598] sm:$0xff]
  %v2323 = vld [vmem:[%s3 + $0x5a0] sm:$0xff]
  %v2324 = vld [vmem:[%s3 + $0x5a8] sm:$0xff]
  %v2325 = vld [vmem:[%s3 + $0x5b0] sm:$0xff]
  %v2326 = vld [vmem:[%s3 + $0x5b8] sm:$0xff]
  %v2327 = vld [vmem:[%s3 + $0x5c0] sm:$0xff]
  %v2328 = vld [vmem:[%s3 + $0x5c8] sm:$0xff]
  %v2329 = vld [vmem:[%s3 + $0x5d0] sm:$0xff]
  %v2330 = vld [vmem:[%s3 + $0x5d8] sm:$0xff]
  %v2331 = vld [vmem:[%s3 + $0x5e0] sm:$0xff]
  %v2332 = vld [vmem:[%s3 + $0x5e8] sm:$0xff]
  %v2333 = vld [vmem:[%s3 + $0x5f0] sm:$0xff]
  %v2334 = vld [vmem:[%s3 + $0x5f8] sm:$0xff]
  %2336 = vset.pattern.permute.xlu0 0
  %2337 = vperm.xlu0 %2336, %v1951
  %v2338 = vpop.permute.xlu0 %2337
  %2341 = vset.pattern.permute.xlu0 0
  %2342 = vperm.xlu0 %2341, %v1952
  %v2343 = vpop.permute.xlu0 %2342
  %2346 = vset.pattern.permute.xlu0 0
  %2347 = vperm.xlu0 %2346, %v1953
  %v2348 = vpop.permute.xlu0 %2347
  %2351 = vset.pattern.permute.xlu0 0
  %2352 = vperm.xlu0 %2351, %v1954
  %v2353 = vpop.permute.xlu0 %2352
  %2356 = vset.pattern.permute.xlu0 0
  %2357 = vperm.xlu0 %2356, %v1955
  %v2358 = vpop.permute.xlu0 %2357
  %2361 = vset.pattern.permute.xlu0 0
  %2362 = vperm.xlu0 %2361, %v1956
  %v2363 = vpop.permute.xlu0 %2362
  %2366 = vset.pattern.permute.xlu0 0
  %2367 = vperm.xlu0 %2366, %v1957
  %v2368 = vpop.permute.xlu0 %2367
  %2371 = vset.pattern.permute.xlu0 0
  %2372 = vperm.xlu0 %2371, %v1958
  %v2373 = vpop.permute.xlu0 %2372
  %2376 = vset.pattern.permute.xlu0 0
  %2377 = vperm.xlu0 %2376, %v1959
  %v2378 = vpop.permute.xlu0 %2377
  %2381 = vset.pattern.permute.xlu0 0
  %2382 = vperm.xlu0 %2381, %v1960
  %v2383 = vpop.permute.xlu0 %2382
  %2386 = vset.pattern.permute.xlu0 0
  %2387 = vperm.xlu0 %2386, %v1961
  %v2388 = vpop.permute.xlu0 %2387
  %2391 = vset.pattern.permute.xlu0 0
  %2392 = vperm.xlu0 %2391, %v1962
  %v2393 = vpop.permute.xlu0 %2392
  %2396 = vset.pattern.permute.xlu0 0
  %2397 = vperm.xlu0 %2396, %v1963
  %v2398 = vpop.permute.xlu0 %2397
  %2401 = vset.pattern.permute.xlu0 0
  %2402 = vperm.xlu0 %2401, %v1964
  %v2403 = vpop.permute.xlu0 %2402
  %2406 = vset.pattern.permute.xlu0 0
  %2407 = vperm.xlu0 %2406, %v1965
  %v2408 = vpop.permute.xlu0 %2407
  %2411 = vset.pattern.permute.xlu0 0
  %2412 = vperm.xlu0 %2411, %v1966
  %v2413 = vpop.permute.xlu0 %2412
  %2416 = vset.pattern.permute.xlu0 0
  %2417 = vperm.xlu0 %2416, %v1967
  %v2418 = vpop.permute.xlu0 %2417
  %2421 = vset.pattern.permute.xlu0 0
  %2422 = vperm.xlu0 %2421, %v1968
  %v2423 = vpop.permute.xlu0 %2422
  %2426 = vset.pattern.permute.xlu0 0
  %2427 = vperm.xlu0 %2426, %v1969
  %v2428 = vpop.permute.xlu0 %2427
  %2431 = vset.pattern.permute.xlu0 0
  %2432 = vperm.xlu0 %2431, %v1970
  %v2433 = vpop.permute.xlu0 %2432
  %2436 = vset.pattern.permute.xlu0 0
  %2437 = vperm.xlu0 %2436, %v1971
  %v2438 = vpop.permute.xlu0 %2437
  %2441 = vset.pattern.permute.xlu0 0
  %2442 = vperm.xlu0 %2441, %v1972
  %v2443 = vpop.permute.xlu0 %2442
  %2446 = vset.pattern.permute.xlu0 0
  %2447 = vperm.xlu0 %2446, %v1973
  %v2448 = vpop.permute.xlu0 %2447
  %2451 = vset.pattern.permute.xlu0 0
  %2452 = vperm.xlu0 %2451, %v1974
  %v2453 = vpop.permute.xlu0 %2452
  %2456 = vset.pattern.permute.xlu0 0
  %2457 = vperm.xlu0 %2456, %v1975
  %v2458 = vpop.permute.xlu0 %2457
  %2461 = vset.pattern.permute.xlu0 0
  %2462 = vperm.xlu0 %2461, %v1976
  %v2463 = vpop.permute.xlu0 %2462
  %2466 = vset.pattern.permute.xlu0 0
  %2467 = vperm.xlu0 %2466, %v1977
  %v2468 = vpop.permute.xlu0 %2467
  %2471 = vset.pattern.permute.xlu0 0
  %2472 = vperm.xlu0 %2471, %v1978
  %v2473 = vpop.permute.xlu0 %2472
  %2476 = vset.pattern.permute.xlu0 0
  %2477 = vperm.xlu0 %2476, %v1979
  %v2478 = vpop.permute.xlu0 %2477
  %2481 = vset.pattern.permute.xlu0 0
  %2482 = vperm.xlu0 %2481, %v1980
  %v2483 = vpop.permute.xlu0 %2482
  %2486 = vset.pattern.permute.xlu0 0
  %2487 = vperm.xlu0 %2486, %v1981
  %v2488 = vpop.permute.xlu0 %2487
  %2491 = vset.pattern.permute.xlu0 0
  %2492 = vperm.xlu0 %2491, %v1982
  %v2493 = vpop.permute.xlu0 %2492
  %2496 = vset.pattern.permute.xlu0 0
  %2497 = vperm.xlu0 %2496, %v1983
  %v2498 = vpop.permute.xlu0 %2497
  %2501 = vset.pattern.permute.xlu0 0
  %2502 = vperm.xlu0 %2501, %v1984
  %v2503 = vpop.permute.xlu0 %2502
  %2506 = vset.pattern.permute.xlu0 0
  %2507 = vperm.xlu0 %2506, %v1985
  %v2508 = vpop.permute.xlu0 %2507
  %2511 = vset.pattern.permute.xlu0 0
  %2512 = vperm.xlu0 %2511, %v1986
  %v2513 = vpop.permute.xlu0 %2512
  %2516 = vset.pattern.permute.xlu0 0
  %2517 = vperm.xlu0 %2516, %v1987
  %v2518 = vpop.permute.xlu0 %2517
  %2521 = vset.pattern.permute.xlu0 0
  %2522 = vperm.xlu0 %2521, %v1988
  %v2523 = vpop.permute.xlu0 %2522
  %2526 = vset.pattern.permute.xlu0 0
  %2527 = vperm.xlu0 %2526, %v1989
  %v2528 = vpop.permute.xlu0 %2527
  %2531 = vset.pattern.permute.xlu0 0
  %2532 = vperm.xlu0 %2531, %v1990
  %v2533 = vpop.permute.xlu0 %2532
  %2536 = vset.pattern.permute.xlu0 0
  %2537 = vperm.xlu0 %2536, %v1991
  %v2538 = vpop.permute.xlu0 %2537
  %2541 = vset.pattern.permute.xlu0 0
  %2542 = vperm.xlu0 %2541, %v1992
  %v2543 = vpop.permute.xlu0 %2542
  %2546 = vset.pattern.permute.xlu0 0
  %2547 = vperm.xlu0 %2546, %v1993
  %v2548 = vpop.permute.xlu0 %2547
  %2551 = vset.pattern.permute.xlu0 0
  %2552 = vperm.xlu0 %2551, %v1994
  %v2553 = vpop.permute.xlu0 %2552
  %2556 = vset.pattern.permute.xlu0 0
  %2557 = vperm.xlu0 %2556, %v1995
  %v2558 = vpop.permute.xlu0 %2557
  %2561 = vset.pattern.permute.xlu0 0
  %2562 = vperm.xlu0 %2561, %v1996
  %v2563 = vpop.permute.xlu0 %2562
  %2566 = vset.pattern.permute.xlu0 0
  %2567 = vperm.xlu0 %2566, %v1997
  %v2568 = vpop.permute.xlu0 %2567
  %2571 = vset.pattern.permute.xlu0 0
  %2572 = vperm.xlu0 %2571, %v1998
  %v2573 = vpop.permute.xlu0 %2572
  %2576 = vset.pattern.permute.xlu0 0
  %2577 = vperm.xlu0 %2576, %v1999
  %v2578 = vpop.permute.xlu0 %2577
  %2581 = vset.pattern.permute.xlu0 0
  %2582 = vperm.xlu0 %2581, %v2000
  %v2583 = vpop.permute.xlu0 %2582
  %2586 = vset.pattern.permute.xlu0 0
  %2587 = vperm.xlu0 %2586, %v2001
  %v2588 = vpop.permute.xlu0 %2587
  %2591 = vset.pattern.permute.xlu0 0
  %2592 = vperm.xlu0 %2591, %v2002
  %v2593 = vpop.permute.xlu0 %2592
  %2596 = vset.pattern.permute.xlu0 0
  %2597 = vperm.xlu0 %2596, %v2003
  %v2598 = vpop.permute.xlu0 %2597
  %2601 = vset.pattern.permute.xlu0 0
  %2602 = vperm.xlu0 %2601, %v2004
  %v2603 = vpop.permute.xlu0 %2602
  %2606 = vset.pattern.permute.xlu0 0
  %2607 = vperm.xlu0 %2606, %v2005
  %v2608 = vpop.permute.xlu0 %2607
  %2611 = vset.pattern.permute.xlu0 0
  %2612 = vperm.xlu0 %2611, %v2006
  %v2613 = vpop.permute.xlu0 %2612
  %2616 = vset.pattern.permute.xlu0 0
  %2617 = vperm.xlu0 %2616, %v2007
  %v2618 = vpop.permute.xlu0 %2617
  %2621 = vset.pattern.permute.xlu0 0
  %2622 = vperm.xlu0 %2621, %v2008
  %v2623 = vpop.permute.xlu0 %2622
  %2626 = vset.pattern.permute.xlu0 0
  %2627 = vperm.xlu0 %2626, %v2009
  %v2628 = vpop.permute.xlu0 %2627
  %2631 = vset.pattern.permute.xlu0 0
  %2632 = vperm.xlu0 %2631, %v2010
  %v2633 = vpop.permute.xlu0 %2632
  %2636 = vset.pattern.permute.xlu0 0
  %2637 = vperm.xlu0 %2636, %v2011
  %v2638 = vpop.permute.xlu0 %2637
  %2641 = vset.pattern.permute.xlu0 0
  %2642 = vperm.xlu0 %2641, %v2012
  %v2643 = vpop.permute.xlu0 %2642
  %2646 = vset.pattern.permute.xlu0 0
  %2647 = vperm.xlu0 %2646, %v2013
  %v2648 = vpop.permute.xlu0 %2647
  %2651 = vset.pattern.permute.xlu0 0
  %2652 = vperm.xlu0 %2651, %v2014
  %v2653 = vpop.permute.xlu0 %2652
  %2656 = vset.pattern.permute.xlu0 0
  %2657 = vperm.xlu0 %2656, %v2015
  %v2658 = vpop.permute.xlu0 %2657
  %2661 = vset.pattern.permute.xlu0 0
  %2662 = vperm.xlu0 %2661, %v2016
  %v2663 = vpop.permute.xlu0 %2662
  %2666 = vset.pattern.permute.xlu0 0
  %2667 = vperm.xlu0 %2666, %v2017
  %v2668 = vpop.permute.xlu0 %2667
  %2671 = vset.pattern.permute.xlu0 0
  %2672 = vperm.xlu0 %2671, %v2018
  %v2673 = vpop.permute.xlu0 %2672
  %2676 = vset.pattern.permute.xlu0 0
  %2677 = vperm.xlu0 %2676, %v2019
  %v2678 = vpop.permute.xlu0 %2677
  %2681 = vset.pattern.permute.xlu0 0
  %2682 = vperm.xlu0 %2681, %v2020
  %v2683 = vpop.permute.xlu0 %2682
  %2686 = vset.pattern.permute.xlu0 0
  %2687 = vperm.xlu0 %2686, %v2021
  %v2688 = vpop.permute.xlu0 %2687
  %2691 = vset.pattern.permute.xlu0 0
  %2692 = vperm.xlu0 %2691, %v2022
  %v2693 = vpop.permute.xlu0 %2692
  %2696 = vset.pattern.permute.xlu0 0
  %2697 = vperm.xlu0 %2696, %v2023
  %v2698 = vpop.permute.xlu0 %2697
  %2701 = vset.pattern.permute.xlu0 0
  %2702 = vperm.xlu0 %2701, %v2024
  %v2703 = vpop.permute.xlu0 %2702
  %2706 = vset.pattern.permute.xlu0 0
  %2707 = vperm.xlu0 %2706, %v2025
  %v2708 = vpop.permute.xlu0 %2707
  %2711 = vset.pattern.permute.xlu0 0
  %2712 = vperm.xlu0 %2711, %v2026
  %v2713 = vpop.permute.xlu0 %2712
  %2716 = vset.pattern.permute.xlu0 0
  %2717 = vperm.xlu0 %2716, %v2027
  %v2718 = vpop.permute.xlu0 %2717
  %2721 = vset.pattern.permute.xlu0 0
  %2722 = vperm.xlu0 %2721, %v2028
  %v2723 = vpop.permute.xlu0 %2722
  %2726 = vset.pattern.permute.xlu0 0
  %2727 = vperm.xlu0 %2726, %v2029
  %v2728 = vpop.permute.xlu0 %2727
  %2731 = vset.pattern.permute.xlu0 0
  %2732 = vperm.xlu0 %2731, %v2030
  %v2733 = vpop.permute.xlu0 %2732
  %2736 = vset.pattern.permute.xlu0 0
  %2737 = vperm.xlu0 %2736, %v2031
  %v2738 = vpop.permute.xlu0 %2737
  %2741 = vset.pattern.permute.xlu0 0
  %2742 = vperm.xlu0 %2741, %v2032
  %v2743 = vpop.permute.xlu0 %2742
  %2746 = vset.pattern.permute.xlu0 0
  %2747 = vperm.xlu0 %2746, %v2033
  %v2748 = vpop.permute.xlu0 %2747
  %2751 = vset.pattern.permute.xlu0 0
  %2752 = vperm.xlu0 %2751, %v2034
  %v2753 = vpop.permute.xlu0 %2752
  %2756 = vset.pattern.permute.xlu0 0
  %2757 = vperm.xlu0 %2756, %v2035
  %v2758 = vpop.permute.xlu0 %2757
  %2761 = vset.pattern.permute.xlu0 0
  %2762 = vperm.xlu0 %2761, %v2036
  %v2763 = vpop.permute.xlu0 %2762
  %2766 = vset.pattern.permute.xlu0 0
  %2767 = vperm.xlu0 %2766, %v2037
  %v2768 = vpop.permute.xlu0 %2767
  %2771 = vset.pattern.permute.xlu0 0
  %2772 = vperm.xlu0 %2771, %v2038
  %v2773 = vpop.permute.xlu0 %2772
  %2776 = vset.pattern.permute.xlu0 0
  %2777 = vperm.xlu0 %2776, %v2039
  %v2778 = vpop.permute.xlu0 %2777
  %2781 = vset.pattern.permute.xlu0 0
  %2782 = vperm.xlu0 %2781, %v2040
  %v2783 = vpop.permute.xlu0 %2782
  %2786 = vset.pattern.permute.xlu0 0
  %2787 = vperm.xlu0 %2786, %v2041
  %v2788 = vpop.permute.xlu0 %2787
  %2791 = vset.pattern.permute.xlu0 0
  %2792 = vperm.xlu0 %2791, %v2042
  %v2793 = vpop.permute.xlu0 %2792
  %2796 = vset.pattern.permute.xlu0 0
  %2797 = vperm.xlu0 %2796, %v2043
  %v2798 = vpop.permute.xlu0 %2797
  %2801 = vset.pattern.permute.xlu0 0
  %2802 = vperm.xlu0 %2801, %v2044
  %v2803 = vpop.permute.xlu0 %2802
  %2806 = vset.pattern.permute.xlu0 0
  %2807 = vperm.xlu0 %2806, %v2045
  %v2808 = vpop.permute.xlu0 %2807
  %2811 = vset.pattern.permute.xlu0 0
  %2812 = vperm.xlu0 %2811, %v2046
  %v2813 = vpop.permute.xlu0 %2812
  %2816 = vset.pattern.permute.xlu0 0
  %2817 = vperm.xlu0 %2816, %v2047
  %v2818 = vpop.permute.xlu0 %2817
  %2821 = vset.pattern.permute.xlu0 0
  %2822 = vperm.xlu0 %2821, %v2048
  %v2823 = vpop.permute.xlu0 %2822
  %2826 = vset.pattern.permute.xlu0 0
  %2827 = vperm.xlu0 %2826, %v2049
  %v2828 = vpop.permute.xlu0 %2827
  %2831 = vset.pattern.permute.xlu0 0
  %2832 = vperm.xlu0 %2831, %v2050
  %v2833 = vpop.permute.xlu0 %2832
  %2836 = vset.pattern.permute.xlu0 0
  %2837 = vperm.xlu0 %2836, %v2051
  %v2838 = vpop.permute.xlu0 %2837
  %2841 = vset.pattern.permute.xlu0 0
  %2842 = vperm.xlu0 %2841, %v2052
  %v2843 = vpop.permute.xlu0 %2842
  %2846 = vset.pattern.permute.xlu0 0
  %2847 = vperm.xlu0 %2846, %v2053
  %v2848 = vpop.permute.xlu0 %2847
  %2851 = vset.pattern.permute.xlu0 0
  %2852 = vperm.xlu0 %2851, %v2054
  %v2853 = vpop.permute.xlu0 %2852
  %2856 = vset.pattern.permute.xlu0 0
  %2857 = vperm.xlu0 %2856, %v2055
  %v2858 = vpop.permute.xlu0 %2857
  %2861 = vset.pattern.permute.xlu0 0
  %2862 = vperm.xlu0 %2861, %v2056
  %v2863 = vpop.permute.xlu0 %2862
  %2866 = vset.pattern.permute.xlu0 0
  %2867 = vperm.xlu0 %2866, %v2057
  %v2868 = vpop.permute.xlu0 %2867
  %2871 = vset.pattern.permute.xlu0 0
  %2872 = vperm.xlu0 %2871, %v2058
  %v2873 = vpop.permute.xlu0 %2872
  %2876 = vset.pattern.permute.xlu0 0
  %2877 = vperm.xlu0 %2876, %v2059
  %v2878 = vpop.permute.xlu0 %2877
  %2881 = vset.pattern.permute.xlu0 0
  %2882 = vperm.xlu0 %2881, %v2060
  %v2883 = vpop.permute.xlu0 %2882
  %2886 = vset.pattern.permute.xlu0 0
  %2887 = vperm.xlu0 %2886, %v2061
  %v2888 = vpop.permute.xlu0 %2887
  %2891 = vset.pattern.permute.xlu0 0
  %2892 = vperm.xlu0 %2891, %v2062
  %v2893 = vpop.permute.xlu0 %2892
  %2896 = vset.pattern.permute.xlu0 0
  %2897 = vperm.xlu0 %2896, %v2063
  %v2898 = vpop.permute.xlu0 %2897
  %2901 = vset.pattern.permute.xlu0 0
  %2902 = vperm.xlu0 %2901, %v2064
  %v2903 = vpop.permute.xlu0 %2902
  %2906 = vset.pattern.permute.xlu0 0
  %2907 = vperm.xlu0 %2906, %v2065
  %v2908 = vpop.permute.xlu0 %2907
  %2911 = vset.pattern.permute.xlu0 0
  %2912 = vperm.xlu0 %2911, %v2066
  %v2913 = vpop.permute.xlu0 %2912
  %2916 = vset.pattern.permute.xlu0 0
  %2917 = vperm.xlu0 %2916, %v2067
  %v2918 = vpop.permute.xlu0 %2917
  %2921 = vset.pattern.permute.xlu0 0
  %2922 = vperm.xlu0 %2921, %v2068
  %v2923 = vpop.permute.xlu0 %2922
  %2926 = vset.pattern.permute.xlu0 0
  %2927 = vperm.xlu0 %2926, %v2069
  %v2928 = vpop.permute.xlu0 %2927
  %2931 = vset.pattern.permute.xlu0 0
  %2932 = vperm.xlu0 %2931, %v2070
  %v2933 = vpop.permute.xlu0 %2932
  %2936 = vset.pattern.permute.xlu0 0
  %2937 = vperm.xlu0 %2936, %v2071
  %v2938 = vpop.permute.xlu0 %2937
  %2941 = vset.pattern.permute.xlu0 0
  %2942 = vperm.xlu0 %2941, %v2072
  %v2943 = vpop.permute.xlu0 %2942
  %2946 = vset.pattern.permute.xlu0 0
  %2947 = vperm.xlu0 %2946, %v2073
  %v2948 = vpop.permute.xlu0 %2947
  %2951 = vset.pattern.permute.xlu0 0
  %2952 = vperm.xlu0 %2951, %v2074
  %v2953 = vpop.permute.xlu0 %2952
  %2956 = vset.pattern.permute.xlu0 0
  %2957 = vperm.xlu0 %2956, %v2075
  %v2958 = vpop.permute.xlu0 %2957
  %2961 = vset.pattern.permute.xlu0 0
  %2962 = vperm.xlu0 %2961, %v2076
  %v2963 = vpop.permute.xlu0 %2962
  %2966 = vset.pattern.permute.xlu0 0
  %2967 = vperm.xlu0 %2966, %v2077
  %v2968 = vpop.permute.xlu0 %2967
  %2971 = vset.pattern.permute.xlu0 0
  %2972 = vperm.xlu0 %2971, %v2078
  %v2973 = vpop.permute.xlu0 %2972
  %2976 = vset.pattern.permute.xlu0 0
  %2977 = vperm.xlu0 %2976, %v2079
  %v2978 = vpop.permute.xlu0 %2977
  %2981 = vset.pattern.permute.xlu0 0
  %2982 = vperm.xlu0 %2981, %v2080
  %v2983 = vpop.permute.xlu0 %2982
  %2986 = vset.pattern.permute.xlu0 0
  %2987 = vperm.xlu0 %2986, %v2081
  %v2988 = vpop.permute.xlu0 %2987
  %2991 = vset.pattern.permute.xlu0 0
  %2992 = vperm.xlu0 %2991, %v2082
  %v2993 = vpop.permute.xlu0 %2992
  %2996 = vset.pattern.permute.xlu0 0
  %2997 = vperm.xlu0 %2996, %v2083
  %v2998 = vpop.permute.xlu0 %2997
  %3001 = vset.pattern.permute.xlu0 0
  %3002 = vperm.xlu0 %3001, %v2084
  %v3003 = vpop.permute.xlu0 %3002
  %3006 = vset.pattern.permute.xlu0 0
  %3007 = vperm.xlu0 %3006, %v2085
  %v3008 = vpop.permute.xlu0 %3007
  %3011 = vset.pattern.permute.xlu0 0
  %3012 = vperm.xlu0 %3011, %v2086
  %v3013 = vpop.permute.xlu0 %3012
  %3016 = vset.pattern.permute.xlu0 0
  %3017 = vperm.xlu0 %3016, %v2087
  %v3018 = vpop.permute.xlu0 %3017
  %3021 = vset.pattern.permute.xlu0 0
  %3022 = vperm.xlu0 %3021, %v2088
  %v3023 = vpop.permute.xlu0 %3022
  %3026 = vset.pattern.permute.xlu0 0
  %3027 = vperm.xlu0 %3026, %v2089
  %v3028 = vpop.permute.xlu0 %3027
  %3031 = vset.pattern.permute.xlu0 0
  %3032 = vperm.xlu0 %3031, %v2090
  %v3033 = vpop.permute.xlu0 %3032
  %3036 = vset.pattern.permute.xlu0 0
  %3037 = vperm.xlu0 %3036, %v2091
  %v3038 = vpop.permute.xlu0 %3037
  %3041 = vset.pattern.permute.xlu0 0
  %3042 = vperm.xlu0 %3041, %v2092
  %v3043 = vpop.permute.xlu0 %3042
  %3046 = vset.pattern.permute.xlu0 0
  %3047 = vperm.xlu0 %3046, %v2093
  %v3048 = vpop.permute.xlu0 %3047
  %3051 = vset.pattern.permute.xlu0 0
  %3052 = vperm.xlu0 %3051, %v2094
  %v3053 = vpop.permute.xlu0 %3052
  %3056 = vset.pattern.permute.xlu0 0
  %3057 = vperm.xlu0 %3056, %v2095
  %v3058 = vpop.permute.xlu0 %3057
  %3061 = vset.pattern.permute.xlu0 0
  %3062 = vperm.xlu0 %3061, %v2096
  %v3063 = vpop.permute.xlu0 %3062
  %3066 = vset.pattern.permute.xlu0 0
  %3067 = vperm.xlu0 %3066, %v2097
  %v3068 = vpop.permute.xlu0 %3067
  %3071 = vset.pattern.permute.xlu0 0
  %3072 = vperm.xlu0 %3071, %v2098
  %v3073 = vpop.permute.xlu0 %3072
  %3076 = vset.pattern.permute.xlu0 0
  %3077 = vperm.xlu0 %3076, %v2099
  %v3078 = vpop.permute.xlu0 %3077
  %3081 = vset.pattern.permute.xlu0 0
  %3082 = vperm.xlu0 %3081, %v2100
  %v3083 = vpop.permute.xlu0 %3082
  %3086 = vset.pattern.permute.xlu0 0
  %3087 = vperm.xlu0 %3086, %v2101
  %v3088 = vpop.permute.xlu0 %3087
  %3091 = vset.pattern.permute.xlu0 0
  %3092 = vperm.xlu0 %3091, %v2102
  %v3093 = vpop.permute.xlu0 %3092
  %3096 = vset.pattern.permute.xlu0 0
  %3097 = vperm.xlu0 %3096, %v2103
  %v3098 = vpop.permute.xlu0 %3097
  %3101 = vset.pattern.permute.xlu0 0
  %3102 = vperm.xlu0 %3101, %v2104
  %v3103 = vpop.permute.xlu0 %3102
  %3106 = vset.pattern.permute.xlu0 0
  %3107 = vperm.xlu0 %3106, %v2105
  %v3108 = vpop.permute.xlu0 %3107
  %3111 = vset.pattern.permute.xlu0 0
  %3112 = vperm.xlu0 %3111, %v2106
  %v3113 = vpop.permute.xlu0 %3112
  %3116 = vset.pattern.permute.xlu0 0
  %3117 = vperm.xlu0 %3116, %v2107
  %v3118 = vpop.permute.xlu0 %3117
  %3121 = vset.pattern.permute.xlu0 0
  %3122 = vperm.xlu0 %3121, %v2108
  %v3123 = vpop.permute.xlu0 %3122
  %3126 = vset.pattern.permute.xlu0 0
  %3127 = vperm.xlu0 %3126, %v2109
  %v3128 = vpop.permute.xlu0 %3127
  %3131 = vset.pattern.permute.xlu0 0
  %3132 = vperm.xlu0 %3131, %v2110
  %v3133 = vpop.permute.xlu0 %3132
  %3136 = vset.pattern.permute.xlu0 0
  %3137 = vperm.xlu0 %3136, %v2111
  %v3138 = vpop.permute.xlu0 %3137
  %3141 = vset.pattern.permute.xlu0 0
  %3142 = vperm.xlu0 %3141, %v2112
  %v3143 = vpop.permute.xlu0 %3142
  %3146 = vset.pattern.permute.xlu0 0
  %3147 = vperm.xlu0 %3146, %v2113
  %v3148 = vpop.permute.xlu0 %3147
  %3151 = vset.pattern.permute.xlu0 0
  %3152 = vperm.xlu0 %3151, %v2114
  %v3153 = vpop.permute.xlu0 %3152
  %3156 = vset.pattern.permute.xlu0 0
  %3157 = vperm.xlu0 %3156, %v2115
  %v3158 = vpop.permute.xlu0 %3157
  %3161 = vset.pattern.permute.xlu0 0
  %3162 = vperm.xlu0 %3161, %v2116
  %v3163 = vpop.permute.xlu0 %3162
  %3166 = vset.pattern.permute.xlu0 0
  %3167 = vperm.xlu0 %3166, %v2117
  %v3168 = vpop.permute.xlu0 %3167
  %3171 = vset.pattern.permute.xlu0 0
  %3172 = vperm.xlu0 %3171, %v2118
  %v3173 = vpop.permute.xlu0 %3172
  %3176 = vset.pattern.permute.xlu0 0
  %3177 = vperm.xlu0 %3176, %v2119
  %v3178 = vpop.permute.xlu0 %3177
  %3181 = vset.pattern.permute.xlu0 0
  %3182 = vperm.xlu0 %3181, %v2120
  %v3183 = vpop.permute.xlu0 %3182
  %3186 = vset.pattern.permute.xlu0 0
  %3187 = vperm.xlu0 %3186, %v2121
  %v3188 = vpop.permute.xlu0 %3187
  %3191 = vset.pattern.permute.xlu0 0
  %3192 = vperm.xlu0 %3191, %v2122
  %v3193 = vpop.permute.xlu0 %3192
  %3196 = vset.pattern.permute.xlu0 0
  %3197 = vperm.xlu0 %3196, %v2123
  %v3198 = vpop.permute.xlu0 %3197
  %3201 = vset.pattern.permute.xlu0 0
  %3202 = vperm.xlu0 %3201, %v2124
  %v3203 = vpop.permute.xlu0 %3202
  %3206 = vset.pattern.permute.xlu0 0
  %3207 = vperm.xlu0 %3206, %v2125
  %v3208 = vpop.permute.xlu0 %3207
  %3211 = vset.pattern.permute.xlu0 0
  %3212 = vperm.xlu0 %3211, %v2126
  %v3213 = vpop.permute.xlu0 %3212
  %3216 = vset.pattern.permute.xlu0 0
  %3217 = vperm.xlu0 %3216, %v2127
  %v3218 = vpop.permute.xlu0 %3217
  %3221 = vset.pattern.permute.xlu0 0
  %3222 = vperm.xlu0 %3221, %v2128
  %v3223 = vpop.permute.xlu0 %3222
  %3226 = vset.pattern.permute.xlu0 0
  %3227 = vperm.xlu0 %3226, %v2129
  %v3228 = vpop.permute.xlu0 %3227
  %3231 = vset.pattern.permute.xlu0 0
  %3232 = vperm.xlu0 %3231, %v2130
  %v3233 = vpop.permute.xlu0 %3232
  %3236 = vset.pattern.permute.xlu0 0
  %3237 = vperm.xlu0 %3236, %v2131
  %v3238 = vpop.permute.xlu0 %3237
  %3241 = vset.pattern.permute.xlu0 0
  %3242 = vperm.xlu0 %3241, %v2132
  %v3243 = vpop.permute.xlu0 %3242
  %3246 = vset.pattern.permute.xlu0 0
  %3247 = vperm.xlu0 %3246, %v2133
  %v3248 = vpop.permute.xlu0 %3247
  %3251 = vset.pattern.permute.xlu0 0
  %3252 = vperm.xlu0 %3251, %v2134
  %v3253 = vpop.permute.xlu0 %3252
  %3256 = vset.pattern.permute.xlu0 0
  %3257 = vperm.xlu0 %3256, %v2135
  %v3258 = vpop.permute.xlu0 %3257
  %3261 = vset.pattern.permute.xlu0 0
  %3262 = vperm.xlu0 %3261, %v2136
  %v3263 = vpop.permute.xlu0 %3262
  %3266 = vset.pattern.permute.xlu0 0
  %3267 = vperm.xlu0 %3266, %v2137
  %v3268 = vpop.permute.xlu0 %3267
  %3271 = vset.pattern.permute.xlu0 0
  %3272 = vperm.xlu0 %3271, %v2138
  %v3273 = vpop.permute.xlu0 %3272
  %3276 = vset.pattern.permute.xlu0 0
  %3277 = vperm.xlu0 %3276, %v2139
  %v3278 = vpop.permute.xlu0 %3277
  %3281 = vset.pattern.permute.xlu0 0
  %3282 = vperm.xlu0 %3281, %v2140
  %v3283 = vpop.permute.xlu0 %3282
  %3286 = vset.pattern.permute.xlu0 0
  %3287 = vperm.xlu0 %3286, %v2141
  %v3288 = vpop.permute.xlu0 %3287
  %3291 = vset.pattern.permute.xlu0 0
  %3292 = vperm.xlu0 %3291, %v2142
  %v3293 = vpop.permute.xlu0 %3292
  %v3295 = vmul.f32 %v2143, %v2338
  %v3296 = vmul.f32 %v2144, %v2343
  %v3297 = vmul.f32 %v2145, %v2348
  %v3298 = vmul.f32 %v2146, %v2353
  %v3299 = vmul.f32 %v2147, %v2358
  %v3300 = vmul.f32 %v2148, %v2363
  %v3301 = vmul.f32 %v2149, %v2368
  %v3302 = vmul.f32 %v2150, %v2373
  %v3303 = vmul.f32 %v2151, %v2378
  %v3304 = vmul.f32 %v2152, %v2383
  %v3305 = vmul.f32 %v2153, %v2388
  %v3306 = vmul.f32 %v2154, %v2393
  %v3307 = vmul.f32 %v2155, %v2398
  %v3308 = vmul.f32 %v2156, %v2403
  %v3309 = vmul.f32 %v2157, %v2408
  %v3310 = vmul.f32 %v2158, %v2413
  %v3311 = vmul.f32 %v2159, %v2418
  %v3312 = vmul.f32 %v2160, %v2423
  %v3313 = vmul.f32 %v2161, %v2428
  %v3314 = vmul.f32 %v2162, %v2433
  %v3315 = vmul.f32 %v2163, %v2438
  %v3316 = vmul.f32 %v2164, %v2443
  %v3317 = vmul.f32 %v2165, %v2448
  %v3318 = vmul.f32 %v2166, %v2453
  %v3319 = vmul.f32 %v2167, %v2458
  %v3320 = vmul.f32 %v2168, %v2463
  %v3321 = vmul.f32 %v2169, %v2468
  %v3322 = vmul.f32 %v2170, %v2473
  %v3323 = vmul.f32 %v2171, %v2478
  %v3324 = vmul.f32 %v2172, %v2483
  %v3325 = vmul.f32 %v2173, %v2488
  %v3326 = vmul.f32 %v2174, %v2493
  %v3327 = vmul.f32 %v2175, %v2498
  %v3328 = vmul.f32 %v2176, %v2503
  %v3329 = vmul.f32 %v2177, %v2508
  %v3330 = vmul.f32 %v2178, %v2513
  %v3331 = vmul.f32 %v2179, %v2518
  %v3332 = vmul.f32 %v2180, %v2523
  %v3333 = vmul.f32 %v2181, %v2528
  %v3334 = vmul.f32 %v2182, %v2533
  %v3335 = vmul.f32 %v2183, %v2538
  %v3336 = vmul.f32 %v2184, %v2543
  %v3337 = vmul.f32 %v2185, %v2548
  %v3338 = vmul.f32 %v2186, %v2553
  %v3339 = vmul.f32 %v2187, %v2558
  %v3340 = vmul.f32 %v2188, %v2563
  %v3341 = vmul.f32 %v2189, %v2568
  %v3342 = vmul.f32 %v2190, %v2573
  %v3343 = vmul.f32 %v2191, %v2578
  %v3344 = vmul.f32 %v2192, %v2583
  %v3345 = vmul.f32 %v2193, %v2588
  %v3346 = vmul.f32 %v2194, %v2593
  %v3347 = vmul.f32 %v2195, %v2598
  %v3348 = vmul.f32 %v2196, %v2603
  %v3349 = vmul.f32 %v2197, %v2608
  %v3350 = vmul.f32 %v2198, %v2613
  %v3351 = vmul.f32 %v2199, %v2618
  %v3352 = vmul.f32 %v2200, %v2623
  %v3353 = vmul.f32 %v2201, %v2628
  %v3354 = vmul.f32 %v2202, %v2633
  %v3355 = vmul.f32 %v2203, %v2638
  %v3356 = vmul.f32 %v2204, %v2643
  %v3357 = vmul.f32 %v2205, %v2648
  %v3358 = vmul.f32 %v2206, %v2653
  %v3359 = vmul.f32 %v2207, %v2658
  %v3360 = vmul.f32 %v2208, %v2663
  %v3361 = vmul.f32 %v2209, %v2668
  %v3362 = vmul.f32 %v2210, %v2673
  %v3363 = vmul.f32 %v2211, %v2678
  %v3364 = vmul.f32 %v2212, %v2683
  %v3365 = vmul.f32 %v2213, %v2688
  %v3366 = vmul.f32 %v2214, %v2693
  %v3367 = vmul.f32 %v2215, %v2698
  %v3368 = vmul.f32 %v2216, %v2703
  %v3369 = vmul.f32 %v2217, %v2708
  %v3370 = vmul.f32 %v2218, %v2713
  %v3371 = vmul.f32 %v2219, %v2718
  %v3372 = vmul.f32 %v2220, %v2723
  %v3373 = vmul.f32 %v2221, %v2728
  %v3374 = vmul.f32 %v2222, %v2733
  %v3375 = vmul.f32 %v2223, %v2738
  %v3376 = vmul.f32 %v2224, %v2743
  %v3377 = vmul.f32 %v2225, %v2748
  %v3378 = vmul.f32 %v2226, %v2753
  %v3379 = vmul.f32 %v2227, %v2758
  %v3380 = vmul.f32 %v2228, %v2763
  %v3381 = vmul.f32 %v2229, %v2768
  %v3382 = vmul.f32 %v2230, %v2773
  %v3383 = vmul.f32 %v2231, %v2778
  %v3384 = vmul.f32 %v2232, %v2783
  %v3385 = vmul.f32 %v2233, %v2788
  %v3386 = vmul.f32 %v2234, %v2793
  %v3387 = vmul.f32 %v2235, %v2798
  %v3388 = vmul.f32 %v2236, %v2803
  %v3389 = vmul.f32 %v2237, %v2808
  %v3390 = vmul.f32 %v2238, %v2813
  %v3391 = vmul.f32 %v2239, %v2818
  %v3392 = vmul.f32 %v2240, %v2823
  %v3393 = vmul.f32 %v2241, %v2828
  %v3394 = vmul.f32 %v2242, %v2833
  %v3395 = vmul.f32 %v2243, %v2838
  %v3396 = vmul.f32 %v2244, %v2843
  %v3397 = vmul.f32 %v2245, %v2848
  %v3398 = vmul.f32 %v2246, %v2853
  %v3399 = vmul.f32 %v2247, %v2858
  %v3400 = vmul.f32 %v2248, %v2863
  %v3401 = vmul.f32 %v2249, %v2868
  %v3402 = vmul.f32 %v2250, %v2873
  %v3403 = vmul.f32 %v2251, %v2878
  %v3404 = vmul.f32 %v2252, %v2883
  %v3405 = vmul.f32 %v2253, %v2888
  %v3406 = vmul.f32 %v2254, %v2893
  %v3407 = vmul.f32 %v2255, %v2898
  %v3408 = vmul.f32 %v2256, %v2903
  %v3409 = vmul.f32 %v2257, %v2908
  %v3410 = vmul.f32 %v2258, %v2913
  %v3411 = vmul.f32 %v2259, %v2918
  %v3412 = vmul.f32 %v2260, %v2923
  %v3413 = vmul.f32 %v2261, %v2928
  %v3414 = vmul.f32 %v2262, %v2933
  %v3415 = vmul.f32 %v2263, %v2938
  %v3416 = vmul.f32 %v2264, %v2943
  %v3417 = vmul.f32 %v2265, %v2948
  %v3418 = vmul.f32 %v2266, %v2953
  %v3419 = vmul.f32 %v2267, %v2958
  %v3420 = vmul.f32 %v2268, %v2963
  %v3421 = vmul.f32 %v2269, %v2968
  %v3422 = vmul.f32 %v2270, %v2973
  %v3423 = vmul.f32 %v2271, %v2978
  %v3424 = vmul.f32 %v2272, %v2983
  %v3425 = vmul.f32 %v2273, %v2988
  %v3426 = vmul.f32 %v2274, %v2993
  %v3427 = vmul.f32 %v2275, %v2998
  %v3428 = vmul.f32 %v2276, %v3003
  %v3429 = vmul.f32 %v2277, %v3008
  %v3430 = vmul.f32 %v2278, %v3013
  %v3431 = vmul.f32 %v2279, %v3018
  %v3432 = vmul.f32 %v2280, %v3023
  %v3433 = vmul.f32 %v2281, %v3028
  %v3434 = vmul.f32 %v2282, %v3033
  %v3435 = vmul.f32 %v2283, %v3038
  %v3436 = vmul.f32 %v2284, %v3043
  %v3437 = vmul.f32 %v2285, %v3048
  %v3438 = vmul.f32 %v2286, %v3053
  %v3439 = vmul.f32 %v2287, %v3058
  %v3440 = vmul.f32 %v2288, %v3063
  %v3441 = vmul.f32 %v2289, %v3068
  %v3442 = vmul.f32 %v2290, %v3073
  %v3443 = vmul.f32 %v2291, %v3078
  %v3444 = vmul.f32 %v2292, %v3083
  %v3445 = vmul.f32 %v2293, %v3088
  %v3446 = vmul.f32 %v2294, %v3093
  %v3447 = vmul.f32 %v2295, %v3098
  %v3448 = vmul.f32 %v2296, %v3103
  %v3449 = vmul.f32 %v2297, %v3108
  %v3450 = vmul.f32 %v2298, %v3113
  %v3451 = vmul.f32 %v2299, %v3118
  %v3452 = vmul.f32 %v2300, %v3123
  %v3453 = vmul.f32 %v2301, %v3128
  %v3454 = vmul.f32 %v2302, %v3133
  %v3455 = vmul.f32 %v2303, %v3138
  %v3456 = vmul.f32 %v2304, %v3143
  %v3457 = vmul.f32 %v2305, %v3148
  %v3458 = vmul.f32 %v2306, %v3153
  %v3459 = vmul.f32 %v2307, %v3158
  %v3460 = vmul.f32 %v2308, %v3163
  %v3461 = vmul.f32 %v2309, %v3168
  %v3462 = vmul.f32 %v2310, %v3173
  %v3463 = vmul.f32 %v2311, %v3178
  %v3464 = vmul.f32 %v2312, %v3183
  %v3465 = vmul.f32 %v2313, %v3188
  %v3466 = vmul.f32 %v2314, %v3193
  %v3467 = vmul.f32 %v2315, %v3198
  %v3468 = vmul.f32 %v2316, %v3203
  %v3469 = vmul.f32 %v2317, %v3208
  %v3470 = vmul.f32 %v2318, %v3213
  %v3471 = vmul.f32 %v2319, %v3218
  %v3472 = vmul.f32 %v2320, %v3223
  %v3473 = vmul.f32 %v2321, %v3228
  %v3474 = vmul.f32 %v2322, %v3233
  %v3475 = vmul.f32 %v2323, %v3238
  %v3476 = vmul.f32 %v2324, %v3243
  %v3477 = vmul.f32 %v2325, %v3248
  %v3478 = vmul.f32 %v2326, %v3253
  %v3479 = vmul.f32 %v2327, %v3258
  %v3480 = vmul.f32 %v2328, %v3263
  %v3481 = vmul.f32 %v2329, %v3268
  %v3482 = vmul.f32 %v2330, %v3273
  %v3483 = vmul.f32 %v2331, %v3278
  %v3484 = vmul.f32 %v2332, %v3283
  %v3485 = vmul.f32 %v2333, %v3288
  %v3486 = vmul.f32 %v2334, %v3293
  %v3487 = vld [vmem:[%s4] sm:$0xff]
  %v3488 = vld [vmem:[%s4 + $0x8] sm:$0xff]
  %v3489 = vld [vmem:[%s4 + $0x10] sm:$0xff]
  %v3490 = vld [vmem:[%s4 + $0x18] sm:$0xff]
  %v3491 = vld [vmem:[%s4 + $0x20] sm:$0xff]
  %v3492 = vld [vmem:[%s4 + $0x28] sm:$0xff]
  %v3493 = vld [vmem:[%s4 + $0x30] sm:$0xff]
  %v3494 = vld [vmem:[%s4 + $0x38] sm:$0xff]
  %v3495 = vld [vmem:[%s4 + $0x40] sm:$0xff]
  %v3496 = vld [vmem:[%s4 + $0x48] sm:$0xff]
  %v3497 = vld [vmem:[%s4 + $0x50] sm:$0xff]
  %v3498 = vld [vmem:[%s4 + $0x58] sm:$0xff]
  %v3499 = vld [vmem:[%s4 + $0x60] sm:$0xff]
  %v3500 = vld [vmem:[%s4 + $0x68] sm:$0xff]
  %v3501 = vld [vmem:[%s4 + $0x70] sm:$0xff]
  %v3502 = vld [vmem:[%s4 + $0x78] sm:$0xff]
  %v3503 = vld [vmem:[%s4 + $0x80] sm:$0xff]
  %v3504 = vld [vmem:[%s4 + $0x88] sm:$0xff]
  %v3505 = vld [vmem:[%s4 + $0x90] sm:$0xff]
  %v3506 = vld [vmem:[%s4 + $0x98] sm:$0xff]
  %v3507 = vld [vmem:[%s4 + $0xa0] sm:$0xff]
  %v3508 = vld [vmem:[%s4 + $0xa8] sm:$0xff]
  %v3509 = vld [vmem:[%s4 + $0xb0] sm:$0xff]
  %v3510 = vld [vmem:[%s4 + $0xb8] sm:$0xff]
  %v3511 = vld [vmem:[%s4 + $0xc0] sm:$0xff]
  %v3512 = vld [vmem:[%s4 + $0xc8] sm:$0xff]
  %v3513 = vld [vmem:[%s4 + $0xd0] sm:$0xff]
  %v3514 = vld [vmem:[%s4 + $0xd8] sm:$0xff]
  %v3515 = vld [vmem:[%s4 + $0xe0] sm:$0xff]
  %v3516 = vld [vmem:[%s4 + $0xe8] sm:$0xff]
  %v3517 = vld [vmem:[%s4 + $0xf0] sm:$0xff]
  %v3518 = vld [vmem:[%s4 + $0xf8] sm:$0xff]
  %v3519 = vld [vmem:[%s4 + $0x100] sm:$0xff]
  %v3520 = vld [vmem:[%s4 + $0x108] sm:$0xff]
  %v3521 = vld [vmem:[%s4 + $0x110] sm:$0xff]
  %v3522 = vld [vmem:[%s4 + $0x118] sm:$0xff]
  %v3523 = vld [vmem:[%s4 + $0x120] sm:$0xff]
  %v3524 = vld [vmem:[%s4 + $0x128] sm:$0xff]
  %v3525 = vld [vmem:[%s4 + $0x130] sm:$0xff]
  %v3526 = vld [vmem:[%s4 + $0x138] sm:$0xff]
  %v3527 = vld [vmem:[%s4 + $0x140] sm:$0xff]
  %v3528 = vld [vmem:[%s4 + $0x148] sm:$0xff]
  %v3529 = vld [vmem:[%s4 + $0x150] sm:$0xff]
  %v3530 = vld [vmem:[%s4 + $0x158] sm:$0xff]
  %v3531 = vld [vmem:[%s4 + $0x160] sm:$0xff]
  %v3532 = vld [vmem:[%s4 + $0x168] sm:$0xff]
  %v3533 = vld [vmem:[%s4 + $0x170] sm:$0xff]
  %v3534 = vld [vmem:[%s4 + $0x178] sm:$0xff]
  %v3535 = vld [vmem:[%s4 + $0x180] sm:$0xff]
  %v3536 = vld [vmem:[%s4 + $0x188] sm:$0xff]
  %v3537 = vld [vmem:[%s4 + $0x190] sm:$0xff]
  %v3538 = vld [vmem:[%s4 + $0x198] sm:$0xff]
  %v3539 = vld [vmem:[%s4 + $0x1a0] sm:$0xff]
  %v3540 = vld [vmem:[%s4 + $0x1a8] sm:$0xff]
  %v3541 = vld [vmem:[%s4 + $0x1b0] sm:$0xff]
  %v3542 = vld [vmem:[%s4 + $0x1b8] sm:$0xff]
  %v3543 = vld [vmem:[%s4 + $0x1c0] sm:$0xff]
  %v3544 = vld [vmem:[%s4 + $0x1c8] sm:$0xff]
  %v3545 = vld [vmem:[%s4 + $0x1d0] sm:$0xff]
  %v3546 = vld [vmem:[%s4 + $0x1d8] sm:$0xff]
  %v3547 = vld [vmem:[%s4 + $0x1e0] sm:$0xff]
  %v3548 = vld [vmem:[%s4 + $0x1e8] sm:$0xff]
  %v3549 = vld [vmem:[%s4 + $0x1f0] sm:$0xff]
  %v3550 = vld [vmem:[%s4 + $0x1f8] sm:$0xff]
  %v3551 = vld [vmem:[%s4 + $0x200] sm:$0xff]
  %v3552 = vld [vmem:[%s4 + $0x208] sm:$0xff]
  %v3553 = vld [vmem:[%s4 + $0x210] sm:$0xff]
  %v3554 = vld [vmem:[%s4 + $0x218] sm:$0xff]
  %v3555 = vld [vmem:[%s4 + $0x220] sm:$0xff]
  %v3556 = vld [vmem:[%s4 + $0x228] sm:$0xff]
  %v3557 = vld [vmem:[%s4 + $0x230] sm:$0xff]
  %v3558 = vld [vmem:[%s4 + $0x238] sm:$0xff]
  %v3559 = vld [vmem:[%s4 + $0x240] sm:$0xff]
  %v3560 = vld [vmem:[%s4 + $0x248] sm:$0xff]
  %v3561 = vld [vmem:[%s4 + $0x250] sm:$0xff]
  %v3562 = vld [vmem:[%s4 + $0x258] sm:$0xff]
  %v3563 = vld [vmem:[%s4 + $0x260] sm:$0xff]
  %v3564 = vld [vmem:[%s4 + $0x268] sm:$0xff]
  %v3565 = vld [vmem:[%s4 + $0x270] sm:$0xff]
  %v3566 = vld [vmem:[%s4 + $0x278] sm:$0xff]
  %v3567 = vld [vmem:[%s4 + $0x280] sm:$0xff]
  %v3568 = vld [vmem:[%s4 + $0x288] sm:$0xff]
  %v3569 = vld [vmem:[%s4 + $0x290] sm:$0xff]
  %v3570 = vld [vmem:[%s4 + $0x298] sm:$0xff]
  %v3571 = vld [vmem:[%s4 + $0x2a0] sm:$0xff]
  %v3572 = vld [vmem:[%s4 + $0x2a8] sm:$0xff]
  %v3573 = vld [vmem:[%s4 + $0x2b0] sm:$0xff]
  %v3574 = vld [vmem:[%s4 + $0x2b8] sm:$0xff]
  %v3575 = vld [vmem:[%s4 + $0x2c0] sm:$0xff]
  %v3576 = vld [vmem:[%s4 + $0x2c8] sm:$0xff]
  %v3577 = vld [vmem:[%s4 + $0x2d0] sm:$0xff]
  %v3578 = vld [vmem:[%s4 + $0x2d8] sm:$0xff]
  %v3579 = vld [vmem:[%s4 + $0x2e0] sm:$0xff]
  %v3580 = vld [vmem:[%s4 + $0x2e8] sm:$0xff]
  %v3581 = vld [vmem:[%s4 + $0x2f0] sm:$0xff]
  %v3582 = vld [vmem:[%s4 + $0x2f8] sm:$0xff]
  %v3583 = vld [vmem:[%s4 + $0x300] sm:$0xff]
  %v3584 = vld [vmem:[%s4 + $0x308] sm:$0xff]
  %v3585 = vld [vmem:[%s4 + $0x310] sm:$0xff]
  %v3586 = vld [vmem:[%s4 + $0x318] sm:$0xff]
  %v3587 = vld [vmem:[%s4 + $0x320] sm:$0xff]
  %v3588 = vld [vmem:[%s4 + $0x328] sm:$0xff]
  %v3589 = vld [vmem:[%s4 + $0x330] sm:$0xff]
  %v3590 = vld [vmem:[%s4 + $0x338] sm:$0xff]
  %v3591 = vld [vmem:[%s4 + $0x340] sm:$0xff]
  %v3592 = vld [vmem:[%s4 + $0x348] sm:$0xff]
  %v3593 = vld [vmem:[%s4 + $0x350] sm:$0xff]
  %v3594 = vld [vmem:[%s4 + $0x358] sm:$0xff]
  %v3595 = vld [vmem:[%s4 + $0x360] sm:$0xff]
  %v3596 = vld [vmem:[%s4 + $0x368] sm:$0xff]
  %v3597 = vld [vmem:[%s4 + $0x370] sm:$0xff]
  %v3598 = vld [vmem:[%s4 + $0x378] sm:$0xff]
  %v3599 = vld [vmem:[%s4 + $0x380] sm:$0xff]
  %v3600 = vld [vmem:[%s4 + $0x388] sm:$0xff]
  %v3601 = vld [vmem:[%s4 + $0x390] sm:$0xff]
  %v3602 = vld [vmem:[%s4 + $0x398] sm:$0xff]
  %v3603 = vld [vmem:[%s4 + $0x3a0] sm:$0xff]
  %v3604 = vld [vmem:[%s4 + $0x3a8] sm:$0xff]
  %v3605 = vld [vmem:[%s4 + $0x3b0] sm:$0xff]
  %v3606 = vld [vmem:[%s4 + $0x3b8] sm:$0xff]
  %v3607 = vld [vmem:[%s4 + $0x3c0] sm:$0xff]
  %v3608 = vld [vmem:[%s4 + $0x3c8] sm:$0xff]
  %v3609 = vld [vmem:[%s4 + $0x3d0] sm:$0xff]
  %v3610 = vld [vmem:[%s4 + $0x3d8] sm:$0xff]
  %v3611 = vld [vmem:[%s4 + $0x3e0] sm:$0xff]
  %v3612 = vld [vmem:[%s4 + $0x3e8] sm:$0xff]
  %v3613 = vld [vmem:[%s4 + $0x3f0] sm:$0xff]
  %v3614 = vld [vmem:[%s4 + $0x3f8] sm:$0xff]
  %v3615 = vld [vmem:[%s4 + $0x400] sm:$0xff]
  %v3616 = vld [vmem:[%s4 + $0x408] sm:$0xff]
  %v3617 = vld [vmem:[%s4 + $0x410] sm:$0xff]
  %v3618 = vld [vmem:[%s4 + $0x418] sm:$0xff]
  %v3619 = vld [vmem:[%s4 + $0x420] sm:$0xff]
  %v3620 = vld [vmem:[%s4 + $0x428] sm:$0xff]
  %v3621 = vld [vmem:[%s4 + $0x430] sm:$0xff]
  %v3622 = vld [vmem:[%s4 + $0x438] sm:$0xff]
  %v3623 = vld [vmem:[%s4 + $0x440] sm:$0xff]
  %v3624 = vld [vmem:[%s4 + $0x448] sm:$0xff]
  %v3625 = vld [vmem:[%s4 + $0x450] sm:$0xff]
  %v3626 = vld [vmem:[%s4 + $0x458] sm:$0xff]
  %v3627 = vld [vmem:[%s4 + $0x460] sm:$0xff]
  %v3628 = vld [vmem:[%s4 + $0x468] sm:$0xff]
  %v3629 = vld [vmem:[%s4 + $0x470] sm:$0xff]
  %v3630 = vld [vmem:[%s4 + $0x478] sm:$0xff]
  %v3631 = vld [vmem:[%s4 + $0x480] sm:$0xff]
  %v3632 = vld [vmem:[%s4 + $0x488] sm:$0xff]
  %v3633 = vld [vmem:[%s4 + $0x490] sm:$0xff]
  %v3634 = vld [vmem:[%s4 + $0x498] sm:$0xff]
  %v3635 = vld [vmem:[%s4 + $0x4a0] sm:$0xff]
  %v3636 = vld [vmem:[%s4 + $0x4a8] sm:$0xff]
  %v3637 = vld [vmem:[%s4 + $0x4b0] sm:$0xff]
  %v3638 = vld [vmem:[%s4 + $0x4b8] sm:$0xff]
  %v3639 = vld [vmem:[%s4 + $0x4c0] sm:$0xff]
  %v3640 = vld [vmem:[%s4 + $0x4c8] sm:$0xff]
  %v3641 = vld [vmem:[%s4 + $0x4d0] sm:$0xff]
  %v3642 = vld [vmem:[%s4 + $0x4d8] sm:$0xff]
  %v3643 = vld [vmem:[%s4 + $0x4e0] sm:$0xff]
  %v3644 = vld [vmem:[%s4 + $0x4e8] sm:$0xff]
  %v3645 = vld [vmem:[%s4 + $0x4f0] sm:$0xff]
  %v3646 = vld [vmem:[%s4 + $0x4f8] sm:$0xff]
  %v3647 = vld [vmem:[%s4 + $0x500] sm:$0xff]
  %v3648 = vld [vmem:[%s4 + $0x508] sm:$0xff]
  %v3649 = vld [vmem:[%s4 + $0x510] sm:$0xff]
  %v3650 = vld [vmem:[%s4 + $0x518] sm:$0xff]
  %v3651 = vld [vmem:[%s4 + $0x520] sm:$0xff]
  %v3652 = vld [vmem:[%s4 + $0x528] sm:$0xff]
  %v3653 = vld [vmem:[%s4 + $0x530] sm:$0xff]
  %v3654 = vld [vmem:[%s4 + $0x538] sm:$0xff]
  %v3655 = vld [vmem:[%s4 + $0x540] sm:$0xff]
  %v3656 = vld [vmem:[%s4 + $0x548] sm:$0xff]
  %v3657 = vld [vmem:[%s4 + $0x550] sm:$0xff]
  %v3658 = vld [vmem:[%s4 + $0x558] sm:$0xff]
  %v3659 = vld [vmem:[%s4 + $0x560] sm:$0xff]
  %v3660 = vld [vmem:[%s4 + $0x568] sm:$0xff]
  %v3661 = vld [vmem:[%s4 + $0x570] sm:$0xff]
  %v3662 = vld [vmem:[%s4 + $0x578] sm:$0xff]
  %v3663 = vld [vmem:[%s4 + $0x580] sm:$0xff]
  %v3664 = vld [vmem:[%s4 + $0x588] sm:$0xff]
  %v3665 = vld [vmem:[%s4 + $0x590] sm:$0xff]
  %v3666 = vld [vmem:[%s4 + $0x598] sm:$0xff]
  %v3667 = vld [vmem:[%s4 + $0x5a0] sm:$0xff]
  %v3668 = vld [vmem:[%s4 + $0x5a8] sm:$0xff]
  %v3669 = vld [vmem:[%s4 + $0x5b0] sm:$0xff]
  %v3670 = vld [vmem:[%s4 + $0x5b8] sm:$0xff]
  %v3671 = vld [vmem:[%s4 + $0x5c0] sm:$0xff]
  %v3672 = vld [vmem:[%s4 + $0x5c8] sm:$0xff]
  %v3673 = vld [vmem:[%s4 + $0x5d0] sm:$0xff]
  %v3674 = vld [vmem:[%s4 + $0x5d8] sm:$0xff]
  %v3675 = vld [vmem:[%s4 + $0x5e0] sm:$0xff]
  %v3676 = vld [vmem:[%s4 + $0x5e8] sm:$0xff]
  %v3677 = vld [vmem:[%s4 + $0x5f0] sm:$0xff]
  %v3678 = vld [vmem:[%s4 + $0x5f8] sm:$0xff]
  %v3679 = vpack.c.bf16 %v3296, %v3295
  %v3680 = vpack.c.bf16 %v3298, %v3297
  %v3681 = vpack.c.bf16 %v3300, %v3299
  %v3682 = vpack.c.bf16 %v3302, %v3301
  %v3683 = vpack.c.bf16 %v3304, %v3303
  %v3684 = vpack.c.bf16 %v3306, %v3305
  %v3685 = vpack.c.bf16 %v3308, %v3307
  %v3686 = vpack.c.bf16 %v3310, %v3309
  %v3687 = vpack.c.bf16 %v3312, %v3311
  %v3688 = vpack.c.bf16 %v3314, %v3313
  %v3689 = vpack.c.bf16 %v3316, %v3315
  %v3690 = vpack.c.bf16 %v3318, %v3317
  %v3691 = vpack.c.bf16 %v3320, %v3319
  %v3692 = vpack.c.bf16 %v3322, %v3321
  %v3693 = vpack.c.bf16 %v3324, %v3323
  %v3694 = vpack.c.bf16 %v3326, %v3325
  %v3695 = vpack.c.bf16 %v3328, %v3327
  %v3696 = vpack.c.bf16 %v3330, %v3329
  %v3697 = vpack.c.bf16 %v3332, %v3331
  %v3698 = vpack.c.bf16 %v3334, %v3333
  %v3699 = vpack.c.bf16 %v3336, %v3335
  %v3700 = vpack.c.bf16 %v3338, %v3337
  %v3701 = vpack.c.bf16 %v3340, %v3339
  %v3702 = vpack.c.bf16 %v3342, %v3341
  %v3703 = vpack.c.bf16 %v3344, %v3343
  %v3704 = vpack.c.bf16 %v3346, %v3345
  %v3705 = vpack.c.bf16 %v3348, %v3347
  %v3706 = vpack.c.bf16 %v3350, %v3349
  %v3707 = vpack.c.bf16 %v3352, %v3351
  %v3708 = vpack.c.bf16 %v3354, %v3353
  %v3709 = vpack.c.bf16 %v3356, %v3355
  %v3710 = vpack.c.bf16 %v3358, %v3357
  %v3711 = vpack.c.bf16 %v3360, %v3359
  %v3712 = vpack.c.bf16 %v3362, %v3361
  %v3713 = vpack.c.bf16 %v3364, %v3363
  %v3714 = vpack.c.bf16 %v3366, %v3365
  %v3715 = vpack.c.bf16 %v3368, %v3367
  %v3716 = vpack.c.bf16 %v3370, %v3369
  %v3717 = vpack.c.bf16 %v3372, %v3371
  %v3718 = vpack.c.bf16 %v3374, %v3373
  %v3719 = vpack.c.bf16 %v3376, %v3375
  %v3720 = vpack.c.bf16 %v3378, %v3377
  %v3721 = vpack.c.bf16 %v3380, %v3379
  %v3722 = vpack.c.bf16 %v3382, %v3381
  %v3723 = vpack.c.bf16 %v3384, %v3383
  %v3724 = vpack.c.bf16 %v3386, %v3385
  %v3725 = vpack.c.bf16 %v3388, %v3387
  %v3726 = vpack.c.bf16 %v3390, %v3389
  %v3727 = vpack.c.bf16 %v3392, %v3391
  %v3728 = vpack.c.bf16 %v3394, %v3393
  %v3729 = vpack.c.bf16 %v3396, %v3395
  %v3730 = vpack.c.bf16 %v3398, %v3397
  %v3731 = vpack.c.bf16 %v3400, %v3399
  %v3732 = vpack.c.bf16 %v3402, %v3401
  %v3733 = vpack.c.bf16 %v3404, %v3403
  %v3734 = vpack.c.bf16 %v3406, %v3405
  %v3735 = vpack.c.bf16 %v3408, %v3407
  %v3736 = vpack.c.bf16 %v3410, %v3409
  %v3737 = vpack.c.bf16 %v3412, %v3411
  %v3738 = vpack.c.bf16 %v3414, %v3413
  %v3739 = vpack.c.bf16 %v3416, %v3415
  %v3740 = vpack.c.bf16 %v3418, %v3417
  %v3741 = vpack.c.bf16 %v3420, %v3419
  %v3742 = vpack.c.bf16 %v3422, %v3421
  %v3743 = vpack.c.bf16 %v3424, %v3423
  %v3744 = vpack.c.bf16 %v3426, %v3425
  %v3745 = vpack.c.bf16 %v3428, %v3427
  %v3746 = vpack.c.bf16 %v3430, %v3429
  %v3747 = vpack.c.bf16 %v3432, %v3431
  %v3748 = vpack.c.bf16 %v3434, %v3433
  %v3749 = vpack.c.bf16 %v3436, %v3435
  %v3750 = vpack.c.bf16 %v3438, %v3437
  %v3751 = vpack.c.bf16 %v3440, %v3439
  %v3752 = vpack.c.bf16 %v3442, %v3441
  %v3753 = vpack.c.bf16 %v3444, %v3443
  %v3754 = vpack.c.bf16 %v3446, %v3445
  %v3755 = vpack.c.bf16 %v3448, %v3447
  %v3756 = vpack.c.bf16 %v3450, %v3449
  %v3757 = vpack.c.bf16 %v3452, %v3451
  %v3758 = vpack.c.bf16 %v3454, %v3453
  %v3759 = vpack.c.bf16 %v3456, %v3455
  %v3760 = vpack.c.bf16 %v3458, %v3457
  %v3761 = vpack.c.bf16 %v3460, %v3459
  %v3762 = vpack.c.bf16 %v3462, %v3461
  %v3763 = vpack.c.bf16 %v3464, %v3463
  %v3764 = vpack.c.bf16 %v3466, %v3465
  %v3765 = vpack.c.bf16 %v3468, %v3467
  %v3766 = vpack.c.bf16 %v3470, %v3469
  %v3767 = vpack.c.bf16 %v3472, %v3471
  %v3768 = vpack.c.bf16 %v3474, %v3473
  %v3769 = vpack.c.bf16 %v3476, %v3475
  %v3770 = vpack.c.bf16 %v3478, %v3477
  %v3771 = vpack.c.bf16 %v3480, %v3479
  %v3772 = vpack.c.bf16 %v3482, %v3481
  %v3773 = vpack.c.bf16 %v3484, %v3483
  %v3774 = vpack.c.bf16 %v3486, %v3485
  %v3967 = vunpack.c.l.b16 %v3487
  %v3968 = vunpack.c.h.b16 %v3487
  %v3969 = vunpack.c.l.b16 %v3488
  %v3970 = vunpack.c.h.b16 %v3488
  %v3971 = vunpack.c.l.b16 %v3489
  %v3972 = vunpack.c.h.b16 %v3489
  %v3973 = vunpack.c.l.b16 %v3490
  %v3974 = vunpack.c.h.b16 %v3490
  %v3975 = vunpack.c.l.b16 %v3491
  %v3976 = vunpack.c.h.b16 %v3491
  %v3977 = vunpack.c.l.b16 %v3492
  %v3978 = vunpack.c.h.b16 %v3492
  %v3979 = vunpack.c.l.b16 %v3493
  %v3980 = vunpack.c.h.b16 %v3493
  %v3981 = vunpack.c.l.b16 %v3494
  %v3982 = vunpack.c.h.b16 %v3494
  %v3983 = vunpack.c.l.b16 %v3495
  %v3984 = vunpack.c.h.b16 %v3495
  %v3985 = vunpack.c.l.b16 %v3496
  %v3986 = vunpack.c.h.b16 %v3496
  %v3987 = vunpack.c.l.b16 %v3497
  %v3988 = vunpack.c.h.b16 %v3497
  %v3989 = vunpack.c.l.b16 %v3498
  %v3990 = vunpack.c.h.b16 %v3498
  %v3991 = vunpack.c.l.b16 %v3499
  %v3992 = vunpack.c.h.b16 %v3499
  %v3993 = vunpack.c.l.b16 %v3500
  %v3994 = vunpack.c.h.b16 %v3500
  %v3995 = vunpack.c.l.b16 %v3501
  %v3996 = vunpack.c.h.b16 %v3501
  %v3997 = vunpack.c.l.b16 %v3502
  %v3998 = vunpack.c.h.b16 %v3502
  %v3999 = vunpack.c.l.b16 %v3503
  %v4000 = vunpack.c.h.b16 %v3503
  %v4001 = vunpack.c.l.b16 %v3504
  %v4002 = vunpack.c.h.b16 %v3504
  %v4003 = vunpack.c.l.b16 %v3505
  %v4004 = vunpack.c.h.b16 %v3505
  %v4005 = vunpack.c.l.b16 %v3506
  %v4006 = vunpack.c.h.b16 %v3506
  %v4007 = vunpack.c.l.b16 %v3507
  %v4008 = vunpack.c.h.b16 %v3507
  %v4009 = vunpack.c.l.b16 %v3508
  %v4010 = vunpack.c.h.b16 %v3508
  %v4011 = vunpack.c.l.b16 %v3509
  %v4012 = vunpack.c.h.b16 %v3509
  %v4013 = vunpack.c.l.b16 %v3510
  %v4014 = vunpack.c.h.b16 %v3510
  %v4015 = vunpack.c.l.b16 %v3511
  %v4016 = vunpack.c.h.b16 %v3511
  %v4017 = vunpack.c.l.b16 %v3512
  %v4018 = vunpack.c.h.b16 %v3512
  %v4019 = vunpack.c.l.b16 %v3513
  %v4020 = vunpack.c.h.b16 %v3513
  %v4021 = vunpack.c.l.b16 %v3514
  %v4022 = vunpack.c.h.b16 %v3514
  %v4023 = vunpack.c.l.b16 %v3515
  %v4024 = vunpack.c.h.b16 %v3515
  %v4025 = vunpack.c.l.b16 %v3516
  %v4026 = vunpack.c.h.b16 %v3516
  %v4027 = vunpack.c.l.b16 %v3517
  %v4028 = vunpack.c.h.b16 %v3517
  %v4029 = vunpack.c.l.b16 %v3518
  %v4030 = vunpack.c.h.b16 %v3518
  %v4031 = vunpack.c.l.b16 %v3519
  %v4032 = vunpack.c.h.b16 %v3519
  %v4033 = vunpack.c.l.b16 %v3520
  %v4034 = vunpack.c.h.b16 %v3520
  %v4035 = vunpack.c.l.b16 %v3521
  %v4036 = vunpack.c.h.b16 %v3521
  %v4037 = vunpack.c.l.b16 %v3522
  %v4038 = vunpack.c.h.b16 %v3522
  %v4039 = vunpack.c.l.b16 %v3523
  %v4040 = vunpack.c.h.b16 %v3523
  %v4041 = vunpack.c.l.b16 %v3524
  %v4042 = vunpack.c.h.b16 %v3524
  %v4043 = vunpack.c.l.b16 %v3525
  %v4044 = vunpack.c.h.b16 %v3525
  %v4045 = vunpack.c.l.b16 %v3526
  %v4046 = vunpack.c.h.b16 %v3526
  %v4047 = vunpack.c.l.b16 %v3527
  %v4048 = vunpack.c.h.b16 %v3527
  %v4049 = vunpack.c.l.b16 %v3528
  %v4050 = vunpack.c.h.b16 %v3528
  %v4051 = vunpack.c.l.b16 %v3529
  %v4052 = vunpack.c.h.b16 %v3529
  %v4053 = vunpack.c.l.b16 %v3530
  %v4054 = vunpack.c.h.b16 %v3530
  %v4055 = vunpack.c.l.b16 %v3531
  %v4056 = vunpack.c.h.b16 %v3531
  %v4057 = vunpack.c.l.b16 %v3532
  %v4058 = vunpack.c.h.b16 %v3532
  %v4059 = vunpack.c.l.b16 %v3533
  %v4060 = vunpack.c.h.b16 %v3533
  %v4061 = vunpack.c.l.b16 %v3534
  %v4062 = vunpack.c.h.b16 %v3534
  %v4063 = vunpack.c.l.b16 %v3535
  %v4064 = vunpack.c.h.b16 %v3535
  %v4065 = vunpack.c.l.b16 %v3536
  %v4066 = vunpack.c.h.b16 %v3536
  %v4067 = vunpack.c.l.b16 %v3537
  %v4068 = vunpack.c.h.b16 %v3537
  %v4069 = vunpack.c.l.b16 %v3538
  %v4070 = vunpack.c.h.b16 %v3538
  %v4071 = vunpack.c.l.b16 %v3539
  %v4072 = vunpack.c.h.b16 %v3539
  %v4073 = vunpack.c.l.b16 %v3540
  %v4074 = vunpack.c.h.b16 %v3540
  %v4075 = vunpack.c.l.b16 %v3541
  %v4076 = vunpack.c.h.b16 %v3541
  %v4077 = vunpack.c.l.b16 %v3542
  %v4078 = vunpack.c.h.b16 %v3542
  %v4079 = vunpack.c.l.b16 %v3543
  %v4080 = vunpack.c.h.b16 %v3543
  %v4081 = vunpack.c.l.b16 %v3544
  %v4082 = vunpack.c.h.b16 %v3544
  %v4083 = vunpack.c.l.b16 %v3545
  %v4084 = vunpack.c.h.b16 %v3545
  %v4085 = vunpack.c.l.b16 %v3546
  %v4086 = vunpack.c.h.b16 %v3546
  %v4087 = vunpack.c.l.b16 %v3547
  %v4088 = vunpack.c.h.b16 %v3547
  %v4089 = vunpack.c.l.b16 %v3548
  %v4090 = vunpack.c.h.b16 %v3548
  %v4091 = vunpack.c.l.b16 %v3549
  %v4092 = vunpack.c.h.b16 %v3549
  %v4093 = vunpack.c.l.b16 %v3550
  %v4094 = vunpack.c.h.b16 %v3550
  %v4095 = vunpack.c.l.b16 %v3551
  %v4096 = vunpack.c.h.b16 %v3551
  %v4097 = vunpack.c.l.b16 %v3552
  %v4098 = vunpack.c.h.b16 %v3552
  %v4099 = vunpack.c.l.b16 %v3553
  %v4100 = vunpack.c.h.b16 %v3553
  %v4101 = vunpack.c.l.b16 %v3554
  %v4102 = vunpack.c.h.b16 %v3554
  %v4103 = vunpack.c.l.b16 %v3555
  %v4104 = vunpack.c.h.b16 %v3555
  %v4105 = vunpack.c.l.b16 %v3556
  %v4106 = vunpack.c.h.b16 %v3556
  %v4107 = vunpack.c.l.b16 %v3557
  %v4108 = vunpack.c.h.b16 %v3557
  %v4109 = vunpack.c.l.b16 %v3558
  %v4110 = vunpack.c.h.b16 %v3558
  %v4111 = vunpack.c.l.b16 %v3559
  %v4112 = vunpack.c.h.b16 %v3559
  %v4113 = vunpack.c.l.b16 %v3560
  %v4114 = vunpack.c.h.b16 %v3560
  %v4115 = vunpack.c.l.b16 %v3561
  %v4116 = vunpack.c.h.b16 %v3561
  %v4117 = vunpack.c.l.b16 %v3562
  %v4118 = vunpack.c.h.b16 %v3562
  %v4119 = vunpack.c.l.b16 %v3563
  %v4120 = vunpack.c.h.b16 %v3563
  %v4121 = vunpack.c.l.b16 %v3564
  %v4122 = vunpack.c.h.b16 %v3564
  %v4123 = vunpack.c.l.b16 %v3565
  %v4124 = vunpack.c.h.b16 %v3565
  %v4125 = vunpack.c.l.b16 %v3566
  %v4126 = vunpack.c.h.b16 %v3566
  %v4127 = vunpack.c.l.b16 %v3567
  %v4128 = vunpack.c.h.b16 %v3567
  %v4129 = vunpack.c.l.b16 %v3568
  %v4130 = vunpack.c.h.b16 %v3568
  %v4131 = vunpack.c.l.b16 %v3569
  %v4132 = vunpack.c.h.b16 %v3569
  %v4133 = vunpack.c.l.b16 %v3570
  %v4134 = vunpack.c.h.b16 %v3570
  %v4135 = vunpack.c.l.b16 %v3571
  %v4136 = vunpack.c.h.b16 %v3571
  %v4137 = vunpack.c.l.b16 %v3572
  %v4138 = vunpack.c.h.b16 %v3572
  %v4139 = vunpack.c.l.b16 %v3573
  %v4140 = vunpack.c.h.b16 %v3573
  %v4141 = vunpack.c.l.b16 %v3574
  %v4142 = vunpack.c.h.b16 %v3574
  %v4143 = vunpack.c.l.b16 %v3575
  %v4144 = vunpack.c.h.b16 %v3575
  %v4145 = vunpack.c.l.b16 %v3576
  %v4146 = vunpack.c.h.b16 %v3576
  %v4147 = vunpack.c.l.b16 %v3577
  %v4148 = vunpack.c.h.b16 %v3577
  %v4149 = vunpack.c.l.b16 %v3578
  %v4150 = vunpack.c.h.b16 %v3578
  %v4151 = vunpack.c.l.b16 %v3579
  %v4152 = vunpack.c.h.b16 %v3579
  %v4153 = vunpack.c.l.b16 %v3580
  %v4154 = vunpack.c.h.b16 %v3580
  %v4155 = vunpack.c.l.b16 %v3581
  %v4156 = vunpack.c.h.b16 %v3581
  %v4157 = vunpack.c.l.b16 %v3582
  %v4158 = vunpack.c.h.b16 %v3582
  %v4159 = vunpack.c.l.b16 %v3583
  %v4160 = vunpack.c.h.b16 %v3583
  %v4161 = vunpack.c.l.b16 %v3584
  %v4162 = vunpack.c.h.b16 %v3584
  %v4163 = vunpack.c.l.b16 %v3585
  %v4164 = vunpack.c.h.b16 %v3585
  %v4165 = vunpack.c.l.b16 %v3586
  %v4166 = vunpack.c.h.b16 %v3586
  %v4167 = vunpack.c.l.b16 %v3587
  %v4168 = vunpack.c.h.b16 %v3587
  %v4169 = vunpack.c.l.b16 %v3588
  %v4170 = vunpack.c.h.b16 %v3588
  %v4171 = vunpack.c.l.b16 %v3589
  %v4172 = vunpack.c.h.b16 %v3589
  %v4173 = vunpack.c.l.b16 %v3590
  %v4174 = vunpack.c.h.b16 %v3590
  %v4175 = vunpack.c.l.b16 %v3591
  %v4176 = vunpack.c.h.b16 %v3591
  %v4177 = vunpack.c.l.b16 %v3592
  %v4178 = vunpack.c.h.b16 %v3592
  %v4179 = vunpack.c.l.b16 %v3593
  %v4180 = vunpack.c.h.b16 %v3593
  %v4181 = vunpack.c.l.b16 %v3594
  %v4182 = vunpack.c.h.b16 %v3594
  %v4183 = vunpack.c.l.b16 %v3595
  %v4184 = vunpack.c.h.b16 %v3595
  %v4185 = vunpack.c.l.b16 %v3596
  %v4186 = vunpack.c.h.b16 %v3596
  %v4187 = vunpack.c.l.b16 %v3597
  %v4188 = vunpack.c.h.b16 %v3597
  %v4189 = vunpack.c.l.b16 %v3598
  %v4190 = vunpack.c.h.b16 %v3598
  %v4191 = vunpack.c.l.b16 %v3599
  %v4192 = vunpack.c.h.b16 %v3599
  %v4193 = vunpack.c.l.b16 %v3600
  %v4194 = vunpack.c.h.b16 %v3600
  %v4195 = vunpack.c.l.b16 %v3601
  %v4196 = vunpack.c.h.b16 %v3601
  %v4197 = vunpack.c.l.b16 %v3602
  %v4198 = vunpack.c.h.b16 %v3602
  %v4199 = vunpack.c.l.b16 %v3603
  %v4200 = vunpack.c.h.b16 %v3603
  %v4201 = vunpack.c.l.b16 %v3604
  %v4202 = vunpack.c.h.b16 %v3604
  %v4203 = vunpack.c.l.b16 %v3605
  %v4204 = vunpack.c.h.b16 %v3605
  %v4205 = vunpack.c.l.b16 %v3606
  %v4206 = vunpack.c.h.b16 %v3606
  %v4207 = vunpack.c.l.b16 %v3607
  %v4208 = vunpack.c.h.b16 %v3607
  %v4209 = vunpack.c.l.b16 %v3608
  %v4210 = vunpack.c.h.b16 %v3608
  %v4211 = vunpack.c.l.b16 %v3609
  %v4212 = vunpack.c.h.b16 %v3609
  %v4213 = vunpack.c.l.b16 %v3610
  %v4214 = vunpack.c.h.b16 %v3610
  %v4215 = vunpack.c.l.b16 %v3611
  %v4216 = vunpack.c.h.b16 %v3611
  %v4217 = vunpack.c.l.b16 %v3612
  %v4218 = vunpack.c.h.b16 %v3612
  %v4219 = vunpack.c.l.b16 %v3613
  %v4220 = vunpack.c.h.b16 %v3613
  %v4221 = vunpack.c.l.b16 %v3614
  %v4222 = vunpack.c.h.b16 %v3614
  %v4223 = vunpack.c.l.b16 %v3615
  %v4224 = vunpack.c.h.b16 %v3615
  %v4225 = vunpack.c.l.b16 %v3616
  %v4226 = vunpack.c.h.b16 %v3616
  %v4227 = vunpack.c.l.b16 %v3617
  %v4228 = vunpack.c.h.b16 %v3617
  %v4229 = vunpack.c.l.b16 %v3618
  %v4230 = vunpack.c.h.b16 %v3618
  %v4231 = vunpack.c.l.b16 %v3619
  %v4232 = vunpack.c.h.b16 %v3619
  %v4233 = vunpack.c.l.b16 %v3620
  %v4234 = vunpack.c.h.b16 %v3620
  %v4235 = vunpack.c.l.b16 %v3621
  %v4236 = vunpack.c.h.b16 %v3621
  %v4237 = vunpack.c.l.b16 %v3622
  %v4238 = vunpack.c.h.b16 %v3622
  %v4239 = vunpack.c.l.b16 %v3623
  %v4240 = vunpack.c.h.b16 %v3623
  %v4241 = vunpack.c.l.b16 %v3624
  %v4242 = vunpack.c.h.b16 %v3624
  %v4243 = vunpack.c.l.b16 %v3625
  %v4244 = vunpack.c.h.b16 %v3625
  %v4245 = vunpack.c.l.b16 %v3626
  %v4246 = vunpack.c.h.b16 %v3626
  %v4247 = vunpack.c.l.b16 %v3627
  %v4248 = vunpack.c.h.b16 %v3627
  %v4249 = vunpack.c.l.b16 %v3628
  %v4250 = vunpack.c.h.b16 %v3628
  %v4251 = vunpack.c.l.b16 %v3629
  %v4252 = vunpack.c.h.b16 %v3629
  %v4253 = vunpack.c.l.b16 %v3630
  %v4254 = vunpack.c.h.b16 %v3630
  %v4255 = vunpack.c.l.b16 %v3631
  %v4256 = vunpack.c.h.b16 %v3631
  %v4257 = vunpack.c.l.b16 %v3632
  %v4258 = vunpack.c.h.b16 %v3632
  %v4259 = vunpack.c.l.b16 %v3633
  %v4260 = vunpack.c.h.b16 %v3633
  %v4261 = vunpack.c.l.b16 %v3634
  %v4262 = vunpack.c.h.b16 %v3634
  %v4263 = vunpack.c.l.b16 %v3635
  %v4264 = vunpack.c.h.b16 %v3635
  %v4265 = vunpack.c.l.b16 %v3636
  %v4266 = vunpack.c.h.b16 %v3636
  %v4267 = vunpack.c.l.b16 %v3637
  %v4268 = vunpack.c.h.b16 %v3637
  %v4269 = vunpack.c.l.b16 %v3638
  %v4270 = vunpack.c.h.b16 %v3638
  %v4271 = vunpack.c.l.b16 %v3639
  %v4272 = vunpack.c.h.b16 %v3639
  %v4273 = vunpack.c.l.b16 %v3640
  %v4274 = vunpack.c.h.b16 %v3640
  %v4275 = vunpack.c.l.b16 %v3641
  %v4276 = vunpack.c.h.b16 %v3641
  %v4277 = vunpack.c.l.b16 %v3642
  %v4278 = vunpack.c.h.b16 %v3642
  %v4279 = vunpack.c.l.b16 %v3643
  %v4280 = vunpack.c.h.b16 %v3643
  %v4281 = vunpack.c.l.b16 %v3644
  %v4282 = vunpack.c.h.b16 %v3644
  %v4283 = vunpack.c.l.b16 %v3645
  %v4284 = vunpack.c.h.b16 %v3645
  %v4285 = vunpack.c.l.b16 %v3646
  %v4286 = vunpack.c.h.b16 %v3646
  %v4287 = vunpack.c.l.b16 %v3647
  %v4288 = vunpack.c.h.b16 %v3647
  %v4289 = vunpack.c.l.b16 %v3648
  %v4290 = vunpack.c.h.b16 %v3648
  %v4291 = vunpack.c.l.b16 %v3649
  %v4292 = vunpack.c.h.b16 %v3649
  %v4293 = vunpack.c.l.b16 %v3650
  %v4294 = vunpack.c.h.b16 %v3650
  %v4295 = vunpack.c.l.b16 %v3651
  %v4296 = vunpack.c.h.b16 %v3651
  %v4297 = vunpack.c.l.b16 %v3652
  %v4298 = vunpack.c.h.b16 %v3652
  %v4299 = vunpack.c.l.b16 %v3653
  %v4300 = vunpack.c.h.b16 %v3653
  %v4301 = vunpack.c.l.b16 %v3654
  %v4302 = vunpack.c.h.b16 %v3654
  %v4303 = vunpack.c.l.b16 %v3655
  %v4304 = vunpack.c.h.b16 %v3655
  %v4305 = vunpack.c.l.b16 %v3656
  %v4306 = vunpack.c.h.b16 %v3656
  %v4307 = vunpack.c.l.b16 %v3657
  %v4308 = vunpack.c.h.b16 %v3657
  %v4309 = vunpack.c.l.b16 %v3658
  %v4310 = vunpack.c.h.b16 %v3658
  %v4311 = vunpack.c.l.b16 %v3659
  %v4312 = vunpack.c.h.b16 %v3659
  %v4313 = vunpack.c.l.b16 %v3660
  %v4314 = vunpack.c.h.b16 %v3660
  %v4315 = vunpack.c.l.b16 %v3661
  %v4316 = vunpack.c.h.b16 %v3661
  %v4317 = vunpack.c.l.b16 %v3662
  %v4318 = vunpack.c.h.b16 %v3662
  %v4319 = vunpack.c.l.b16 %v3663
  %v4320 = vunpack.c.h.b16 %v3663
  %v4321 = vunpack.c.l.b16 %v3664
  %v4322 = vunpack.c.h.b16 %v3664
  %v4323 = vunpack.c.l.b16 %v3665
  %v4324 = vunpack.c.h.b16 %v3665
  %v4325 = vunpack.c.l.b16 %v3666
  %v4326 = vunpack.c.h.b16 %v3666
  %v4327 = vunpack.c.l.b16 %v3667
  %v4328 = vunpack.c.h.b16 %v3667
  %v4329 = vunpack.c.l.b16 %v3668
  %v4330 = vunpack.c.h.b16 %v3668
  %v4331 = vunpack.c.l.b16 %v3669
  %v4332 = vunpack.c.h.b16 %v3669
  %v4333 = vunpack.c.l.b16 %v3670
  %v4334 = vunpack.c.h.b16 %v3670
  %v4335 = vunpack.c.l.b16 %v3671
  %v4336 = vunpack.c.h.b16 %v3671
  %v4337 = vunpack.c.l.b16 %v3672
  %v4338 = vunpack.c.h.b16 %v3672
  %v4339 = vunpack.c.l.b16 %v3673
  %v4340 = vunpack.c.h.b16 %v3673
  %v4341 = vunpack.c.l.b16 %v3674
  %v4342 = vunpack.c.h.b16 %v3674
  %v4343 = vunpack.c.l.b16 %v3675
  %v4344 = vunpack.c.h.b16 %v3675
  %v4345 = vunpack.c.l.b16 %v3676
  %v4346 = vunpack.c.h.b16 %v3676
  %v4347 = vunpack.c.l.b16 %v3677
  %v4348 = vunpack.c.h.b16 %v3677
  %v4349 = vunpack.c.l.b16 %v3678
  %v4350 = vunpack.c.h.b16 %v3678
  %v4351 = vpack.c.b16 %v3979, %v3967
  %v4352 = vpack.c.b16 %v3980, %v3968
  %v4353 = vpack.c.b16 %v3981, %v3969
  %v4354 = vpack.c.b16 %v3982, %v3970
  %v4355 = vpack.c.b16 %v3983, %v3971
  %v4356 = vpack.c.b16 %v3984, %v3972
  %v4357 = vpack.c.b16 %v3985, %v3973
  %v4358 = vpack.c.b16 %v3986, %v3974
  %v4359 = vpack.c.b16 %v3987, %v3975
  %v4360 = vpack.c.b16 %v3988, %v3976
  %v4361 = vpack.c.b16 %v3989, %v3977
  %v4362 = vpack.c.b16 %v3990, %v3978
  %v4363 = vpack.c.b16 %v4003, %v3991
  %v4364 = vpack.c.b16 %v4004, %v3992
  %v4365 = vpack.c.b16 %v4005, %v3993
  %v4366 = vpack.c.b16 %v4006, %v3994
  %v4367 = vpack.c.b16 %v4007, %v3995
  %v4368 = vpack.c.b16 %v4008, %v3996
  %v4369 = vpack.c.b16 %v4009, %v3997
  %v4370 = vpack.c.b16 %v4010, %v3998
  %v4371 = vpack.c.b16 %v4011, %v3999
  %v4372 = vpack.c.b16 %v4012, %v4000
  %v4373 = vpack.c.b16 %v4013, %v4001
  %v4374 = vpack.c.b16 %v4014, %v4002
  %v4375 = vpack.c.b16 %v4027, %v4015
  %v4376 = vpack.c.b16 %v4028, %v4016
  %v4377 = vpack.c.b16 %v4029, %v4017
  %v4378 = vpack.c.b16 %v4030, %v4018
  %v4379 = vpack.c.b16 %v4031, %v4019
  %v4380 = vpack.c.b16 %v4032, %v4020
  %v4381 = vpack.c.b16 %v4033, %v4021
  %v4382 = vpack.c.b16 %v4034, %v4022
  %v4383 = vpack.c.b16 %v4035, %v4023
  %v4384 = vpack.c.b16 %v4036, %v4024
  %v4385 = vpack.c.b16 %v4037, %v4025
  %v4386 = vpack.c.b16 %v4038, %v4026
  %v4387 = vpack.c.b16 %v4051, %v4039
  %v4388 = vpack.c.b16 %v4052, %v4040
  %v4389 = vpack.c.b16 %v4053, %v4041
  %v4390 = vpack.c.b16 %v4054, %v4042
  %v4391 = vpack.c.b16 %v4055, %v4043
  %v4392 = vpack.c.b16 %v4056, %v4044
  %v4393 = vpack.c.b16 %v4057, %v4045
  %v4394 = vpack.c.b16 %v4058, %v4046
  %v4395 = vpack.c.b16 %v4059, %v4047
  %v4396 = vpack.c.b16 %v4060, %v4048
  %v4397 = vpack.c.b16 %v4061, %v4049
  %v4398 = vpack.c.b16 %v4062, %v4050
  %v4399 = vpack.c.b16 %v4075, %v4063
  %v4400 = vpack.c.b16 %v4076, %v4064
  %v4401 = vpack.c.b16 %v4077, %v4065
  %v4402 = vpack.c.b16 %v4078, %v4066
  %v4403 = vpack.c.b16 %v4079, %v4067
  %v4404 = vpack.c.b16 %v4080, %v4068
  %v4405 = vpack.c.b16 %v4081, %v4069
  %v4406 = vpack.c.b16 %v4082, %v4070
  %v4407 = vpack.c.b16 %v4083, %v4071
  %v4408 = vpack.c.b16 %v4084, %v4072
  %v4409 = vpack.c.b16 %v4085, %v4073
  %v4410 = vpack.c.b16 %v4086, %v4074
  %v4411 = vpack.c.b16 %v4099, %v4087
  %v4412 = vpack.c.b16 %v4100, %v4088
  %v4413 = vpack.c.b16 %v4101, %v4089
  %v4414 = vpack.c.b16 %v4102, %v4090
  %v4415 = vpack.c.b16 %v4103, %v4091
  %v4416 = vpack.c.b16 %v4104, %v4092
  %v4417 = vpack.c.b16 %v4105, %v4093
  %v4418 = vpack.c.b16 %v4106, %v4094
  %v4419 = vpack.c.b16 %v4107, %v4095
  %v4420 = vpack.c.b16 %v4108, %v4096
  %v4421 = vpack.c.b16 %v4109, %v4097
  %v4422 = vpack.c.b16 %v4110, %v4098
  %v4423 = vpack.c.b16 %v4123, %v4111
  %v4424 = vpack.c.b16 %v4124, %v4112
  %v4425 = vpack.c.b16 %v4125, %v4113
  %v4426 = vpack.c.b16 %v4126, %v4114
  %v4427 = vpack.c.b16 %v4127, %v4115
  %v4428 = vpack.c.b16 %v4128, %v4116
  %v4429 = vpack.c.b16 %v4129, %v4117
  %v4430 = vpack.c.b16 %v4130, %v4118
  %v4431 = vpack.c.b16 %v4131, %v4119
  %v4432 = vpack.c.b16 %v4132, %v4120
  %v4433 = vpack.c.b16 %v4133, %v4121
  %v4434 = vpack.c.b16 %v4134, %v4122
  %v4435 = vpack.c.b16 %v4147, %v4135
  %v4436 = vpack.c.b16 %v4148, %v4136
  %v4437 = vpack.c.b16 %v4149, %v4137
  %v4438 = vpack.c.b16 %v4150, %v4138
  %v4439 = vpack.c.b16 %v4151, %v4139
  %v4440 = vpack.c.b16 %v4152, %v4140
  %v4441 = vpack.c.b16 %v4153, %v4141
  %v4442 = vpack.c.b16 %v4154, %v4142
  %v4443 = vpack.c.b16 %v4155, %v4143
  %v4444 = vpack.c.b16 %v4156, %v4144
  %v4445 = vpack.c.b16 %v4157, %v4145
  %v4446 = vpack.c.b16 %v4158, %v4146
  %v4447 = vpack.c.b16 %v4171, %v4159
  %v4448 = vpack.c.b16 %v4172, %v4160
  %v4449 = vpack.c.b16 %v4173, %v4161
  %v4450 = vpack.c.b16 %v4174, %v4162
  %v4451 = vpack.c.b16 %v4175, %v4163
  %v4452 = vpack.c.b16 %v4176, %v4164
  %v4453 = vpack.c.b16 %v4177, %v4165
  %v4454 = vpack.c.b16 %v4178, %v4166
  %v4455 = vpack.c.b16 %v4179, %v4167
  %v4456 = vpack.c.b16 %v4180, %v4168
  %v4457 = vpack.c.b16 %v4181, %v4169
  %v4458 = vpack.c.b16 %v4182, %v4170
  %v4459 = vpack.c.b16 %v4195, %v4183
  %v4460 = vpack.c.b16 %v4196, %v4184
  %v4461 = vpack.c.b16 %v4197, %v4185
  %v4462 = vpack.c.b16 %v4198, %v4186
  %v4463 = vpack.c.b16 %v4199, %v4187
  %v4464 = vpack.c.b16 %v4200, %v4188
  %v4465 = vpack.c.b16 %v4201, %v4189
  %v4466 = vpack.c.b16 %v4202, %v4190
  %v4467 = vpack.c.b16 %v4203, %v4191
  %v4468 = vpack.c.b16 %v4204, %v4192
  %v4469 = vpack.c.b16 %v4205, %v4193
  %v4470 = vpack.c.b16 %v4206, %v4194
  %v4471 = vpack.c.b16 %v4219, %v4207
  %v4472 = vpack.c.b16 %v4220, %v4208
  %v4473 = vpack.c.b16 %v4221, %v4209
  %v4474 = vpack.c.b16 %v4222, %v4210
  %v4475 = vpack.c.b16 %v4223, %v4211
  %v4476 = vpack.c.b16 %v4224, %v4212
  %v4477 = vpack.c.b16 %v4225, %v4213
  %v4478 = vpack.c.b16 %v4226, %v4214
  %v4479 = vpack.c.b16 %v4227, %v4215
  %v4480 = vpack.c.b16 %v4228, %v4216
  %v4481 = vpack.c.b16 %v4229, %v4217
  %v4482 = vpack.c.b16 %v4230, %v4218
  %v4483 = vpack.c.b16 %v4243, %v4231
  %v4484 = vpack.c.b16 %v4244, %v4232
  %v4485 = vpack.c.b16 %v4245, %v4233
  %v4486 = vpack.c.b16 %v4246, %v4234
  %v4487 = vpack.c.b16 %v4247, %v4235
  %v4488 = vpack.c.b16 %v4248, %v4236
  %v4489 = vpack.c.b16 %v4249, %v4237
  %v4490 = vpack.c.b16 %v4250, %v4238
  %v4491 = vpack.c.b16 %v4251, %v4239
  %v4492 = vpack.c.b16 %v4252, %v4240
  %v4493 = vpack.c.b16 %v4253, %v4241
  %v4494 = vpack.c.b16 %v4254, %v4242
  %v4495 = vpack.c.b16 %v4267, %v4255
  %v4496 = vpack.c.b16 %v4268, %v4256
  %v4497 = vpack.c.b16 %v4269, %v4257
  %v4498 = vpack.c.b16 %v4270, %v4258
  %v4499 = vpack.c.b16 %v4271, %v4259
  %v4500 = vpack.c.b16 %v4272, %v4260
  %v4501 = vpack.c.b16 %v4273, %v4261
  %v4502 = vpack.c.b16 %v4274, %v4262
  %v4503 = vpack.c.b16 %v4275, %v4263
  %v4504 = vpack.c.b16 %v4276, %v4264
  %v4505 = vpack.c.b16 %v4277, %v4265
  %v4506 = vpack.c.b16 %v4278, %v4266
  %v4507 = vpack.c.b16 %v4291, %v4279
  %v4508 = vpack.c.b16 %v4292, %v4280
  %v4509 = vpack.c.b16 %v4293, %v4281
  %v4510 = vpack.c.b16 %v4294, %v4282
  %v4511 = vpack.c.b16 %v4295, %v4283
  %v4512 = vpack.c.b16 %v4296, %v4284
  %v4513 = vpack.c.b16 %v4297, %v4285
  %v4514 = vpack.c.b16 %v4298, %v4286
  %v4515 = vpack.c.b16 %v4299, %v4287
  %v4516 = vpack.c.b16 %v4300, %v4288
  %v4517 = vpack.c.b16 %v4301, %v4289
  %v4518 = vpack.c.b16 %v4302, %v4290
  %v4519 = vpack.c.b16 %v4315, %v4303
  %v4520 = vpack.c.b16 %v4316, %v4304
  %v4521 = vpack.c.b16 %v4317, %v4305
  %v4522 = vpack.c.b16 %v4318, %v4306
  %v4523 = vpack.c.b16 %v4319, %v4307
  %v4524 = vpack.c.b16 %v4320, %v4308
  %v4525 = vpack.c.b16 %v4321, %v4309
  %v4526 = vpack.c.b16 %v4322, %v4310
  %v4527 = vpack.c.b16 %v4323, %v4311
  %v4528 = vpack.c.b16 %v4324, %v4312
  %v4529 = vpack.c.b16 %v4325, %v4313
  %v4530 = vpack.c.b16 %v4326, %v4314
  %v4531 = vpack.c.b16 %v4339, %v4327
  %v4532 = vpack.c.b16 %v4340, %v4328
  %v4533 = vpack.c.b16 %v4341, %v4329
  %v4534 = vpack.c.b16 %v4342, %v4330
  %v4535 = vpack.c.b16 %v4343, %v4331
  %v4536 = vpack.c.b16 %v4344, %v4332
  %v4537 = vpack.c.b16 %v4345, %v4333
  %v4538 = vpack.c.b16 %v4346, %v4334
  %v4539 = vpack.c.b16 %v4347, %v4335
  %v4540 = vpack.c.b16 %v4348, %v4336
  %v4541 = vpack.c.b16 %v4349, %v4337
  %v4542 = vpack.c.b16 %v4350, %v4338
  %4735 = vmatpush.bf16.msra.mxu0 %v3686
  %4736 = vmatpush.bf16.msra.mxu0 %v3685
  %4737 = vmatpush.bf16.msra.mxu0 %v3684
  %4738 = vmatpush.bf16.msra.mxu0 %v3683
  %4739 = vmatpush.bf16.msra.mxu0 %v3682
  %4740 = vmatpush.bf16.msra.mxu0 %v3681
  %4741 = vmatpush.bf16.msra.mxu0 %v3680
  %4742 = vmatpush.bf16.msra.mxu0 %v3679
  %4743 = vmatmul.bf16.gmra.mxu0 %v4351
  %v4744 = vpop.f32.mrf.mxu0
  %v4745 = vadd.f32 0.0, %v4744
  %v4746 = vpop.f32.mrf.mxu0
  %v4747 = vadd.f32 0.0, %v4746
  %4748 = vmatmul.bf16.gmra.mxu0 %v4363
  %v4749 = vpop.f32.mrf.mxu0
  %v4750 = vadd.f32 0.0, %v4749
  %v4751 = vpop.f32.mrf.mxu0
  %v4752 = vadd.f32 0.0, %v4751
  %4753 = vmatmul.bf16.gmra.mxu0 %v4375
  %v4754 = vpop.f32.mrf.mxu0
  %v4755 = vadd.f32 0.0, %v4754
  %v4756 = vpop.f32.mrf.mxu0
  %v4757 = vadd.f32 0.0, %v4756
  %4758 = vmatmul.bf16.gmra.mxu0 %v4387
  %v4759 = vpop.f32.mrf.mxu0
  %v4760 = vadd.f32 0.0, %v4759
  %v4761 = vpop.f32.mrf.mxu0
  %v4762 = vadd.f32 0.0, %v4761
  %4763 = vmatmul.bf16.gmra.mxu0 %v4399
  %v4764 = vpop.f32.mrf.mxu0
  %v4765 = vadd.f32 0.0, %v4764
  %v4766 = vpop.f32.mrf.mxu0
  %v4767 = vadd.f32 0.0, %v4766
  %4768 = vmatmul.bf16.gmra.mxu0 %v4411
  %v4769 = vpop.f32.mrf.mxu0
  %v4770 = vadd.f32 0.0, %v4769
  %v4771 = vpop.f32.mrf.mxu0
  %v4772 = vadd.f32 0.0, %v4771
  %4773 = vmatmul.bf16.gmra.mxu0 %v4423
  %v4774 = vpop.f32.mrf.mxu0
  %v4775 = vadd.f32 0.0, %v4774
  %v4776 = vpop.f32.mrf.mxu0
  %v4777 = vadd.f32 0.0, %v4776
  %4778 = vmatmul.bf16.gmra.mxu0 %v4435
  %v4779 = vpop.f32.mrf.mxu0
  %v4780 = vadd.f32 0.0, %v4779
  %v4781 = vpop.f32.mrf.mxu0
  %v4782 = vadd.f32 0.0, %v4781
  %4783 = vmatmul.bf16.gmra.mxu0 %v4447
  %v4784 = vpop.f32.mrf.mxu0
  %v4785 = vadd.f32 0.0, %v4784
  %v4786 = vpop.f32.mrf.mxu0
  %v4787 = vadd.f32 0.0, %v4786
  %4788 = vmatmul.bf16.gmra.mxu0 %v4459
  %v4789 = vpop.f32.mrf.mxu0
  %v4790 = vadd.f32 0.0, %v4789
  %v4791 = vpop.f32.mrf.mxu0
  %v4792 = vadd.f32 0.0, %v4791
  %4793 = vmatmul.bf16.gmra.mxu0 %v4471
  %v4794 = vpop.f32.mrf.mxu0
  %v4795 = vadd.f32 0.0, %v4794
  %v4796 = vpop.f32.mrf.mxu0
  %v4797 = vadd.f32 0.0, %v4796
  %4798 = vmatmul.bf16.gmra.mxu0 %v4483
  %v4799 = vpop.f32.mrf.mxu0
  %v4800 = vadd.f32 0.0, %v4799
  %v4801 = vpop.f32.mrf.mxu0
  %v4802 = vadd.f32 0.0, %v4801
  %4803 = vmatmul.bf16.gmra.mxu0 %v4495
  %v4804 = vpop.f32.mrf.mxu0
  %v4805 = vadd.f32 0.0, %v4804
  %v4806 = vpop.f32.mrf.mxu0
  %v4807 = vadd.f32 0.0, %v4806
  %4808 = vmatmul.bf16.gmra.mxu0 %v4507
  %v4809 = vpop.f32.mrf.mxu0
  %v4810 = vadd.f32 0.0, %v4809
  %v4811 = vpop.f32.mrf.mxu0
  %v4812 = vadd.f32 0.0, %v4811
  %4813 = vmatmul.bf16.gmra.mxu0 %v4519
  %v4814 = vpop.f32.mrf.mxu0
  %v4815 = vadd.f32 0.0, %v4814
  %v4816 = vpop.f32.mrf.mxu0
  %v4817 = vadd.f32 0.0, %v4816
  %4818 = vmatmul.bf16.gmra.mxu0 %v4531
  %v4819 = vpop.f32.mrf.mxu0
  %v4820 = vadd.f32 0.0, %v4819
  %v4821 = vpop.f32.mrf.mxu0
  %v4822 = vadd.f32 0.0, %v4821
  %4823 = vdwg.mxu0
  %4824 = vmatpush.bf16.msra.mxu0 %v3694
  %4825 = vmatpush.bf16.msra.mxu0 %v3693
  %4826 = vmatpush.bf16.msra.mxu0 %v3692
  %4827 = vmatpush.bf16.msra.mxu0 %v3691
  %4828 = vmatpush.bf16.msra.mxu0 %v3690
  %4829 = vmatpush.bf16.msra.mxu0 %v3689
  %4830 = vmatpush.bf16.msra.mxu0 %v3688
  %4831 = vmatpush.bf16.msra.mxu0 %v3687
  %4832 = vmatmul.bf16.gmra.mxu0 %v4352
  %v4833 = vpop.f32.mrf.mxu0
  %v4834 = vadd.f32 %v4745, %v4833
  %v4835 = vpop.f32.mrf.mxu0
  %v4836 = vadd.f32 %v4747, %v4835
  %4837 = vmatmul.bf16.gmra.mxu0 %v4364
  %v4838 = vpop.f32.mrf.mxu0
  %v4839 = vadd.f32 %v4750, %v4838
  %v4840 = vpop.f32.mrf.mxu0
  %v4841 = vadd.f32 %v4752, %v4840
  %4842 = vmatmul.bf16.gmra.mxu0 %v4376
  %v4843 = vpop.f32.mrf.mxu0
  %v4844 = vadd.f32 %v4755, %v4843
  %v4845 = vpop.f32.mrf.mxu0
  %v4846 = vadd.f32 %v4757, %v4845
  %4847 = vmatmul.bf16.gmra.mxu0 %v4388
  %v4848 = vpop.f32.mrf.mxu0
  %v4849 = vadd.f32 %v4760, %v4848
  %v4850 = vpop.f32.mrf.mxu0
  %v4851 = vadd.f32 %v4762, %v4850
  %4852 = vmatmul.bf16.gmra.mxu0 %v4400
  %v4853 = vpop.f32.mrf.mxu0
  %v4854 = vadd.f32 %v4765, %v4853
  %v4855 = vpop.f32.mrf.mxu0
  %v4856 = vadd.f32 %v4767, %v4855
  %4857 = vmatmul.bf16.gmra.mxu0 %v4412
  %v4858 = vpop.f32.mrf.mxu0
  %v4859 = vadd.f32 %v4770, %v4858
  %v4860 = vpop.f32.mrf.mxu0
  %v4861 = vadd.f32 %v4772, %v4860
  %4862 = vmatmul.bf16.gmra.mxu0 %v4424
  %v4863 = vpop.f32.mrf.mxu0
  %v4864 = vadd.f32 %v4775, %v4863
  %v4865 = vpop.f32.mrf.mxu0
  %v4866 = vadd.f32 %v4777, %v4865
  %4867 = vmatmul.bf16.gmra.mxu0 %v4436
  %v4868 = vpop.f32.mrf.mxu0
  %v4869 = vadd.f32 %v4780, %v4868
  %v4870 = vpop.f32.mrf.mxu0
  %v4871 = vadd.f32 %v4782, %v4870
  %4872 = vmatmul.bf16.gmra.mxu0 %v4448
  %v4873 = vpop.f32.mrf.mxu0
  %v4874 = vadd.f32 %v4785, %v4873
  %v4875 = vpop.f32.mrf.mxu0
  %v4876 = vadd.f32 %v4787, %v4875
  %4877 = vmatmul.bf16.gmra.mxu0 %v4460
  %v4878 = vpop.f32.mrf.mxu0
  %v4879 = vadd.f32 %v4790, %v4878
  %v4880 = vpop.f32.mrf.mxu0
  %v4881 = vadd.f32 %v4792, %v4880
  %4882 = vmatmul.bf16.gmra.mxu0 %v4472
  %v4883 = vpop.f32.mrf.mxu0
  %v4884 = vadd.f32 %v4795, %v4883
  %v4885 = vpop.f32.mrf.mxu0
  %v4886 = vadd.f32 %v4797, %v4885
  %4887 = vmatmul.bf16.gmra.mxu0 %v4484
  %v4888 = vpop.f32.mrf.mxu0
  %v4889 = vadd.f32 %v4800, %v4888
  %v4890 = vpop.f32.mrf.mxu0
  %v4891 = vadd.f32 %v4802, %v4890
  %4892 = vmatmul.bf16.gmra.mxu0 %v4496
  %v4893 = vpop.f32.mrf.mxu0
  %v4894 = vadd.f32 %v4805, %v4893
  %v4895 = vpop.f32.mrf.mxu0
  %v4896 = vadd.f32 %v4807, %v4895
  %4897 = vmatmul.bf16.gmra.mxu0 %v4508
  %v4898 = vpop.f32.mrf.mxu0
  %v4899 = vadd.f32 %v4810, %v4898
  %v4900 = vpop.f32.mrf.mxu0
  %v4901 = vadd.f32 %v4812, %v4900
  %4902 = vmatmul.bf16.gmra.mxu0 %v4520
  %v4903 = vpop.f32.mrf.mxu0
  %v4904 = vadd.f32 %v4815, %v4903
  %v4905 = vpop.f32.mrf.mxu0
  %v4906 = vadd.f32 %v4817, %v4905
  %4907 = vmatmul.bf16.gmra.mxu0 %v4532
  %v4908 = vpop.f32.mrf.mxu0
  %v4909 = vadd.f32 %v4820, %v4908
  %v4910 = vpop.f32.mrf.mxu0
  %v4911 = vadd.f32 %v4822, %v4910
  %4912 = vdwg.mxu0
  %4913 = vmatpush.bf16.msra.mxu0 %v3702
  %4914 = vmatpush.bf16.msra.mxu0 %v3701
  %4915 = vmatpush.bf16.msra.mxu0 %v3700
  %4916 = vmatpush.bf16.msra.mxu0 %v3699
  %4917 = vmatpush.bf16.msra.mxu0 %v3698
  %4918 = vmatpush.bf16.msra.mxu0 %v3697
  %4919 = vmatpush.bf16.msra.mxu0 %v3696
  %4920 = vmatpush.bf16.msra.mxu0 %v3695
  %4921 = vmatmul.bf16.gmra.mxu0 %v4353
  %v4922 = vpop.f32.mrf.mxu0
  %v4923 = vadd.f32 %v4834, %v4922
  %v4924 = vpop.f32.mrf.mxu0
  %v4925 = vadd.f32 %v4836, %v4924
  %4926 = vmatmul.bf16.gmra.mxu0 %v4365
  %v4927 = vpop.f32.mrf.mxu0
  %v4928 = vadd.f32 %v4839, %v4927
  %v4929 = vpop.f32.mrf.mxu0
  %v4930 = vadd.f32 %v4841, %v4929
  %4931 = vmatmul.bf16.gmra.mxu0 %v4377
  %v4932 = vpop.f32.mrf.mxu0
  %v4933 = vadd.f32 %v4844, %v4932
  %v4934 = vpop.f32.mrf.mxu0
  %v4935 = vadd.f32 %v4846, %v4934
  %4936 = vmatmul.bf16.gmra.mxu0 %v4389
  %v4937 = vpop.f32.mrf.mxu0
  %v4938 = vadd.f32 %v4849, %v4937
  %v4939 = vpop.f32.mrf.mxu0
  %v4940 = vadd.f32 %v4851, %v4939
  %4941 = vmatmul.bf16.gmra.mxu0 %v4401
  %v4942 = vpop.f32.mrf.mxu0
  %v4943 = vadd.f32 %v4854, %v4942
  %v4944 = vpop.f32.mrf.mxu0
  %v4945 = vadd.f32 %v4856, %v4944
  %4946 = vmatmul.bf16.gmra.mxu0 %v4413
  %v4947 = vpop.f32.mrf.mxu0
  %v4948 = vadd.f32 %v4859, %v4947
  %v4949 = vpop.f32.mrf.mxu0
  %v4950 = vadd.f32 %v4861, %v4949
  %4951 = vmatmul.bf16.gmra.mxu0 %v4425
  %v4952 = vpop.f32.mrf.mxu0
  %v4953 = vadd.f32 %v4864, %v4952
  %v4954 = vpop.f32.mrf.mxu0
  %v4955 = vadd.f32 %v4866, %v4954
  %4956 = vmatmul.bf16.gmra.mxu0 %v4437
  %v4957 = vpop.f32.mrf.mxu0
  %v4958 = vadd.f32 %v4869, %v4957
  %v4959 = vpop.f32.mrf.mxu0
  %v4960 = vadd.f32 %v4871, %v4959
  %4961 = vmatmul.bf16.gmra.mxu0 %v4449
  %v4962 = vpop.f32.mrf.mxu0
  %v4963 = vadd.f32 %v4874, %v4962
  %v4964 = vpop.f32.mrf.mxu0
  %v4965 = vadd.f32 %v4876, %v4964
  %4966 = vmatmul.bf16.gmra.mxu0 %v4461
  %v4967 = vpop.f32.mrf.mxu0
  %v4968 = vadd.f32 %v4879, %v4967
  %v4969 = vpop.f32.mrf.mxu0
  %v4970 = vadd.f32 %v4881, %v4969
  %4971 = vmatmul.bf16.gmra.mxu0 %v4473
  %v4972 = vpop.f32.mrf.mxu0
  %v4973 = vadd.f32 %v4884, %v4972
  %v4974 = vpop.f32.mrf.mxu0
  %v4975 = vadd.f32 %v4886, %v4974
  %4976 = vmatmul.bf16.gmra.mxu0 %v4485
  %v4977 = vpop.f32.mrf.mxu0
  %v4978 = vadd.f32 %v4889, %v4977
  %v4979 = vpop.f32.mrf.mxu0
  %v4980 = vadd.f32 %v4891, %v4979
  %4981 = vmatmul.bf16.gmra.mxu0 %v4497
  %v4982 = vpop.f32.mrf.mxu0
  %v4983 = vadd.f32 %v4894, %v4982
  %v4984 = vpop.f32.mrf.mxu0
  %v4985 = vadd.f32 %v4896, %v4984
  %4986 = vmatmul.bf16.gmra.mxu0 %v4509
  %v4987 = vpop.f32.mrf.mxu0
  %v4988 = vadd.f32 %v4899, %v4987
  %v4989 = vpop.f32.mrf.mxu0
  %v4990 = vadd.f32 %v4901, %v4989
  %4991 = vmatmul.bf16.gmra.mxu0 %v4521
  %v4992 = vpop.f32.mrf.mxu0
  %v4993 = vadd.f32 %v4904, %v4992
  %v4994 = vpop.f32.mrf.mxu0
  %v4995 = vadd.f32 %v4906, %v4994
  %4996 = vmatmul.bf16.gmra.mxu0 %v4533
  %v4997 = vpop.f32.mrf.mxu0
  %v4998 = vadd.f32 %v4909, %v4997
  %v4999 = vpop.f32.mrf.mxu0
  %v5000 = vadd.f32 %v4911, %v4999
  %5001 = vdwg.mxu0
  %5002 = vmatpush.bf16.msra.mxu0 %v3710
  %5003 = vmatpush.bf16.msra.mxu0 %v3709
  %5004 = vmatpush.bf16.msra.mxu0 %v3708
  %5005 = vmatpush.bf16.msra.mxu0 %v3707
  %5006 = vmatpush.bf16.msra.mxu0 %v3706
  %5007 = vmatpush.bf16.msra.mxu0 %v3705
  %5008 = vmatpush.bf16.msra.mxu0 %v3704
  %5009 = vmatpush.bf16.msra.mxu0 %v3703
  %5010 = vmatmul.bf16.gmra.mxu0 %v4354
  %v5011 = vpop.f32.mrf.mxu0
  %v5012 = vadd.f32 %v4923, %v5011
  %v5013 = vpop.f32.mrf.mxu0
  %v5014 = vadd.f32 %v4925, %v5013
  %5015 = vmatmul.bf16.gmra.mxu0 %v4366
  %v5016 = vpop.f32.mrf.mxu0
  %v5017 = vadd.f32 %v4928, %v5016
  %v5018 = vpop.f32.mrf.mxu0
  %v5019 = vadd.f32 %v4930, %v5018
  %5020 = vmatmul.bf16.gmra.mxu0 %v4378
  %v5021 = vpop.f32.mrf.mxu0
  %v5022 = vadd.f32 %v4933, %v5021
  %v5023 = vpop.f32.mrf.mxu0
  %v5024 = vadd.f32 %v4935, %v5023
  %5025 = vmatmul.bf16.gmra.mxu0 %v4390
  %v5026 = vpop.f32.mrf.mxu0
  %v5027 = vadd.f32 %v4938, %v5026
  %v5028 = vpop.f32.mrf.mxu0
  %v5029 = vadd.f32 %v4940, %v5028
  %5030 = vmatmul.bf16.gmra.mxu0 %v4402
  %v5031 = vpop.f32.mrf.mxu0
  %v5032 = vadd.f32 %v4943, %v5031
  %v5033 = vpop.f32.mrf.mxu0
  %v5034 = vadd.f32 %v4945, %v5033
  %5035 = vmatmul.bf16.gmra.mxu0 %v4414
  %v5036 = vpop.f32.mrf.mxu0
  %v5037 = vadd.f32 %v4948, %v5036
  %v5038 = vpop.f32.mrf.mxu0
  %v5039 = vadd.f32 %v4950, %v5038
  %5040 = vmatmul.bf16.gmra.mxu0 %v4426
  %v5041 = vpop.f32.mrf.mxu0
  %v5042 = vadd.f32 %v4953, %v5041
  %v5043 = vpop.f32.mrf.mxu0
  %v5044 = vadd.f32 %v4955, %v5043
  %5045 = vmatmul.bf16.gmra.mxu0 %v4438
  %v5046 = vpop.f32.mrf.mxu0
  %v5047 = vadd.f32 %v4958, %v5046
  %v5048 = vpop.f32.mrf.mxu0
  %v5049 = vadd.f32 %v4960, %v5048
  %5050 = vmatmul.bf16.gmra.mxu0 %v4450
  %v5051 = vpop.f32.mrf.mxu0
  %v5052 = vadd.f32 %v4963, %v5051
  %v5053 = vpop.f32.mrf.mxu0
  %v5054 = vadd.f32 %v4965, %v5053
  %5055 = vmatmul.bf16.gmra.mxu0 %v4462
  %v5056 = vpop.f32.mrf.mxu0
  %v5057 = vadd.f32 %v4968, %v5056
  %v5058 = vpop.f32.mrf.mxu0
  %v5059 = vadd.f32 %v4970, %v5058
  %5060 = vmatmul.bf16.gmra.mxu0 %v4474
  %v5061 = vpop.f32.mrf.mxu0
  %v5062 = vadd.f32 %v4973, %v5061
  %v5063 = vpop.f32.mrf.mxu0
  %v5064 = vadd.f32 %v4975, %v5063
  %5065 = vmatmul.bf16.gmra.mxu0 %v4486
  %v5066 = vpop.f32.mrf.mxu0
  %v5067 = vadd.f32 %v4978, %v5066
  %v5068 = vpop.f32.mrf.mxu0
  %v5069 = vadd.f32 %v4980, %v5068
  %5070 = vmatmul.bf16.gmra.mxu0 %v4498
  %v5071 = vpop.f32.mrf.mxu0
  %v5072 = vadd.f32 %v4983, %v5071
  %v5073 = vpop.f32.mrf.mxu0
  %v5074 = vadd.f32 %v4985, %v5073
  %5075 = vmatmul.bf16.gmra.mxu0 %v4510
  %v5076 = vpop.f32.mrf.mxu0
  %v5077 = vadd.f32 %v4988, %v5076
  %v5078 = vpop.f32.mrf.mxu0
  %v5079 = vadd.f32 %v4990, %v5078
  %5080 = vmatmul.bf16.gmra.mxu0 %v4522
  %v5081 = vpop.f32.mrf.mxu0
  %v5082 = vadd.f32 %v4993, %v5081
  %v5083 = vpop.f32.mrf.mxu0
  %v5084 = vadd.f32 %v4995, %v5083
  %5085 = vmatmul.bf16.gmra.mxu0 %v4534
  %v5086 = vpop.f32.mrf.mxu0
  %v5087 = vadd.f32 %v4998, %v5086
  %v5088 = vpop.f32.mrf.mxu0
  %v5089 = vadd.f32 %v5000, %v5088
  %5090 = vdwg.mxu0
  %5091 = vmatpush.bf16.msra.mxu0 %v3718
  %5092 = vmatpush.bf16.msra.mxu0 %v3717
  %5093 = vmatpush.bf16.msra.mxu0 %v3716
  %5094 = vmatpush.bf16.msra.mxu0 %v3715
  %5095 = vmatpush.bf16.msra.mxu0 %v3714
  %5096 = vmatpush.bf16.msra.mxu0 %v3713
  %5097 = vmatpush.bf16.msra.mxu0 %v3712
  %5098 = vmatpush.bf16.msra.mxu0 %v3711
  %5099 = vmatmul.bf16.gmra.mxu0 %v4355
  %v5100 = vpop.f32.mrf.mxu0
  %v5101 = vadd.f32 %v5012, %v5100
  %v5102 = vpop.f32.mrf.mxu0
  %v5103 = vadd.f32 %v5014, %v5102
  %5104 = vmatmul.bf16.gmra.mxu0 %v4367
  %v5105 = vpop.f32.mrf.mxu0
  %v5106 = vadd.f32 %v5017, %v5105
  %v5107 = vpop.f32.mrf.mxu0
  %v5108 = vadd.f32 %v5019, %v5107
  %5109 = vmatmul.bf16.gmra.mxu0 %v4379
  %v5110 = vpop.f32.mrf.mxu0
  %v5111 = vadd.f32 %v5022, %v5110
  %v5112 = vpop.f32.mrf.mxu0
  %v5113 = vadd.f32 %v5024, %v5112
  %5114 = vmatmul.bf16.gmra.mxu0 %v4391
  %v5115 = vpop.f32.mrf.mxu0
  %v5116 = vadd.f32 %v5027, %v5115
  %v5117 = vpop.f32.mrf.mxu0
  %v5118 = vadd.f32 %v5029, %v5117
  %5119 = vmatmul.bf16.gmra.mxu0 %v4403
  %v5120 = vpop.f32.mrf.mxu0
  %v5121 = vadd.f32 %v5032, %v5120
  %v5122 = vpop.f32.mrf.mxu0
  %v5123 = vadd.f32 %v5034, %v5122
  %5124 = vmatmul.bf16.gmra.mxu0 %v4415
  %v5125 = vpop.f32.mrf.mxu0
  %v5126 = vadd.f32 %v5037, %v5125
  %v5127 = vpop.f32.mrf.mxu0
  %v5128 = vadd.f32 %v5039, %v5127
  %5129 = vmatmul.bf16.gmra.mxu0 %v4427
  %v5130 = vpop.f32.mrf.mxu0
  %v5131 = vadd.f32 %v5042, %v5130
  %v5132 = vpop.f32.mrf.mxu0
  %v5133 = vadd.f32 %v5044, %v5132
  %5134 = vmatmul.bf16.gmra.mxu0 %v4439
  %v5135 = vpop.f32.mrf.mxu0
  %v5136 = vadd.f32 %v5047, %v5135
  %v5137 = vpop.f32.mrf.mxu0
  %v5138 = vadd.f32 %v5049, %v5137
  %5139 = vmatmul.bf16.gmra.mxu0 %v4451
  %v5140 = vpop.f32.mrf.mxu0
  %v5141 = vadd.f32 %v5052, %v5140
  %v5142 = vpop.f32.mrf.mxu0
  %v5143 = vadd.f32 %v5054, %v5142
  %5144 = vmatmul.bf16.gmra.mxu0 %v4463
  %v5145 = vpop.f32.mrf.mxu0
  %v5146 = vadd.f32 %v5057, %v5145
  %v5147 = vpop.f32.mrf.mxu0
  %v5148 = vadd.f32 %v5059, %v5147
  %5149 = vmatmul.bf16.gmra.mxu0 %v4475
  %v5150 = vpop.f32.mrf.mxu0
  %v5151 = vadd.f32 %v5062, %v5150
  %v5152 = vpop.f32.mrf.mxu0
  %v5153 = vadd.f32 %v5064, %v5152
  %5154 = vmatmul.bf16.gmra.mxu0 %v4487
  %v5155 = vpop.f32.mrf.mxu0
  %v5156 = vadd.f32 %v5067, %v5155
  %v5157 = vpop.f32.mrf.mxu0
  %v5158 = vadd.f32 %v5069, %v5157
  %5159 = vmatmul.bf16.gmra.mxu0 %v4499
  %v5160 = vpop.f32.mrf.mxu0
  %v5161 = vadd.f32 %v5072, %v5160
  %v5162 = vpop.f32.mrf.mxu0
  %v5163 = vadd.f32 %v5074, %v5162
  %5164 = vmatmul.bf16.gmra.mxu0 %v4511
  %v5165 = vpop.f32.mrf.mxu0
  %v5166 = vadd.f32 %v5077, %v5165
  %v5167 = vpop.f32.mrf.mxu0
  %v5168 = vadd.f32 %v5079, %v5167
  %5169 = vmatmul.bf16.gmra.mxu0 %v4523
  %v5170 = vpop.f32.mrf.mxu0
  %v5171 = vadd.f32 %v5082, %v5170
  %v5172 = vpop.f32.mrf.mxu0
  %v5173 = vadd.f32 %v5084, %v5172
  %5174 = vmatmul.bf16.gmra.mxu0 %v4535
  %v5175 = vpop.f32.mrf.mxu0
  %v5176 = vadd.f32 %v5087, %v5175
  %v5177 = vpop.f32.mrf.mxu0
  %v5178 = vadd.f32 %v5089, %v5177
  %5179 = vdwg.mxu0
  %5180 = vmatpush.bf16.msra.mxu0 %v3726
  %5181 = vmatpush.bf16.msra.mxu0 %v3725
  %5182 = vmatpush.bf16.msra.mxu0 %v3724
  %5183 = vmatpush.bf16.msra.mxu0 %v3723
  %5184 = vmatpush.bf16.msra.mxu0 %v3722
  %5185 = vmatpush.bf16.msra.mxu0 %v3721
  %5186 = vmatpush.bf16.msra.mxu0 %v3720
  %5187 = vmatpush.bf16.msra.mxu0 %v3719
  %5188 = vmatmul.bf16.gmra.mxu0 %v4356
  %v5189 = vpop.f32.mrf.mxu0
  %v5190 = vadd.f32 %v5101, %v5189
  %v5191 = vpop.f32.mrf.mxu0
  %v5192 = vadd.f32 %v5103, %v5191
  %5193 = vmatmul.bf16.gmra.mxu0 %v4368
  %v5194 = vpop.f32.mrf.mxu0
  %v5195 = vadd.f32 %v5106, %v5194
  %v5196 = vpop.f32.mrf.mxu0
  %v5197 = vadd.f32 %v5108, %v5196
  %5198 = vmatmul.bf16.gmra.mxu0 %v4380
  %v5199 = vpop.f32.mrf.mxu0
  %v5200 = vadd.f32 %v5111, %v5199
  %v5201 = vpop.f32.mrf.mxu0
  %v5202 = vadd.f32 %v5113, %v5201
  %5203 = vmatmul.bf16.gmra.mxu0 %v4392
  %v5204 = vpop.f32.mrf.mxu0
  %v5205 = vadd.f32 %v5116, %v5204
  %v5206 = vpop.f32.mrf.mxu0
  %v5207 = vadd.f32 %v5118, %v5206
  %5208 = vmatmul.bf16.gmra.mxu0 %v4404
  %v5209 = vpop.f32.mrf.mxu0
  %v5210 = vadd.f32 %v5121, %v5209
  %v5211 = vpop.f32.mrf.mxu0
  %v5212 = vadd.f32 %v5123, %v5211
  %5213 = vmatmul.bf16.gmra.mxu0 %v4416
  %v5214 = vpop.f32.mrf.mxu0
  %v5215 = vadd.f32 %v5126, %v5214
  %v5216 = vpop.f32.mrf.mxu0
  %v5217 = vadd.f32 %v5128, %v5216
  %5218 = vmatmul.bf16.gmra.mxu0 %v4428
  %v5219 = vpop.f32.mrf.mxu0
  %v5220 = vadd.f32 %v5131, %v5219
  %v5221 = vpop.f32.mrf.mxu0
  %v5222 = vadd.f32 %v5133, %v5221
  %5223 = vmatmul.bf16.gmra.mxu0 %v4440
  %v5224 = vpop.f32.mrf.mxu0
  %v5225 = vadd.f32 %v5136, %v5224
  %v5226 = vpop.f32.mrf.mxu0
  %v5227 = vadd.f32 %v5138, %v5226
  %5228 = vmatmul.bf16.gmra.mxu0 %v4452
  %v5229 = vpop.f32.mrf.mxu0
  %v5230 = vadd.f32 %v5141, %v5229
  %v5231 = vpop.f32.mrf.mxu0
  %v5232 = vadd.f32 %v5143, %v5231
  %5233 = vmatmul.bf16.gmra.mxu0 %v4464
  %v5234 = vpop.f32.mrf.mxu0
  %v5235 = vadd.f32 %v5146, %v5234
  %v5236 = vpop.f32.mrf.mxu0
  %v5237 = vadd.f32 %v5148, %v5236
  %5238 = vmatmul.bf16.gmra.mxu0 %v4476
  %v5239 = vpop.f32.mrf.mxu0
  %v5240 = vadd.f32 %v5151, %v5239
  %v5241 = vpop.f32.mrf.mxu0
  %v5242 = vadd.f32 %v5153, %v5241
  %5243 = vmatmul.bf16.gmra.mxu0 %v4488
  %v5244 = vpop.f32.mrf.mxu0
  %v5245 = vadd.f32 %v5156, %v5244
  %v5246 = vpop.f32.mrf.mxu0
  %v5247 = vadd.f32 %v5158, %v5246
  %5248 = vmatmul.bf16.gmra.mxu0 %v4500
  %v5249 = vpop.f32.mrf.mxu0
  %v5250 = vadd.f32 %v5161, %v5249
  %v5251 = vpop.f32.mrf.mxu0
  %v5252 = vadd.f32 %v5163, %v5251
  %5253 = vmatmul.bf16.gmra.mxu0 %v4512
  %v5254 = vpop.f32.mrf.mxu0
  %v5255 = vadd.f32 %v5166, %v5254
  %v5256 = vpop.f32.mrf.mxu0
  %v5257 = vadd.f32 %v5168, %v5256
  %5258 = vmatmul.bf16.gmra.mxu0 %v4524
  %v5259 = vpop.f32.mrf.mxu0
  %v5260 = vadd.f32 %v5171, %v5259
  %v5261 = vpop.f32.mrf.mxu0
  %v5262 = vadd.f32 %v5173, %v5261
  %5263 = vmatmul.bf16.gmra.mxu0 %v4536
  %v5264 = vpop.f32.mrf.mxu0
  %v5265 = vadd.f32 %v5176, %v5264
  %v5266 = vpop.f32.mrf.mxu0
  %v5267 = vadd.f32 %v5178, %v5266
  %5268 = vdwg.mxu0
  %5269 = vmatpush.bf16.msra.mxu0 %v3734
  %5270 = vmatpush.bf16.msra.mxu0 %v3733
  %5271 = vmatpush.bf16.msra.mxu0 %v3732
  %5272 = vmatpush.bf16.msra.mxu0 %v3731
  %5273 = vmatpush.bf16.msra.mxu0 %v3730
  %5274 = vmatpush.bf16.msra.mxu0 %v3729
  %5275 = vmatpush.bf16.msra.mxu0 %v3728
  %5276 = vmatpush.bf16.msra.mxu0 %v3727
  %5277 = vmatmul.bf16.gmra.mxu0 %v4357
  %v5278 = vpop.f32.mrf.mxu0
  %v5279 = vadd.f32 %v5190, %v5278
  %v5280 = vpop.f32.mrf.mxu0
  %v5281 = vadd.f32 %v5192, %v5280
  %5282 = vmatmul.bf16.gmra.mxu0 %v4369
  %v5283 = vpop.f32.mrf.mxu0
  %v5284 = vadd.f32 %v5195, %v5283
  %v5285 = vpop.f32.mrf.mxu0
  %v5286 = vadd.f32 %v5197, %v5285
  %5287 = vmatmul.bf16.gmra.mxu0 %v4381
  %v5288 = vpop.f32.mrf.mxu0
  %v5289 = vadd.f32 %v5200, %v5288
  %v5290 = vpop.f32.mrf.mxu0
  %v5291 = vadd.f32 %v5202, %v5290
  %5292 = vmatmul.bf16.gmra.mxu0 %v4393
  %v5293 = vpop.f32.mrf.mxu0
  %v5294 = vadd.f32 %v5205, %v5293
  %v5295 = vpop.f32.mrf.mxu0
  %v5296 = vadd.f32 %v5207, %v5295
  %5297 = vmatmul.bf16.gmra.mxu0 %v4405
  %v5298 = vpop.f32.mrf.mxu0
  %v5299 = vadd.f32 %v5210, %v5298
  %v5300 = vpop.f32.mrf.mxu0
  %v5301 = vadd.f32 %v5212, %v5300
  %5302 = vmatmul.bf16.gmra.mxu0 %v4417
  %v5303 = vpop.f32.mrf.mxu0
  %v5304 = vadd.f32 %v5215, %v5303
  %v5305 = vpop.f32.mrf.mxu0
  %v5306 = vadd.f32 %v5217, %v5305
  %5307 = vmatmul.bf16.gmra.mxu0 %v4429
  %v5308 = vpop.f32.mrf.mxu0
  %v5309 = vadd.f32 %v5220, %v5308
  %v5310 = vpop.f32.mrf.mxu0
  %v5311 = vadd.f32 %v5222, %v5310
  %5312 = vmatmul.bf16.gmra.mxu0 %v4441
  %v5313 = vpop.f32.mrf.mxu0
  %v5314 = vadd.f32 %v5225, %v5313
  %v5315 = vpop.f32.mrf.mxu0
  %v5316 = vadd.f32 %v5227, %v5315
  %5317 = vmatmul.bf16.gmra.mxu0 %v4453
  %v5318 = vpop.f32.mrf.mxu0
  %v5319 = vadd.f32 %v5230, %v5318
  %v5320 = vpop.f32.mrf.mxu0
  %v5321 = vadd.f32 %v5232, %v5320
  %5322 = vmatmul.bf16.gmra.mxu0 %v4465
  %v5323 = vpop.f32.mrf.mxu0
  %v5324 = vadd.f32 %v5235, %v5323
  %v5325 = vpop.f32.mrf.mxu0
  %v5326 = vadd.f32 %v5237, %v5325
  %5327 = vmatmul.bf16.gmra.mxu0 %v4477
  %v5328 = vpop.f32.mrf.mxu0
  %v5329 = vadd.f32 %v5240, %v5328
  %v5330 = vpop.f32.mrf.mxu0
  %v5331 = vadd.f32 %v5242, %v5330
  %5332 = vmatmul.bf16.gmra.mxu0 %v4489
  %v5333 = vpop.f32.mrf.mxu0
  %v5334 = vadd.f32 %v5245, %v5333
  %v5335 = vpop.f32.mrf.mxu0
  %v5336 = vadd.f32 %v5247, %v5335
  %5337 = vmatmul.bf16.gmra.mxu0 %v4501
  %v5338 = vpop.f32.mrf.mxu0
  %v5339 = vadd.f32 %v5250, %v5338
  %v5340 = vpop.f32.mrf.mxu0
  %v5341 = vadd.f32 %v5252, %v5340
  %5342 = vmatmul.bf16.gmra.mxu0 %v4513
  %v5343 = vpop.f32.mrf.mxu0
  %v5344 = vadd.f32 %v5255, %v5343
  %v5345 = vpop.f32.mrf.mxu0
  %v5346 = vadd.f32 %v5257, %v5345
  %5347 = vmatmul.bf16.gmra.mxu0 %v4525
  %v5348 = vpop.f32.mrf.mxu0
  %v5349 = vadd.f32 %v5260, %v5348
  %v5350 = vpop.f32.mrf.mxu0
  %v5351 = vadd.f32 %v5262, %v5350
  %5352 = vmatmul.bf16.gmra.mxu0 %v4537
  %v5353 = vpop.f32.mrf.mxu0
  %v5354 = vadd.f32 %v5265, %v5353
  %v5355 = vpop.f32.mrf.mxu0
  %v5356 = vadd.f32 %v5267, %v5355
  %5357 = vdwg.mxu0
  %5358 = vmatpush.bf16.msra.mxu0 %v3742
  %5359 = vmatpush.bf16.msra.mxu0 %v3741
  %5360 = vmatpush.bf16.msra.mxu0 %v3740
  %5361 = vmatpush.bf16.msra.mxu0 %v3739
  %5362 = vmatpush.bf16.msra.mxu0 %v3738
  %5363 = vmatpush.bf16.msra.mxu0 %v3737
  %5364 = vmatpush.bf16.msra.mxu0 %v3736
  %5365 = vmatpush.bf16.msra.mxu0 %v3735
  %5366 = vmatmul.bf16.gmra.mxu0 %v4358
  %v5367 = vpop.f32.mrf.mxu0
  %v5368 = vadd.f32 %v5279, %v5367
  %v5369 = vpop.f32.mrf.mxu0
  %v5370 = vadd.f32 %v5281, %v5369
  %5371 = vmatmul.bf16.gmra.mxu0 %v4370
  %v5372 = vpop.f32.mrf.mxu0
  %v5373 = vadd.f32 %v5284, %v5372
  %v5374 = vpop.f32.mrf.mxu0
  %v5375 = vadd.f32 %v5286, %v5374
  %5376 = vmatmul.bf16.gmra.mxu0 %v4382
  %v5377 = vpop.f32.mrf.mxu0
  %v5378 = vadd.f32 %v5289, %v5377
  %v5379 = vpop.f32.mrf.mxu0
  %v5380 = vadd.f32 %v5291, %v5379
  %5381 = vmatmul.bf16.gmra.mxu0 %v4394
  %v5382 = vpop.f32.mrf.mxu0
  %v5383 = vadd.f32 %v5294, %v5382
  %v5384 = vpop.f32.mrf.mxu0
  %v5385 = vadd.f32 %v5296, %v5384
  %5386 = vmatmul.bf16.gmra.mxu0 %v4406
  %v5387 = vpop.f32.mrf.mxu0
  %v5388 = vadd.f32 %v5299, %v5387
  %v5389 = vpop.f32.mrf.mxu0
  %v5390 = vadd.f32 %v5301, %v5389
  %5391 = vmatmul.bf16.gmra.mxu0 %v4418
  %v5392 = vpop.f32.mrf.mxu0
  %v5393 = vadd.f32 %v5304, %v5392
  %v5394 = vpop.f32.mrf.mxu0
  %v5395 = vadd.f32 %v5306, %v5394
  %5396 = vmatmul.bf16.gmra.mxu0 %v4430
  %v5397 = vpop.f32.mrf.mxu0
  %v5398 = vadd.f32 %v5309, %v5397
  %v5399 = vpop.f32.mrf.mxu0
  %v5400 = vadd.f32 %v5311, %v5399
  %5401 = vmatmul.bf16.gmra.mxu0 %v4442
  %v5402 = vpop.f32.mrf.mxu0
  %v5403 = vadd.f32 %v5314, %v5402
  %v5404 = vpop.f32.mrf.mxu0
  %v5405 = vadd.f32 %v5316, %v5404
  %5406 = vmatmul.bf16.gmra.mxu0 %v4454
  %v5407 = vpop.f32.mrf.mxu0
  %v5408 = vadd.f32 %v5319, %v5407
  %v5409 = vpop.f32.mrf.mxu0
  %v5410 = vadd.f32 %v5321, %v5409
  %5411 = vmatmul.bf16.gmra.mxu0 %v4466
  %v5412 = vpop.f32.mrf.mxu0
  %v5413 = vadd.f32 %v5324, %v5412
  %v5414 = vpop.f32.mrf.mxu0
  %v5415 = vadd.f32 %v5326, %v5414
  %5416 = vmatmul.bf16.gmra.mxu0 %v4478
  %v5417 = vpop.f32.mrf.mxu0
  %v5418 = vadd.f32 %v5329, %v5417
  %v5419 = vpop.f32.mrf.mxu0
  %v5420 = vadd.f32 %v5331, %v5419
  %5421 = vmatmul.bf16.gmra.mxu0 %v4490
  %v5422 = vpop.f32.mrf.mxu0
  %v5423 = vadd.f32 %v5334, %v5422
  %v5424 = vpop.f32.mrf.mxu0
  %v5425 = vadd.f32 %v5336, %v5424
  %5426 = vmatmul.bf16.gmra.mxu0 %v4502
  %v5427 = vpop.f32.mrf.mxu0
  %v5428 = vadd.f32 %v5339, %v5427
  %v5429 = vpop.f32.mrf.mxu0
  %v5430 = vadd.f32 %v5341, %v5429
  %5431 = vmatmul.bf16.gmra.mxu0 %v4514
  %v5432 = vpop.f32.mrf.mxu0
  %v5433 = vadd.f32 %v5344, %v5432
  %v5434 = vpop.f32.mrf.mxu0
  %v5435 = vadd.f32 %v5346, %v5434
  %5436 = vmatmul.bf16.gmra.mxu0 %v4526
  %v5437 = vpop.f32.mrf.mxu0
  %v5438 = vadd.f32 %v5349, %v5437
  %v5439 = vpop.f32.mrf.mxu0
  %v5440 = vadd.f32 %v5351, %v5439
  %5441 = vmatmul.bf16.gmra.mxu0 %v4538
  %v5442 = vpop.f32.mrf.mxu0
  %v5443 = vadd.f32 %v5354, %v5442
  %v5444 = vpop.f32.mrf.mxu0
  %v5445 = vadd.f32 %v5356, %v5444
  %5446 = vdwg.mxu0
  %5447 = vmatpush.bf16.msra.mxu0 %v3750
  %5448 = vmatpush.bf16.msra.mxu0 %v3749
  %5449 = vmatpush.bf16.msra.mxu0 %v3748
  %5450 = vmatpush.bf16.msra.mxu0 %v3747
  %5451 = vmatpush.bf16.msra.mxu0 %v3746
  %5452 = vmatpush.bf16.msra.mxu0 %v3745
  %5453 = vmatpush.bf16.msra.mxu0 %v3744
  %5454 = vmatpush.bf16.msra.mxu0 %v3743
  %5455 = vmatmul.bf16.gmra.mxu0 %v4359
  %v5456 = vpop.f32.mrf.mxu0
  %v5457 = vadd.f32 %v5368, %v5456
  %v5458 = vpop.f32.mrf.mxu0
  %v5459 = vadd.f32 %v5370, %v5458
  %5460 = vmatmul.bf16.gmra.mxu0 %v4371
  %v5461 = vpop.f32.mrf.mxu0
  %v5462 = vadd.f32 %v5373, %v5461
  %v5463 = vpop.f32.mrf.mxu0
  %v5464 = vadd.f32 %v5375, %v5463
  %5465 = vmatmul.bf16.gmra.mxu0 %v4383
  %v5466 = vpop.f32.mrf.mxu0
  %v5467 = vadd.f32 %v5378, %v5466
  %v5468 = vpop.f32.mrf.mxu0
  %v5469 = vadd.f32 %v5380, %v5468
  %5470 = vmatmul.bf16.gmra.mxu0 %v4395
  %v5471 = vpop.f32.mrf.mxu0
  %v5472 = vadd.f32 %v5383, %v5471
  %v5473 = vpop.f32.mrf.mxu0
  %v5474 = vadd.f32 %v5385, %v5473
  %5475 = vmatmul.bf16.gmra.mxu0 %v4407
  %v5476 = vpop.f32.mrf.mxu0
  %v5477 = vadd.f32 %v5388, %v5476
  %v5478 = vpop.f32.mrf.mxu0
  %v5479 = vadd.f32 %v5390, %v5478
  %5480 = vmatmul.bf16.gmra.mxu0 %v4419
  %v5481 = vpop.f32.mrf.mxu0
  %v5482 = vadd.f32 %v5393, %v5481
  %v5483 = vpop.f32.mrf.mxu0
  %v5484 = vadd.f32 %v5395, %v5483
  %5485 = vmatmul.bf16.gmra.mxu0 %v4431
  %v5486 = vpop.f32.mrf.mxu0
  %v5487 = vadd.f32 %v5398, %v5486
  %v5488 = vpop.f32.mrf.mxu0
  %v5489 = vadd.f32 %v5400, %v5488
  %5490 = vmatmul.bf16.gmra.mxu0 %v4443
  %v5491 = vpop.f32.mrf.mxu0
  %v5492 = vadd.f32 %v5403, %v5491
  %v5493 = vpop.f32.mrf.mxu0
  %v5494 = vadd.f32 %v5405, %v5493
  %5495 = vmatmul.bf16.gmra.mxu0 %v4455
  %v5496 = vpop.f32.mrf.mxu0
  %v5497 = vadd.f32 %v5408, %v5496
  %v5498 = vpop.f32.mrf.mxu0
  %v5499 = vadd.f32 %v5410, %v5498
  %5500 = vmatmul.bf16.gmra.mxu0 %v4467
  %v5501 = vpop.f32.mrf.mxu0
  %v5502 = vadd.f32 %v5413, %v5501
  %v5503 = vpop.f32.mrf.mxu0
  %v5504 = vadd.f32 %v5415, %v5503
  %5505 = vmatmul.bf16.gmra.mxu0 %v4479
  %v5506 = vpop.f32.mrf.mxu0
  %v5507 = vadd.f32 %v5418, %v5506
  %v5508 = vpop.f32.mrf.mxu0
  %v5509 = vadd.f32 %v5420, %v5508
  %5510 = vmatmul.bf16.gmra.mxu0 %v4491
  %v5511 = vpop.f32.mrf.mxu0
  %v5512 = vadd.f32 %v5423, %v5511
  %v5513 = vpop.f32.mrf.mxu0
  %v5514 = vadd.f32 %v5425, %v5513
  %5515 = vmatmul.bf16.gmra.mxu0 %v4503
  %v5516 = vpop.f32.mrf.mxu0
  %v5517 = vadd.f32 %v5428, %v5516
  %v5518 = vpop.f32.mrf.mxu0
  %v5519 = vadd.f32 %v5430, %v5518
  %5520 = vmatmul.bf16.gmra.mxu0 %v4515
  %v5521 = vpop.f32.mrf.mxu0
  %v5522 = vadd.f32 %v5433, %v5521
  %v5523 = vpop.f32.mrf.mxu0
  %v5524 = vadd.f32 %v5435, %v5523
  %5525 = vmatmul.bf16.gmra.mxu0 %v4527
  %v5526 = vpop.f32.mrf.mxu0
  %v5527 = vadd.f32 %v5438, %v5526
  %v5528 = vpop.f32.mrf.mxu0
  %v5529 = vadd.f32 %v5440, %v5528
  %5530 = vmatmul.bf16.gmra.mxu0 %v4539
  %v5531 = vpop.f32.mrf.mxu0
  %v5532 = vadd.f32 %v5443, %v5531
  %v5533 = vpop.f32.mrf.mxu0
  %v5534 = vadd.f32 %v5445, %v5533
  %5535 = vdwg.mxu0
  %5536 = vmatpush.bf16.msra.mxu0 %v3758
  %5537 = vmatpush.bf16.msra.mxu0 %v3757
  %5538 = vmatpush.bf16.msra.mxu0 %v3756
  %5539 = vmatpush.bf16.msra.mxu0 %v3755
  %5540 = vmatpush.bf16.msra.mxu0 %v3754
  %5541 = vmatpush.bf16.msra.mxu0 %v3753
  %5542 = vmatpush.bf16.msra.mxu0 %v3752
  %5543 = vmatpush.bf16.msra.mxu0 %v3751
  %5544 = vmatmul.bf16.gmra.mxu0 %v4360
  %v5545 = vpop.f32.mrf.mxu0
  %v5546 = vadd.f32 %v5457, %v5545
  %v5547 = vpop.f32.mrf.mxu0
  %v5548 = vadd.f32 %v5459, %v5547
  %5549 = vmatmul.bf16.gmra.mxu0 %v4372
  %v5550 = vpop.f32.mrf.mxu0
  %v5551 = vadd.f32 %v5462, %v5550
  %v5552 = vpop.f32.mrf.mxu0
  %v5553 = vadd.f32 %v5464, %v5552
  %5554 = vmatmul.bf16.gmra.mxu0 %v4384
  %v5555 = vpop.f32.mrf.mxu0
  %v5556 = vadd.f32 %v5467, %v5555
  %v5557 = vpop.f32.mrf.mxu0
  %v5558 = vadd.f32 %v5469, %v5557
  %5559 = vmatmul.bf16.gmra.mxu0 %v4396
  %v5560 = vpop.f32.mrf.mxu0
  %v5561 = vadd.f32 %v5472, %v5560
  %v5562 = vpop.f32.mrf.mxu0
  %v5563 = vadd.f32 %v5474, %v5562
  %5564 = vmatmul.bf16.gmra.mxu0 %v4408
  %v5565 = vpop.f32.mrf.mxu0
  %v5566 = vadd.f32 %v5477, %v5565
  %v5567 = vpop.f32.mrf.mxu0
  %v5568 = vadd.f32 %v5479, %v5567
  %5569 = vmatmul.bf16.gmra.mxu0 %v4420
  %v5570 = vpop.f32.mrf.mxu0
  %v5571 = vadd.f32 %v5482, %v5570
  %v5572 = vpop.f32.mrf.mxu0
  %v5573 = vadd.f32 %v5484, %v5572
  %5574 = vmatmul.bf16.gmra.mxu0 %v4432
  %v5575 = vpop.f32.mrf.mxu0
  %v5576 = vadd.f32 %v5487, %v5575
  %v5577 = vpop.f32.mrf.mxu0
  %v5578 = vadd.f32 %v5489, %v5577
  %5579 = vmatmul.bf16.gmra.mxu0 %v4444
  %v5580 = vpop.f32.mrf.mxu0
  %v5581 = vadd.f32 %v5492, %v5580
  %v5582 = vpop.f32.mrf.mxu0
  %v5583 = vadd.f32 %v5494, %v5582
  %5584 = vmatmul.bf16.gmra.mxu0 %v4456
  %v5585 = vpop.f32.mrf.mxu0
  %v5586 = vadd.f32 %v5497, %v5585
  %v5587 = vpop.f32.mrf.mxu0
  %v5588 = vadd.f32 %v5499, %v5587
  %5589 = vmatmul.bf16.gmra.mxu0 %v4468
  %v5590 = vpop.f32.mrf.mxu0
  %v5591 = vadd.f32 %v5502, %v5590
  %v5592 = vpop.f32.mrf.mxu0
  %v5593 = vadd.f32 %v5504, %v5592
  %5594 = vmatmul.bf16.gmra.mxu0 %v4480
  %v5595 = vpop.f32.mrf.mxu0
  %v5596 = vadd.f32 %v5507, %v5595
  %v5597 = vpop.f32.mrf.mxu0
  %v5598 = vadd.f32 %v5509, %v5597
  %5599 = vmatmul.bf16.gmra.mxu0 %v4492
  %v5600 = vpop.f32.mrf.mxu0
  %v5601 = vadd.f32 %v5512, %v5600
  %v5602 = vpop.f32.mrf.mxu0
  %v5603 = vadd.f32 %v5514, %v5602
  %5604 = vmatmul.bf16.gmra.mxu0 %v4504
  %v5605 = vpop.f32.mrf.mxu0
  %v5606 = vadd.f32 %v5517, %v5605
  %v5607 = vpop.f32.mrf.mxu0
  %v5608 = vadd.f32 %v5519, %v5607
  %5609 = vmatmul.bf16.gmra.mxu0 %v4516
  %v5610 = vpop.f32.mrf.mxu0
  %v5611 = vadd.f32 %v5522, %v5610
  %v5612 = vpop.f32.mrf.mxu0
  %v5613 = vadd.f32 %v5524, %v5612
  %5614 = vmatmul.bf16.gmra.mxu0 %v4528
  %v5615 = vpop.f32.mrf.mxu0
  %v5616 = vadd.f32 %v5527, %v5615
  %v5617 = vpop.f32.mrf.mxu0
  %v5618 = vadd.f32 %v5529, %v5617
  %5619 = vmatmul.bf16.gmra.mxu0 %v4540
  %v5620 = vpop.f32.mrf.mxu0
  %v5621 = vadd.f32 %v5532, %v5620
  %v5622 = vpop.f32.mrf.mxu0
  %v5623 = vadd.f32 %v5534, %v5622
  %5624 = vdwg.mxu0
  %5625 = vmatpush.bf16.msra.mxu0 %v3766
  %5626 = vmatpush.bf16.msra.mxu0 %v3765
  %5627 = vmatpush.bf16.msra.mxu0 %v3764
  %5628 = vmatpush.bf16.msra.mxu0 %v3763
  %5629 = vmatpush.bf16.msra.mxu0 %v3762
  %5630 = vmatpush.bf16.msra.mxu0 %v3761
  %5631 = vmatpush.bf16.msra.mxu0 %v3760
  %5632 = vmatpush.bf16.msra.mxu0 %v3759
  %5633 = vmatmul.bf16.gmra.mxu0 %v4361
  %v5634 = vpop.f32.mrf.mxu0
  %v5635 = vadd.f32 %v5546, %v5634
  %v5636 = vpop.f32.mrf.mxu0
  %v5637 = vadd.f32 %v5548, %v5636
  %5638 = vmatmul.bf16.gmra.mxu0 %v4373
  %v5639 = vpop.f32.mrf.mxu0
  %v5640 = vadd.f32 %v5551, %v5639
  %v5641 = vpop.f32.mrf.mxu0
  %v5642 = vadd.f32 %v5553, %v5641
  %5643 = vmatmul.bf16.gmra.mxu0 %v4385
  %v5644 = vpop.f32.mrf.mxu0
  %v5645 = vadd.f32 %v5556, %v5644
  %v5646 = vpop.f32.mrf.mxu0
  %v5647 = vadd.f32 %v5558, %v5646
  %5648 = vmatmul.bf16.gmra.mxu0 %v4397
  %v5649 = vpop.f32.mrf.mxu0
  %v5650 = vadd.f32 %v5561, %v5649
  %v5651 = vpop.f32.mrf.mxu0
  %v5652 = vadd.f32 %v5563, %v5651
  %5653 = vmatmul.bf16.gmra.mxu0 %v4409
  %v5654 = vpop.f32.mrf.mxu0
  %v5655 = vadd.f32 %v5566, %v5654
  %v5656 = vpop.f32.mrf.mxu0
  %v5657 = vadd.f32 %v5568, %v5656
  %5658 = vmatmul.bf16.gmra.mxu0 %v4421
  %v5659 = vpop.f32.mrf.mxu0
  %v5660 = vadd.f32 %v5571, %v5659
  %v5661 = vpop.f32.mrf.mxu0
  %v5662 = vadd.f32 %v5573, %v5661
  %5663 = vmatmul.bf16.gmra.mxu0 %v4433
  %v5664 = vpop.f32.mrf.mxu0
  %v5665 = vadd.f32 %v5576, %v5664
  %v5666 = vpop.f32.mrf.mxu0
  %v5667 = vadd.f32 %v5578, %v5666
  %5668 = vmatmul.bf16.gmra.mxu0 %v4445
  %v5669 = vpop.f32.mrf.mxu0
  %v5670 = vadd.f32 %v5581, %v5669
  %v5671 = vpop.f32.mrf.mxu0
  %v5672 = vadd.f32 %v5583, %v5671
  %5673 = vmatmul.bf16.gmra.mxu0 %v4457
  %v5674 = vpop.f32.mrf.mxu0
  %v5675 = vadd.f32 %v5586, %v5674
  %v5676 = vpop.f32.mrf.mxu0
  %v5677 = vadd.f32 %v5588, %v5676
  %5678 = vmatmul.bf16.gmra.mxu0 %v4469
  %v5679 = vpop.f32.mrf.mxu0
  %v5680 = vadd.f32 %v5591, %v5679
  %v5681 = vpop.f32.mrf.mxu0
  %v5682 = vadd.f32 %v5593, %v5681
  %5683 = vmatmul.bf16.gmra.mxu0 %v4481
  %v5684 = vpop.f32.mrf.mxu0
  %v5685 = vadd.f32 %v5596, %v5684
  %v5686 = vpop.f32.mrf.mxu0
  %v5687 = vadd.f32 %v5598, %v5686
  %5688 = vmatmul.bf16.gmra.mxu0 %v4493
  %v5689 = vpop.f32.mrf.mxu0
  %v5690 = vadd.f32 %v5601, %v5689
  %v5691 = vpop.f32.mrf.mxu0
  %v5692 = vadd.f32 %v5603, %v5691
  %5693 = vmatmul.bf16.gmra.mxu0 %v4505
  %v5694 = vpop.f32.mrf.mxu0
  %v5695 = vadd.f32 %v5606, %v5694
  %v5696 = vpop.f32.mrf.mxu0
  %v5697 = vadd.f32 %v5608, %v5696
  %5698 = vmatmul.bf16.gmra.mxu0 %v4517
  %v5699 = vpop.f32.mrf.mxu0
  %v5700 = vadd.f32 %v5611, %v5699
  %v5701 = vpop.f32.mrf.mxu0
  %v5702 = vadd.f32 %v5613, %v5701
  %5703 = vmatmul.bf16.gmra.mxu0 %v4529
  %v5704 = vpop.f32.mrf.mxu0
  %v5705 = vadd.f32 %v5616, %v5704
  %v5706 = vpop.f32.mrf.mxu0
  %v5707 = vadd.f32 %v5618, %v5706
  %5708 = vmatmul.bf16.gmra.mxu0 %v4541
  %v5709 = vpop.f32.mrf.mxu0
  %v5710 = vadd.f32 %v5621, %v5709
  %v5711 = vpop.f32.mrf.mxu0
  %v5712 = vadd.f32 %v5623, %v5711
  %5713 = vdwg.mxu0
  %5714 = vmatpush.bf16.msra.mxu0 %v3774
  %5715 = vmatpush.bf16.msra.mxu0 %v3773
  %5716 = vmatpush.bf16.msra.mxu0 %v3772
  %5717 = vmatpush.bf16.msra.mxu0 %v3771
  %5718 = vmatpush.bf16.msra.mxu0 %v3770
  %5719 = vmatpush.bf16.msra.mxu0 %v3769
  %5720 = vmatpush.bf16.msra.mxu0 %v3768
  %5721 = vmatpush.bf16.msra.mxu0 %v3767
  %5722 = vmatmul.bf16.gmra.mxu0 %v4362
  %v5723 = vpop.f32.mrf.mxu0
  %v5724 = vadd.f32 %v5635, %v5723
  %v5725 = vpop.f32.mrf.mxu0
  %v5726 = vadd.f32 %v5637, %v5725
  %5727 = vmatmul.bf16.gmra.mxu0 %v4374
  %v5728 = vpop.f32.mrf.mxu0
  %v5729 = vadd.f32 %v5640, %v5728
  %v5730 = vpop.f32.mrf.mxu0
  %v5731 = vadd.f32 %v5642, %v5730
  %5732 = vmatmul.bf16.gmra.mxu0 %v4386
  %v5733 = vpop.f32.mrf.mxu0
  %v5734 = vadd.f32 %v5645, %v5733
  %v5735 = vpop.f32.mrf.mxu0
  %v5736 = vadd.f32 %v5647, %v5735
  %5737 = vmatmul.bf16.gmra.mxu0 %v4398
  %v5738 = vpop.f32.mrf.mxu0
  %v5739 = vadd.f32 %v5650, %v5738
  %v5740 = vpop.f32.mrf.mxu0
  %v5741 = vadd.f32 %v5652, %v5740
  %5742 = vmatmul.bf16.gmra.mxu0 %v4410
  %v5743 = vpop.f32.mrf.mxu0
  %v5744 = vadd.f32 %v5655, %v5743
  %v5745 = vpop.f32.mrf.mxu0
  %v5746 = vadd.f32 %v5657, %v5745
  %5747 = vmatmul.bf16.gmra.mxu0 %v4422
  %v5748 = vpop.f32.mrf.mxu0
  %v5749 = vadd.f32 %v5660, %v5748
  %v5750 = vpop.f32.mrf.mxu0
  %v5751 = vadd.f32 %v5662, %v5750
  %5752 = vmatmul.bf16.gmra.mxu0 %v4434
  %v5753 = vpop.f32.mrf.mxu0
  %v5754 = vadd.f32 %v5665, %v5753
  %v5755 = vpop.f32.mrf.mxu0
  %v5756 = vadd.f32 %v5667, %v5755
  %5757 = vmatmul.bf16.gmra.mxu0 %v4446
  %v5758 = vpop.f32.mrf.mxu0
  %v5759 = vadd.f32 %v5670, %v5758
  %v5760 = vpop.f32.mrf.mxu0
  %v5761 = vadd.f32 %v5672, %v5760
  %5762 = vmatmul.bf16.gmra.mxu0 %v4458
  %v5763 = vpop.f32.mrf.mxu0
  %v5764 = vadd.f32 %v5675, %v5763
  %v5765 = vpop.f32.mrf.mxu0
  %v5766 = vadd.f32 %v5677, %v5765
  %5767 = vmatmul.bf16.gmra.mxu0 %v4470
  %v5768 = vpop.f32.mrf.mxu0
  %v5769 = vadd.f32 %v5680, %v5768
  %v5770 = vpop.f32.mrf.mxu0
  %v5771 = vadd.f32 %v5682, %v5770
  %5772 = vmatmul.bf16.gmra.mxu0 %v4482
  %v5773 = vpop.f32.mrf.mxu0
  %v5774 = vadd.f32 %v5685, %v5773
  %v5775 = vpop.f32.mrf.mxu0
  %v5776 = vadd.f32 %v5687, %v5775
  %5777 = vmatmul.bf16.gmra.mxu0 %v4494
  %v5778 = vpop.f32.mrf.mxu0
  %v5779 = vadd.f32 %v5690, %v5778
  %v5780 = vpop.f32.mrf.mxu0
  %v5781 = vadd.f32 %v5692, %v5780
  %5782 = vmatmul.bf16.gmra.mxu0 %v4506
  %v5783 = vpop.f32.mrf.mxu0
  %v5784 = vadd.f32 %v5695, %v5783
  %v5785 = vpop.f32.mrf.mxu0
  %v5786 = vadd.f32 %v5697, %v5785
  %5787 = vmatmul.bf16.gmra.mxu0 %v4518
  %v5788 = vpop.f32.mrf.mxu0
  %v5789 = vadd.f32 %v5700, %v5788
  %v5790 = vpop.f32.mrf.mxu0
  %v5791 = vadd.f32 %v5702, %v5790
  %5792 = vmatmul.bf16.gmra.mxu0 %v4530
  %v5793 = vpop.f32.mrf.mxu0
  %v5794 = vadd.f32 %v5705, %v5793
  %v5795 = vpop.f32.mrf.mxu0
  %v5796 = vadd.f32 %v5707, %v5795
  %5797 = vmatmul.bf16.gmra.mxu0 %v4542
  %v5798 = vpop.f32.mrf.mxu0
  %v5799 = vadd.f32 %v5710, %v5798
  %v5800 = vpop.f32.mrf.mxu0
  %v5801 = vadd.f32 %v5712, %v5800
  %5802 = vdwg.mxu0
  %vm5803 = vcmask 400384
  %v5804 = vsel %vm5803, %v5724, 0.0
  %5805 = vadd.xlane.f32.xlu0 %v5804
  %v5806 = vpop.xlane.xlu0 %5805
  %v5807 = vsel %vm5803, %v5726, 0.0
  %5808 = vadd.xlane.f32.xlu0 %v5807
  %v5809 = vpop.xlane.xlu0 %5808
  %v5810 = vsel %vm5803, %v5729, 0.0
  %5811 = vadd.xlane.f32.xlu0 %v5810
  %v5812 = vpop.xlane.xlu0 %5811
  %v5813 = vsel %vm5803, %v5731, 0.0
  %5814 = vadd.xlane.f32.xlu0 %v5813
  %v5815 = vpop.xlane.xlu0 %5814
  %v5816 = vsel %vm5803, %v5734, 0.0
  %5817 = vadd.xlane.f32.xlu0 %v5816
  %v5818 = vpop.xlane.xlu0 %5817
  %v5819 = vsel %vm5803, %v5736, 0.0
  %5820 = vadd.xlane.f32.xlu0 %v5819
  %v5821 = vpop.xlane.xlu0 %5820
  %v5822 = vsel %vm5803, %v5739, 0.0
  %5823 = vadd.xlane.f32.xlu0 %v5822
  %v5824 = vpop.xlane.xlu0 %5823
  %v5825 = vsel %vm5803, %v5741, 0.0
  %5826 = vadd.xlane.f32.xlu0 %v5825
  %v5827 = vpop.xlane.xlu0 %5826
  %v5828 = vsel %vm5803, %v5744, 0.0
  %5829 = vadd.xlane.f32.xlu0 %v5828
  %v5830 = vpop.xlane.xlu0 %5829
  %v5831 = vsel %vm5803, %v5746, 0.0
  %5832 = vadd.xlane.f32.xlu0 %v5831
  %v5833 = vpop.xlane.xlu0 %5832
  %v5834 = vsel %vm5803, %v5749, 0.0
  %5835 = vadd.xlane.f32.xlu0 %v5834
  %v5836 = vpop.xlane.xlu0 %5835
  %v5837 = vsel %vm5803, %v5751, 0.0
  %5838 = vadd.xlane.f32.xlu0 %v5837
  %v5839 = vpop.xlane.xlu0 %5838
  %v5840 = vsel %vm5803, %v5754, 0.0
  %5841 = vadd.xlane.f32.xlu0 %v5840
  %v5842 = vpop.xlane.xlu0 %5841
  %v5843 = vsel %vm5803, %v5756, 0.0
  %5844 = vadd.xlane.f32.xlu0 %v5843
  %v5845 = vpop.xlane.xlu0 %5844
  %v5846 = vsel %vm5803, %v5759, 0.0
  %5847 = vadd.xlane.f32.xlu0 %v5846
  %v5848 = vpop.xlane.xlu0 %5847
  %v5849 = vsel %vm5803, %v5761, 0.0
  %5850 = vadd.xlane.f32.xlu0 %v5849
  %v5851 = vpop.xlane.xlu0 %5850
  %v5852 = vsel %vm5803, %v5764, 0.0
  %5853 = vadd.xlane.f32.xlu0 %v5852
  %v5854 = vpop.xlane.xlu0 %5853
  %v5855 = vsel %vm5803, %v5766, 0.0
  %5856 = vadd.xlane.f32.xlu0 %v5855
  %v5857 = vpop.xlane.xlu0 %5856
  %v5858 = vsel %vm5803, %v5769, 0.0
  %5859 = vadd.xlane.f32.xlu0 %v5858
  %v5860 = vpop.xlane.xlu0 %5859
  %v5861 = vsel %vm5803, %v5771, 0.0
  %5862 = vadd.xlane.f32.xlu0 %v5861
  %v5863 = vpop.xlane.xlu0 %5862
  %v5864 = vsel %vm5803, %v5774, 0.0
  %5865 = vadd.xlane.f32.xlu0 %v5864
  %v5866 = vpop.xlane.xlu0 %5865
  %v5867 = vsel %vm5803, %v5776, 0.0
  %5868 = vadd.xlane.f32.xlu0 %v5867
  %v5869 = vpop.xlane.xlu0 %5868
  %v5870 = vsel %vm5803, %v5779, 0.0
  %5871 = vadd.xlane.f32.xlu0 %v5870
  %v5872 = vpop.xlane.xlu0 %5871
  %v5873 = vsel %vm5803, %v5781, 0.0
  %5874 = vadd.xlane.f32.xlu0 %v5873
  %v5875 = vpop.xlane.xlu0 %5874
  %v5876 = vsel %vm5803, %v5784, 0.0
  %5877 = vadd.xlane.f32.xlu0 %v5876
  %v5878 = vpop.xlane.xlu0 %5877
  %v5879 = vsel %vm5803, %v5786, 0.0
  %5880 = vadd.xlane.f32.xlu0 %v5879
  %v5881 = vpop.xlane.xlu0 %5880
  %v5882 = vsel %vm5803, %v5789, 0.0
  %5883 = vadd.xlane.f32.xlu0 %v5882
  %v5884 = vpop.xlane.xlu0 %5883
  %v5885 = vsel %vm5803, %v5791, 0.0
  %5886 = vadd.xlane.f32.xlu0 %v5885
  %v5887 = vpop.xlane.xlu0 %5886
  %v5888 = vsel %vm5803, %v5794, 0.0
  %5889 = vadd.xlane.f32.xlu0 %v5888
  %v5890 = vpop.xlane.xlu0 %5889
  %v5891 = vsel %vm5803, %v5796, 0.0
  %5892 = vadd.xlane.f32.xlu0 %v5891
  %v5893 = vpop.xlane.xlu0 %5892
  %v5894 = vsel %vm5803, %v5799, 0.0
  %5895 = vadd.xlane.f32.xlu0 %v5894
  %v5896 = vpop.xlane.xlu0 %5895
  %v5897 = vsel %vm5803, %v5801, 0.0
  %5898 = vadd.xlane.f32.xlu0 %v5897
  %v5899 = vpop.xlane.xlu0 %5898
  %v5900 = vrcp.pop 49.0
  %v5901 = vmul.f32 49.0, %v5900
  %v5902 = vsub.f32 1.0, %v5901
  %v5903 = vmul.f32 %v5900, %v5902
  %v5904 = vadd.f32 %v5900, %v5903
  %vm5905 = vweird.f32 %v5900
  %v5906 = vsel %vm5905, %v5900, %v5904
  %v5907 = vmul.f32 %v5806, %v5906
  %v5908 = vmul.f32 %v5809, %v5906
  %v5909 = vmul.f32 %v5812, %v5906
  %v5910 = vmul.f32 %v5815, %v5906
  %v5911 = vmul.f32 %v5818, %v5906
  %v5912 = vmul.f32 %v5821, %v5906
  %v5913 = vmul.f32 %v5824, %v5906
  %v5914 = vmul.f32 %v5827, %v5906
  %v5915 = vmul.f32 %v5830, %v5906
  %v5916 = vmul.f32 %v5833, %v5906
  %v5917 = vmul.f32 %v5836, %v5906
  %v5918 = vmul.f32 %v5839, %v5906
  %v5919 = vmul.f32 %v5842, %v5906
  %v5920 = vmul.f32 %v5845, %v5906
  %v5921 = vmul.f32 %v5848, %v5906
  %v5922 = vmul.f32 %v5851, %v5906
  %v5923 = vmul.f32 %v5854, %v5906
  %v5924 = vmul.f32 %v5857, %v5906
  %v5925 = vmul.f32 %v5860, %v5906
  %v5926 = vmul.f32 %v5863, %v5906
  %v5927 = vmul.f32 %v5866, %v5906
  %v5928 = vmul.f32 %v5869, %v5906
  %v5929 = vmul.f32 %v5872, %v5906
  %v5930 = vmul.f32 %v5875, %v5906
  %v5931 = vmul.f32 %v5878, %v5906
  %v5932 = vmul.f32 %v5881, %v5906
  %v5933 = vmul.f32 %v5884, %v5906
  %v5934 = vmul.f32 %v5887, %v5906
  %v5935 = vmul.f32 %v5890, %v5906
  %v5936 = vmul.f32 %v5893, %v5906
  %v5937 = vmul.f32 %v5896, %v5906
  %v5938 = vmul.f32 %v5899, %v5906
  %v5939 = vsub.f32 %v5724, %v5907
  %v5940 = vsub.f32 %v5726, %v5908
  %v5941 = vsub.f32 %v5729, %v5909
  %v5942 = vsub.f32 %v5731, %v5910
  %v5943 = vsub.f32 %v5734, %v5911
  %v5944 = vsub.f32 %v5736, %v5912
  %v5945 = vsub.f32 %v5739, %v5913
  %v5946 = vsub.f32 %v5741, %v5914
  %v5947 = vsub.f32 %v5744, %v5915
  %v5948 = vsub.f32 %v5746, %v5916
  %v5949 = vsub.f32 %v5749, %v5917
  %v5950 = vsub.f32 %v5751, %v5918
  %v5951 = vsub.f32 %v5754, %v5919
  %v5952 = vsub.f32 %v5756, %v5920
  %v5953 = vsub.f32 %v5759, %v5921
  %v5954 = vsub.f32 %v5761, %v5922
  %v5955 = vsub.f32 %v5764, %v5923
  %v5956 = vsub.f32 %v5766, %v5924
  %v5957 = vsub.f32 %v5769, %v5925
  %v5958 = vsub.f32 %v5771, %v5926
  %v5959 = vsub.f32 %v5774, %v5927
  %v5960 = vsub.f32 %v5776, %v5928
  %v5961 = vsub.f32 %v5779, %v5929
  %v5962 = vsub.f32 %v5781, %v5930
  %v5963 = vsub.f32 %v5784, %v5931
  %v5964 = vsub.f32 %v5786, %v5932
  %v5965 = vsub.f32 %v5789, %v5933
  %v5966 = vsub.f32 %v5791, %v5934
  %v5967 = vsub.f32 %v5794, %v5935
  %v5968 = vsub.f32 %v5796, %v5936
  %v5969 = vsub.f32 %v5799, %v5937
  %v5970 = vsub.f32 %v5801, %v5938
  %v5971 = vmul.f32 %v5939, %v5939
  %v5972 = vmul.f32 %v5940, %v5940
  %v5973 = vmul.f32 %v5941, %v5941
  %v5974 = vmul.f32 %v5942, %v5942
  %v5975 = vmul.f32 %v5943, %v5943
  %v5976 = vmul.f32 %v5944, %v5944
  %v5977 = vmul.f32 %v5945, %v5945
  %v5978 = vmul.f32 %v5946, %v5946
  %v5979 = vmul.f32 %v5947, %v5947
  %v5980 = vmul.f32 %v5948, %v5948
  %v5981 = vmul.f32 %v5949, %v5949
  %v5982 = vmul.f32 %v5950, %v5950
  %v5983 = vmul.f32 %v5951, %v5951
  %v5984 = vmul.f32 %v5952, %v5952
  %v5985 = vmul.f32 %v5953, %v5953
  %v5986 = vmul.f32 %v5954, %v5954
  %v5987 = vmul.f32 %v5955, %v5955
  %v5988 = vmul.f32 %v5956, %v5956
  %v5989 = vmul.f32 %v5957, %v5957
  %v5990 = vmul.f32 %v5958, %v5958
  %v5991 = vmul.f32 %v5959, %v5959
  %v5992 = vmul.f32 %v5960, %v5960
  %v5993 = vmul.f32 %v5961, %v5961
  %v5994 = vmul.f32 %v5962, %v5962
  %v5995 = vmul.f32 %v5963, %v5963
  %v5996 = vmul.f32 %v5964, %v5964
  %v5997 = vmul.f32 %v5965, %v5965
  %v5998 = vmul.f32 %v5966, %v5966
  %v5999 = vmul.f32 %v5967, %v5967
  %v6000 = vmul.f32 %v5968, %v5968
  %v6001 = vmul.f32 %v5969, %v5969
  %v6002 = vmul.f32 %v5970, %v5970
  %v6003 = vsel %vm5803, %v5971, 0.0
  %6004 = vadd.xlane.f32.xlu0 %v6003
  %v6005 = vpop.xlane.xlu0 %6004
  %v6006 = vsel %vm5803, %v5972, 0.0
  %6007 = vadd.xlane.f32.xlu0 %v6006
  %v6008 = vpop.xlane.xlu0 %6007
  %v6009 = vsel %vm5803, %v5973, 0.0
  %6010 = vadd.xlane.f32.xlu0 %v6009
  %v6011 = vpop.xlane.xlu0 %6010
  %v6012 = vsel %vm5803, %v5974, 0.0
  %6013 = vadd.xlane.f32.xlu0 %v6012
  %v6014 = vpop.xlane.xlu0 %6013
  %v6015 = vsel %vm5803, %v5975, 0.0
  %6016 = vadd.xlane.f32.xlu0 %v6015
  %v6017 = vpop.xlane.xlu0 %6016
  %v6018 = vsel %vm5803, %v5976, 0.0
  %6019 = vadd.xlane.f32.xlu0 %v6018
  %v6020 = vpop.xlane.xlu0 %6019
  %v6021 = vsel %vm5803, %v5977, 0.0
  %6022 = vadd.xlane.f32.xlu0 %v6021
  %v6023 = vpop.xlane.xlu0 %6022
  %v6024 = vsel %vm5803, %v5978, 0.0
  %6025 = vadd.xlane.f32.xlu0 %v6024
  %v6026 = vpop.xlane.xlu0 %6025
  %v6027 = vsel %vm5803, %v5979, 0.0
  %6028 = vadd.xlane.f32.xlu0 %v6027
  %v6029 = vpop.xlane.xlu0 %6028
  %v6030 = vsel %vm5803, %v5980, 0.0
  %6031 = vadd.xlane.f32.xlu0 %v6030
  %v6032 = vpop.xlane.xlu0 %6031
  %v6033 = vsel %vm5803, %v5981, 0.0
  %6034 = vadd.xlane.f32.xlu0 %v6033
  %v6035 = vpop.xlane.xlu0 %6034
  %v6036 = vsel %vm5803, %v5982, 0.0
  %6037 = vadd.xlane.f32.xlu0 %v6036
  %v6038 = vpop.xlane.xlu0 %6037
  %v6039 = vsel %vm5803, %v5983, 0.0
  %6040 = vadd.xlane.f32.xlu0 %v6039
  %v6041 = vpop.xlane.xlu0 %6040
  %v6042 = vsel %vm5803, %v5984, 0.0
  %6043 = vadd.xlane.f32.xlu0 %v6042
  %v6044 = vpop.xlane.xlu0 %6043
  %v6045 = vsel %vm5803, %v5985, 0.0
  %6046 = vadd.xlane.f32.xlu0 %v6045
  %v6047 = vpop.xlane.xlu0 %6046
  %v6048 = vsel %vm5803, %v5986, 0.0
  %6049 = vadd.xlane.f32.xlu0 %v6048
  %v6050 = vpop.xlane.xlu0 %6049
  %v6051 = vsel %vm5803, %v5987, 0.0
  %6052 = vadd.xlane.f32.xlu0 %v6051
  %v6053 = vpop.xlane.xlu0 %6052
  %v6054 = vsel %vm5803, %v5988, 0.0
  %6055 = vadd.xlane.f32.xlu0 %v6054
  %v6056 = vpop.xlane.xlu0 %6055
  %v6057 = vsel %vm5803, %v5989, 0.0
  %6058 = vadd.xlane.f32.xlu0 %v6057
  %v6059 = vpop.xlane.xlu0 %6058
  %v6060 = vsel %vm5803, %v5990, 0.0
  %6061 = vadd.xlane.f32.xlu0 %v6060
  %v6062 = vpop.xlane.xlu0 %6061
  %v6063 = vsel %vm5803, %v5991, 0.0
  %6064 = vadd.xlane.f32.xlu0 %v6063
  %v6065 = vpop.xlane.xlu0 %6064
  %v6066 = vsel %vm5803, %v5992, 0.0
  %6067 = vadd.xlane.f32.xlu0 %v6066
  %v6068 = vpop.xlane.xlu0 %6067
  %v6069 = vsel %vm5803, %v5993, 0.0
  %6070 = vadd.xlane.f32.xlu0 %v6069
  %v6071 = vpop.xlane.xlu0 %6070
  %v6072 = vsel %vm5803, %v5994, 0.0
  %6073 = vadd.xlane.f32.xlu0 %v6072
  %v6074 = vpop.xlane.xlu0 %6073
  %v6075 = vsel %vm5803, %v5995, 0.0
  %6076 = vadd.xlane.f32.xlu0 %v6075
  %v6077 = vpop.xlane.xlu0 %6076
  %v6078 = vsel %vm5803, %v5996, 0.0
  %6079 = vadd.xlane.f32.xlu0 %v6078
  %v6080 = vpop.xlane.xlu0 %6079
  %v6081 = vsel %vm5803, %v5997, 0.0
  %6082 = vadd.xlane.f32.xlu0 %v6081
  %v6083 = vpop.xlane.xlu0 %6082
  %v6084 = vsel %vm5803, %v5998, 0.0
  %6085 = vadd.xlane.f32.xlu0 %v6084
  %v6086 = vpop.xlane.xlu0 %6085
  %v6087 = vsel %vm5803, %v5999, 0.0
  %6088 = vadd.xlane.f32.xlu0 %v6087
  %v6089 = vpop.xlane.xlu0 %6088
  %v6090 = vsel %vm5803, %v6000, 0.0
  %6091 = vadd.xlane.f32.xlu0 %v6090
  %v6092 = vpop.xlane.xlu0 %6091
  %v6093 = vsel %vm5803, %v6001, 0.0
  %6094 = vadd.xlane.f32.xlu0 %v6093
  %v6095 = vpop.xlane.xlu0 %6094
  %v6096 = vsel %vm5803, %v6002, 0.0
  %6097 = vadd.xlane.f32.xlu0 %v6096
  %v6098 = vpop.xlane.xlu0 %6097
  %v6099 = vmul.f32 %v6005, %v5906
  %v6100 = vmul.f32 %v6008, %v5906
  %v6101 = vmul.f32 %v6011, %v5906
  %v6102 = vmul.f32 %v6014, %v5906
  %v6103 = vmul.f32 %v6017, %v5906
  %v6104 = vmul.f32 %v6020, %v5906
  %v6105 = vmul.f32 %v6023, %v5906
  %v6106 = vmul.f32 %v6026, %v5906
  %v6107 = vmul.f32 %v6029, %v5906
  %v6108 = vmul.f32 %v6032, %v5906
  %v6109 = vmul.f32 %v6035, %v5906
  %v6110 = vmul.f32 %v6038, %v5906
  %v6111 = vmul.f32 %v6041, %v5906
  %v6112 = vmul.f32 %v6044, %v5906
  %v6113 = vmul.f32 %v6047, %v5906
  %v6114 = vmul.f32 %v6050, %v5906
  %v6115 = vmul.f32 %v6053, %v5906
  %v6116 = vmul.f32 %v6056, %v5906
  %v6117 = vmul.f32 %v6059, %v5906
  %v6118 = vmul.f32 %v6062, %v5906
  %v6119 = vmul.f32 %v6065, %v5906
  %v6120 = vmul.f32 %v6068, %v5906
  %v6121 = vmul.f32 %v6071, %v5906
  %v6122 = vmul.f32 %v6074, %v5906
  %v6123 = vmul.f32 %v6077, %v5906
  %v6124 = vmul.f32 %v6080, %v5906
  %v6125 = vmul.f32 %v6083, %v5906
  %v6126 = vmul.f32 %v6086, %v5906
  %v6127 = vmul.f32 %v6089, %v5906
  %v6128 = vmul.f32 %v6092, %v5906
  %v6129 = vmul.f32 %v6095, %v5906
  %v6130 = vmul.f32 %v6098, %v5906
  %v6131 = vadd.f32 %v6099, 0.001
  %v6132 = vadd.f32 %v6100, 0.001
  %v6133 = vadd.f32 %v6101, 0.001
  %v6134 = vadd.f32 %v6102, 0.001
  %v6135 = vadd.f32 %v6103, 0.001
  %v6136 = vadd.f32 %v6104, 0.001
  %v6137 = vadd.f32 %v6105, 0.001
  %v6138 = vadd.f32 %v6106, 0.001
  %v6139 = vadd.f32 %v6107, 0.001
  %v6140 = vadd.f32 %v6108, 0.001
  %v6141 = vadd.f32 %v6109, 0.001
  %v6142 = vadd.f32 %v6110, 0.001
  %v6143 = vadd.f32 %v6111, 0.001
  %v6144 = vadd.f32 %v6112, 0.001
  %v6145 = vadd.f32 %v6113, 0.001
  %v6146 = vadd.f32 %v6114, 0.001
  %v6147 = vadd.f32 %v6115, 0.001
  %v6148 = vadd.f32 %v6116, 0.001
  %v6149 = vadd.f32 %v6117, 0.001
  %v6150 = vadd.f32 %v6118, 0.001
  %v6151 = vadd.f32 %v6119, 0.001
  %v6152 = vadd.f32 %v6120, 0.001
  %v6153 = vadd.f32 %v6121, 0.001
  %v6154 = vadd.f32 %v6122, 0.001
  %v6155 = vadd.f32 %v6123, 0.001
  %v6156 = vadd.f32 %v6124, 0.001
  %v6157 = vadd.f32 %v6125, 0.001
  %v6158 = vadd.f32 %v6126, 0.001
  %v6159 = vadd.f32 %v6127, 0.001
  %v6160 = vadd.f32 %v6128, 0.001
  %v6161 = vadd.f32 %v6129, 0.001
  %v6162 = vadd.f32 %v6130, 0.001
  %v6163 = vrsqrt.pop %v6131
  %v6164 = vmul.f32 %v6163, %v6131
  %v6165 = vmul.f32 %v6164, %v6163
  %v6166 = vmul.f32 0.5, %v6165
  %v6167 = vsub.f32 1.5, %v6166
  %v6168 = vmul.f32 %v6163, %v6167
  %vm6169 = vweird.f32 %v6131
  %vm6170 = vweird.f32 %v6163
  %vm6171 = vmor %vm6169, %vm6170
  %v6172 = vsel %vm6171, %v6163, %v6168
  %v6173 = vrsqrt.pop %v6132
  %v6174 = vmul.f32 %v6173, %v6132
  %v6175 = vmul.f32 %v6174, %v6173
  %v6176 = vmul.f32 0.5, %v6175
  %v6177 = vsub.f32 1.5, %v6176
  %v6178 = vmul.f32 %v6173, %v6177
  %vm6179 = vweird.f32 %v6132
  %vm6180 = vweird.f32 %v6173
  %vm6181 = vmor %vm6179, %vm6180
  %v6182 = vsel %vm6181, %v6173, %v6178
  %v6183 = vrsqrt.pop %v6133
  %v6184 = vmul.f32 %v6183, %v6133
  %v6185 = vmul.f32 %v6184, %v6183
  %v6186 = vmul.f32 0.5, %v6185
  %v6187 = vsub.f32 1.5, %v6186
  %v6188 = vmul.f32 %v6183, %v6187
  %vm6189 = vweird.f32 %v6133
  %vm6190 = vweird.f32 %v6183
  %vm6191 = vmor %vm6189, %vm6190
  %v6192 = vsel %vm6191, %v6183, %v6188
  %v6193 = vrsqrt.pop %v6134
  %v6194 = vmul.f32 %v6193, %v6134
  %v6195 = vmul.f32 %v6194, %v6193
  %v6196 = vmul.f32 0.5, %v6195
  %v6197 = vsub.f32 1.5, %v6196
  %v6198 = vmul.f32 %v6193, %v6197
  %vm6199 = vweird.f32 %v6134
  %vm6200 = vweird.f32 %v6193
  %vm6201 = vmor %vm6199, %vm6200
  %v6202 = vsel %vm6201, %v6193, %v6198
  %v6203 = vrsqrt.pop %v6135
  %v6204 = vmul.f32 %v6203, %v6135
  %v6205 = vmul.f32 %v6204, %v6203
  %v6206 = vmul.f32 0.5, %v6205
  %v6207 = vsub.f32 1.5, %v6206
  %v6208 = vmul.f32 %v6203, %v6207
  %vm6209 = vweird.f32 %v6135
  %vm6210 = vweird.f32 %v6203
  %vm6211 = vmor %vm6209, %vm6210
  %v6212 = vsel %vm6211, %v6203, %v6208
  %v6213 = vrsqrt.pop %v6136
  %v6214 = vmul.f32 %v6213, %v6136
  %v6215 = vmul.f32 %v6214, %v6213
  %v6216 = vmul.f32 0.5, %v6215
  %v6217 = vsub.f32 1.5, %v6216
  %v6218 = vmul.f32 %v6213, %v6217
  %vm6219 = vweird.f32 %v6136
  %vm6220 = vweird.f32 %v6213
  %vm6221 = vmor %vm6219, %vm6220
  %v6222 = vsel %vm6221, %v6213, %v6218
  %v6223 = vrsqrt.pop %v6137
  %v6224 = vmul.f32 %v6223, %v6137
  %v6225 = vmul.f32 %v6224, %v6223
  %v6226 = vmul.f32 0.5, %v6225
  %v6227 = vsub.f32 1.5, %v6226
  %v6228 = vmul.f32 %v6223, %v6227
  %vm6229 = vweird.f32 %v6137
  %vm6230 = vweird.f32 %v6223
  %vm6231 = vmor %vm6229, %vm6230
  %v6232 = vsel %vm6231, %v6223, %v6228
  %v6233 = vrsqrt.pop %v6138
  %v6234 = vmul.f32 %v6233, %v6138
  %v6235 = vmul.f32 %v6234, %v6233
  %v6236 = vmul.f32 0.5, %v6235
  %v6237 = vsub.f32 1.5, %v6236
  %v6238 = vmul.f32 %v6233, %v6237
  %vm6239 = vweird.f32 %v6138
  %vm6240 = vweird.f32 %v6233
  %vm6241 = vmor %vm6239, %vm6240
  %v6242 = vsel %vm6241, %v6233, %v6238
  %v6243 = vrsqrt.pop %v6139
  %v6244 = vmul.f32 %v6243, %v6139
  %v6245 = vmul.f32 %v6244, %v6243
  %v6246 = vmul.f32 0.5, %v6245
  %v6247 = vsub.f32 1.5, %v6246
  %v6248 = vmul.f32 %v6243, %v6247
  %vm6249 = vweird.f32 %v6139
  %vm6250 = vweird.f32 %v6243
  %vm6251 = vmor %vm6249, %vm6250
  %v6252 = vsel %vm6251, %v6243, %v6248
  %v6253 = vrsqrt.pop %v6140
  %v6254 = vmul.f32 %v6253, %v6140
  %v6255 = vmul.f32 %v6254, %v6253
  %v6256 = vmul.f32 0.5, %v6255
  %v6257 = vsub.f32 1.5, %v6256
  %v6258 = vmul.f32 %v6253, %v6257
  %vm6259 = vweird.f32 %v6140
  %vm6260 = vweird.f32 %v6253
  %vm6261 = vmor %vm6259, %vm6260
  %v6262 = vsel %vm6261, %v6253, %v6258
  %v6263 = vrsqrt.pop %v6141
  %v6264 = vmul.f32 %v6263, %v6141
  %v6265 = vmul.f32 %v6264, %v6263
  %v6266 = vmul.f32 0.5, %v6265
  %v6267 = vsub.f32 1.5, %v6266
  %v6268 = vmul.f32 %v6263, %v6267
  %vm6269 = vweird.f32 %v6141
  %vm6270 = vweird.f32 %v6263
  %vm6271 = vmor %vm6269, %vm6270
  %v6272 = vsel %vm6271, %v6263, %v6268
  %v6273 = vrsqrt.pop %v6142
  %v6274 = vmul.f32 %v6273, %v6142
  %v6275 = vmul.f32 %v6274, %v6273
  %v6276 = vmul.f32 0.5, %v6275
  %v6277 = vsub.f32 1.5, %v6276
  %v6278 = vmul.f32 %v6273, %v6277
  %vm6279 = vweird.f32 %v6142
  %vm6280 = vweird.f32 %v6273
  %vm6281 = vmor %vm6279, %vm6280
  %v6282 = vsel %vm6281, %v6273, %v6278
  %v6283 = vrsqrt.pop %v6143
  %v6284 = vmul.f32 %v6283, %v6143
  %v6285 = vmul.f32 %v6284, %v6283
  %v6286 = vmul.f32 0.5, %v6285
  %v6287 = vsub.f32 1.5, %v6286
  %v6288 = vmul.f32 %v6283, %v6287
  %vm6289 = vweird.f32 %v6143
  %vm6290 = vweird.f32 %v6283
  %vm6291 = vmor %vm6289, %vm6290
  %v6292 = vsel %vm6291, %v6283, %v6288
  %v6293 = vrsqrt.pop %v6144
  %v6294 = vmul.f32 %v6293, %v6144
  %v6295 = vmul.f32 %v6294, %v6293
  %v6296 = vmul.f32 0.5, %v6295
  %v6297 = vsub.f32 1.5, %v6296
  %v6298 = vmul.f32 %v6293, %v6297
  %vm6299 = vweird.f32 %v6144
  %vm6300 = vweird.f32 %v6293
  %vm6301 = vmor %vm6299, %vm6300
  %v6302 = vsel %vm6301, %v6293, %v6298
  %v6303 = vrsqrt.pop %v6145
  %v6304 = vmul.f32 %v6303, %v6145
  %v6305 = vmul.f32 %v6304, %v6303
  %v6306 = vmul.f32 0.5, %v6305
  %v6307 = vsub.f32 1.5, %v6306
  %v6308 = vmul.f32 %v6303, %v6307
  %vm6309 = vweird.f32 %v6145
  %vm6310 = vweird.f32 %v6303
  %vm6311 = vmor %vm6309, %vm6310
  %v6312 = vsel %vm6311, %v6303, %v6308
  %v6313 = vrsqrt.pop %v6146
  %v6314 = vmul.f32 %v6313, %v6146
  %v6315 = vmul.f32 %v6314, %v6313
  %v6316 = vmul.f32 0.5, %v6315
  %v6317 = vsub.f32 1.5, %v6316
  %v6318 = vmul.f32 %v6313, %v6317
  %vm6319 = vweird.f32 %v6146
  %vm6320 = vweird.f32 %v6313
  %vm6321 = vmor %vm6319, %vm6320
  %v6322 = vsel %vm6321, %v6313, %v6318
  %v6323 = vrsqrt.pop %v6147
  %v6324 = vmul.f32 %v6323, %v6147
  %v6325 = vmul.f32 %v6324, %v6323
  %v6326 = vmul.f32 0.5, %v6325
  %v6327 = vsub.f32 1.5, %v6326
  %v6328 = vmul.f32 %v6323, %v6327
  %vm6329 = vweird.f32 %v6147
  %vm6330 = vweird.f32 %v6323
  %vm6331 = vmor %vm6329, %vm6330
  %v6332 = vsel %vm6331, %v6323, %v6328
  %v6333 = vrsqrt.pop %v6148
  %v6334 = vmul.f32 %v6333, %v6148
  %v6335 = vmul.f32 %v6334, %v6333
  %v6336 = vmul.f32 0.5, %v6335
  %v6337 = vsub.f32 1.5, %v6336
  %v6338 = vmul.f32 %v6333, %v6337
  %vm6339 = vweird.f32 %v6148
  %vm6340 = vweird.f32 %v6333
  %vm6341 = vmor %vm6339, %vm6340
  %v6342 = vsel %vm6341, %v6333, %v6338
  %v6343 = vrsqrt.pop %v6149
  %v6344 = vmul.f32 %v6343, %v6149
  %v6345 = vmul.f32 %v6344, %v6343
  %v6346 = vmul.f32 0.5, %v6345
  %v6347 = vsub.f32 1.5, %v6346
  %v6348 = vmul.f32 %v6343, %v6347
  %vm6349 = vweird.f32 %v6149
  %vm6350 = vweird.f32 %v6343
  %vm6351 = vmor %vm6349, %vm6350
  %v6352 = vsel %vm6351, %v6343, %v6348
  %v6353 = vrsqrt.pop %v6150
  %v6354 = vmul.f32 %v6353, %v6150
  %v6355 = vmul.f32 %v6354, %v6353
  %v6356 = vmul.f32 0.5, %v6355
  %v6357 = vsub.f32 1.5, %v6356
  %v6358 = vmul.f32 %v6353, %v6357
  %vm6359 = vweird.f32 %v6150
  %vm6360 = vweird.f32 %v6353
  %vm6361 = vmor %vm6359, %vm6360
  %v6362 = vsel %vm6361, %v6353, %v6358
  %v6363 = vrsqrt.pop %v6151
  %v6364 = vmul.f32 %v6363, %v6151
  %v6365 = vmul.f32 %v6364, %v6363
  %v6366 = vmul.f32 0.5, %v6365
  %v6367 = vsub.f32 1.5, %v6366
  %v6368 = vmul.f32 %v6363, %v6367
  %vm6369 = vweird.f32 %v6151
  %vm6370 = vweird.f32 %v6363
  %vm6371 = vmor %vm6369, %vm6370
  %v6372 = vsel %vm6371, %v6363, %v6368
  %v6373 = vrsqrt.pop %v6152
  %v6374 = vmul.f32 %v6373, %v6152
  %v6375 = vmul.f32 %v6374, %v6373
  %v6376 = vmul.f32 0.5, %v6375
  %v6377 = vsub.f32 1.5, %v6376
  %v6378 = vmul.f32 %v6373, %v6377
  %vm6379 = vweird.f32 %v6152
  %vm6380 = vweird.f32 %v6373
  %vm6381 = vmor %vm6379, %vm6380
  %v6382 = vsel %vm6381, %v6373, %v6378
  %v6383 = vrsqrt.pop %v6153
  %v6384 = vmul.f32 %v6383, %v6153
  %v6385 = vmul.f32 %v6384, %v6383
  %v6386 = vmul.f32 0.5, %v6385
  %v6387 = vsub.f32 1.5, %v6386
  %v6388 = vmul.f32 %v6383, %v6387
  %vm6389 = vweird.f32 %v6153
  %vm6390 = vweird.f32 %v6383
  %vm6391 = vmor %vm6389, %vm6390
  %v6392 = vsel %vm6391, %v6383, %v6388
  %v6393 = vrsqrt.pop %v6154
  %v6394 = vmul.f32 %v6393, %v6154
  %v6395 = vmul.f32 %v6394, %v6393
  %v6396 = vmul.f32 0.5, %v6395
  %v6397 = vsub.f32 1.5, %v6396
  %v6398 = vmul.f32 %v6393, %v6397
  %vm6399 = vweird.f32 %v6154
  %vm6400 = vweird.f32 %v6393
  %vm6401 = vmor %vm6399, %vm6400
  %v6402 = vsel %vm6401, %v6393, %v6398
  %v6403 = vrsqrt.pop %v6155
  %v6404 = vmul.f32 %v6403, %v6155
  %v6405 = vmul.f32 %v6404, %v6403
  %v6406 = vmul.f32 0.5, %v6405
  %v6407 = vsub.f32 1.5, %v6406
  %v6408 = vmul.f32 %v6403, %v6407
  %vm6409 = vweird.f32 %v6155
  %vm6410 = vweird.f32 %v6403
  %vm6411 = vmor %vm6409, %vm6410
  %v6412 = vsel %vm6411, %v6403, %v6408
  %v6413 = vrsqrt.pop %v6156
  %v6414 = vmul.f32 %v6413, %v6156
  %v6415 = vmul.f32 %v6414, %v6413
  %v6416 = vmul.f32 0.5, %v6415
  %v6417 = vsub.f32 1.5, %v6416
  %v6418 = vmul.f32 %v6413, %v6417
  %vm6419 = vweird.f32 %v6156
  %vm6420 = vweird.f32 %v6413
  %vm6421 = vmor %vm6419, %vm6420
  %v6422 = vsel %vm6421, %v6413, %v6418
  %v6423 = vrsqrt.pop %v6157
  %v6424 = vmul.f32 %v6423, %v6157
  %v6425 = vmul.f32 %v6424, %v6423
  %v6426 = vmul.f32 0.5, %v6425
  %v6427 = vsub.f32 1.5, %v6426
  %v6428 = vmul.f32 %v6423, %v6427
  %vm6429 = vweird.f32 %v6157
  %vm6430 = vweird.f32 %v6423
  %vm6431 = vmor %vm6429, %vm6430
  %v6432 = vsel %vm6431, %v6423, %v6428
  %v6433 = vrsqrt.pop %v6158
  %v6434 = vmul.f32 %v6433, %v6158
  %v6435 = vmul.f32 %v6434, %v6433
  %v6436 = vmul.f32 0.5, %v6435
  %v6437 = vsub.f32 1.5, %v6436
  %v6438 = vmul.f32 %v6433, %v6437
  %vm6439 = vweird.f32 %v6158
  %vm6440 = vweird.f32 %v6433
  %vm6441 = vmor %vm6439, %vm6440
  %v6442 = vsel %vm6441, %v6433, %v6438
  %v6443 = vrsqrt.pop %v6159
  %v6444 = vmul.f32 %v6443, %v6159
  %v6445 = vmul.f32 %v6444, %v6443
  %v6446 = vmul.f32 0.5, %v6445
  %v6447 = vsub.f32 1.5, %v6446
  %v6448 = vmul.f32 %v6443, %v6447
  %vm6449 = vweird.f32 %v6159
  %vm6450 = vweird.f32 %v6443
  %vm6451 = vmor %vm6449, %vm6450
  %v6452 = vsel %vm6451, %v6443, %v6448
  %v6453 = vrsqrt.pop %v6160
  %v6454 = vmul.f32 %v6453, %v6160
  %v6455 = vmul.f32 %v6454, %v6453
  %v6456 = vmul.f32 0.5, %v6455
  %v6457 = vsub.f32 1.5, %v6456
  %v6458 = vmul.f32 %v6453, %v6457
  %vm6459 = vweird.f32 %v6160
  %vm6460 = vweird.f32 %v6453
  %vm6461 = vmor %vm6459, %vm6460
  %v6462 = vsel %vm6461, %v6453, %v6458
  %v6463 = vrsqrt.pop %v6161
  %v6464 = vmul.f32 %v6463, %v6161
  %v6465 = vmul.f32 %v6464, %v6463
  %v6466 = vmul.f32 0.5, %v6465
  %v6467 = vsub.f32 1.5, %v6466
  %v6468 = vmul.f32 %v6463, %v6467
  %vm6469 = vweird.f32 %v6161
  %vm6470 = vweird.f32 %v6463
  %vm6471 = vmor %vm6469, %vm6470
  %v6472 = vsel %vm6471, %v6463, %v6468
  %v6473 = vrsqrt.pop %v6162
  %v6474 = vmul.f32 %v6473, %v6162
  %v6475 = vmul.f32 %v6474, %v6473
  %v6476 = vmul.f32 0.5, %v6475
  %v6477 = vsub.f32 1.5, %v6476
  %v6478 = vmul.f32 %v6473, %v6477
  %vm6479 = vweird.f32 %v6162
  %vm6480 = vweird.f32 %v6473
  %vm6481 = vmor %vm6479, %vm6480
  %v6482 = vsel %vm6481, %v6473, %v6478
  %v6483 = vld [vmem:[%s5] sm:$0xff]
  %v6484 = vld [vmem:[%s5 + $0x8] sm:$0xff]
  %v6485 = vld [vmem:[%s5 + $0x10] sm:$0xff]
  %v6486 = vld [vmem:[%s5 + $0x18] sm:$0xff]
  %v6487 = vld [vmem:[%s5 + $0x20] sm:$0xff]
  %v6488 = vld [vmem:[%s5 + $0x28] sm:$0xff]
  %v6489 = vld [vmem:[%s5 + $0x30] sm:$0xff]
  %v6490 = vld [vmem:[%s5 + $0x38] sm:$0xff]
  %v6491 = vld [vmem:[%s5 + $0x40] sm:$0xff]
  %v6492 = vld [vmem:[%s5 + $0x48] sm:$0xff]
  %v6493 = vld [vmem:[%s5 + $0x50] sm:$0xff]
  %v6494 = vld [vmem:[%s5 + $0x58] sm:$0xff]
  %v6495 = vld [vmem:[%s5 + $0x60] sm:$0xff]
  %v6496 = vld [vmem:[%s5 + $0x68] sm:$0xff]
  %v6497 = vld [vmem:[%s5 + $0x70] sm:$0xff]
  %v6498 = vld [vmem:[%s5 + $0x78] sm:$0xff]
  %v6499 = vld [vmem:[%s5 + $0x80] sm:$0xff]
  %v6500 = vld [vmem:[%s5 + $0x88] sm:$0xff]
  %v6501 = vld [vmem:[%s5 + $0x90] sm:$0xff]
  %v6502 = vld [vmem:[%s5 + $0x98] sm:$0xff]
  %v6503 = vld [vmem:[%s5 + $0xa0] sm:$0xff]
  %v6504 = vld [vmem:[%s5 + $0xa8] sm:$0xff]
  %v6505 = vld [vmem:[%s5 + $0xb0] sm:$0xff]
  %v6506 = vld [vmem:[%s5 + $0xb8] sm:$0xff]
  %v6507 = vld [vmem:[%s5 + $0xc0] sm:$0xff]
  %v6508 = vld [vmem:[%s5 + $0xc8] sm:$0xff]
  %v6509 = vld [vmem:[%s5 + $0xd0] sm:$0xff]
  %v6510 = vld [vmem:[%s5 + $0xd8] sm:$0xff]
  %v6511 = vld [vmem:[%s5 + $0xe0] sm:$0xff]
  %v6512 = vld [vmem:[%s5 + $0xe8] sm:$0xff]
  %v6513 = vld [vmem:[%s5 + $0xf0] sm:$0xff]
  %v6514 = vld [vmem:[%s5 + $0xf8] sm:$0xff]
  %6516 = vset.pattern.permute.xlu0 0
  %6517 = vperm.xlu0 %6516, %v6483
  %v6518 = vpop.permute.xlu0 %6517
  %6521 = vset.pattern.permute.xlu0 0
  %6522 = vperm.xlu0 %6521, %v6484
  %v6523 = vpop.permute.xlu0 %6522
  %6526 = vset.pattern.permute.xlu0 0
  %6527 = vperm.xlu0 %6526, %v6485
  %v6528 = vpop.permute.xlu0 %6527
  %6531 = vset.pattern.permute.xlu0 0
  %6532 = vperm.xlu0 %6531, %v6486
  %v6533 = vpop.permute.xlu0 %6532
  %6536 = vset.pattern.permute.xlu0 0
  %6537 = vperm.xlu0 %6536, %v6487
  %v6538 = vpop.permute.xlu0 %6537
  %6541 = vset.pattern.permute.xlu0 0
  %6542 = vperm.xlu0 %6541, %v6488
  %v6543 = vpop.permute.xlu0 %6542
  %6546 = vset.pattern.permute.xlu0 0
  %6547 = vperm.xlu0 %6546, %v6489
  %v6548 = vpop.permute.xlu0 %6547
  %6551 = vset.pattern.permute.xlu0 0
  %6552 = vperm.xlu0 %6551, %v6490
  %v6553 = vpop.permute.xlu0 %6552
  %6556 = vset.pattern.permute.xlu0 0
  %6557 = vperm.xlu0 %6556, %v6491
  %v6558 = vpop.permute.xlu0 %6557
  %6561 = vset.pattern.permute.xlu0 0
  %6562 = vperm.xlu0 %6561, %v6492
  %v6563 = vpop.permute.xlu0 %6562
  %6566 = vset.pattern.permute.xlu0 0
  %6567 = vperm.xlu0 %6566, %v6493
  %v6568 = vpop.permute.xlu0 %6567
  %6571 = vset.pattern.permute.xlu0 0
  %6572 = vperm.xlu0 %6571, %v6494
  %v6573 = vpop.permute.xlu0 %6572
  %6576 = vset.pattern.permute.xlu0 0
  %6577 = vperm.xlu0 %6576, %v6495
  %v6578 = vpop.permute.xlu0 %6577
  %6581 = vset.pattern.permute.xlu0 0
  %6582 = vperm.xlu0 %6581, %v6496
  %v6583 = vpop.permute.xlu0 %6582
  %6586 = vset.pattern.permute.xlu0 0
  %6587 = vperm.xlu0 %6586, %v6497
  %v6588 = vpop.permute.xlu0 %6587
  %6591 = vset.pattern.permute.xlu0 0
  %6592 = vperm.xlu0 %6591, %v6498
  %v6593 = vpop.permute.xlu0 %6592
  %6596 = vset.pattern.permute.xlu0 0
  %6597 = vperm.xlu0 %6596, %v6499
  %v6598 = vpop.permute.xlu0 %6597
  %6601 = vset.pattern.permute.xlu0 0
  %6602 = vperm.xlu0 %6601, %v6500
  %v6603 = vpop.permute.xlu0 %6602
  %6606 = vset.pattern.permute.xlu0 0
  %6607 = vperm.xlu0 %6606, %v6501
  %v6608 = vpop.permute.xlu0 %6607
  %6611 = vset.pattern.permute.xlu0 0
  %6612 = vperm.xlu0 %6611, %v6502
  %v6613 = vpop.permute.xlu0 %6612
  %6616 = vset.pattern.permute.xlu0 0
  %6617 = vperm.xlu0 %6616, %v6503
  %v6618 = vpop.permute.xlu0 %6617
  %6621 = vset.pattern.permute.xlu0 0
  %6622 = vperm.xlu0 %6621, %v6504
  %v6623 = vpop.permute.xlu0 %6622
  %6626 = vset.pattern.permute.xlu0 0
  %6627 = vperm.xlu0 %6626, %v6505
  %v6628 = vpop.permute.xlu0 %6627
  %6631 = vset.pattern.permute.xlu0 0
  %6632 = vperm.xlu0 %6631, %v6506
  %v6633 = vpop.permute.xlu0 %6632
  %6636 = vset.pattern.permute.xlu0 0
  %6637 = vperm.xlu0 %6636, %v6507
  %v6638 = vpop.permute.xlu0 %6637
  %6641 = vset.pattern.permute.xlu0 0
  %6642 = vperm.xlu0 %6641, %v6508
  %v6643 = vpop.permute.xlu0 %6642
  %6646 = vset.pattern.permute.xlu0 0
  %6647 = vperm.xlu0 %6646, %v6509
  %v6648 = vpop.permute.xlu0 %6647
  %6651 = vset.pattern.permute.xlu0 0
  %6652 = vperm.xlu0 %6651, %v6510
  %v6653 = vpop.permute.xlu0 %6652
  %6656 = vset.pattern.permute.xlu0 0
  %6657 = vperm.xlu0 %6656, %v6511
  %v6658 = vpop.permute.xlu0 %6657
  %6661 = vset.pattern.permute.xlu0 0
  %6662 = vperm.xlu0 %6661, %v6512
  %v6663 = vpop.permute.xlu0 %6662
  %6666 = vset.pattern.permute.xlu0 0
  %6667 = vperm.xlu0 %6666, %v6513
  %v6668 = vpop.permute.xlu0 %6667
  %6671 = vset.pattern.permute.xlu0 0
  %6672 = vperm.xlu0 %6671, %v6514
  %v6673 = vpop.permute.xlu0 %6672
  %v6675 = vmul.f32 %v6518, %v5939
  %v6676 = vmul.f32 %v6523, %v5940
  %v6677 = vmul.f32 %v6528, %v5941
  %v6678 = vmul.f32 %v6533, %v5942
  %v6679 = vmul.f32 %v6538, %v5943
  %v6680 = vmul.f32 %v6543, %v5944
  %v6681 = vmul.f32 %v6548, %v5945
  %v6682 = vmul.f32 %v6553, %v5946
  %v6683 = vmul.f32 %v6558, %v5947
  %v6684 = vmul.f32 %v6563, %v5948
  %v6685 = vmul.f32 %v6568, %v5949
  %v6686 = vmul.f32 %v6573, %v5950
  %v6687 = vmul.f32 %v6578, %v5951
  %v6688 = vmul.f32 %v6583, %v5952
  %v6689 = vmul.f32 %v6588, %v5953
  %v6690 = vmul.f32 %v6593, %v5954
  %v6691 = vmul.f32 %v6598, %v5955
  %v6692 = vmul.f32 %v6603, %v5956
  %v6693 = vmul.f32 %v6608, %v5957
  %v6694 = vmul.f32 %v6613, %v5958
  %v6695 = vmul.f32 %v6618, %v5959
  %v6696 = vmul.f32 %v6623, %v5960
  %v6697 = vmul.f32 %v6628, %v5961
  %v6698 = vmul.f32 %v6633, %v5962
  %v6699 = vmul.f32 %v6638, %v5963
  %v6700 = vmul.f32 %v6643, %v5964
  %v6701 = vmul.f32 %v6648, %v5965
  %v6702 = vmul.f32 %v6653, %v5966
  %v6703 = vmul.f32 %v6658, %v5967
  %v6704 = vmul.f32 %v6663, %v5968
  %v6705 = vmul.f32 %v6668, %v5969
  %v6706 = vmul.f32 %v6673, %v5970
  %v6707 = vmul.f32 %v6675, %v6172
  %v6708 = vmul.f32 %v6676, %v6182
  %v6709 = vmul.f32 %v6677, %v6192
  %v6710 = vmul.f32 %v6678, %v6202
  %v6711 = vmul.f32 %v6679, %v6212
  %v6712 = vmul.f32 %v6680, %v6222
  %v6713 = vmul.f32 %v6681, %v6232
  %v6714 = vmul.f32 %v6682, %v6242
  %v6715 = vmul.f32 %v6683, %v6252
  %v6716 = vmul.f32 %v6684, %v6262
  %v6717 = vmul.f32 %v6685, %v6272
  %v6718 = vmul.f32 %v6686, %v6282
  %v6719 = vmul.f32 %v6687, %v6292
  %v6720 = vmul.f32 %v6688, %v6302
  %v6721 = vmul.f32 %v6689, %v6312
  %v6722 = vmul.f32 %v6690, %v6322
  %v6723 = vmul.f32 %v6691, %v6332
  %v6724 = vmul.f32 %v6692, %v6342
  %v6725 = vmul.f32 %v6693, %v6352
  %v6726 = vmul.f32 %v6694, %v6362
  %v6727 = vmul.f32 %v6695, %v6372
  %v6728 = vmul.f32 %v6696, %v6382
  %v6729 = vmul.f32 %v6697, %v6392
  %v6730 = vmul.f32 %v6698, %v6402
  %v6731 = vmul.f32 %v6699, %v6412
  %v6732 = vmul.f32 %v6700, %v6422
  %v6733 = vmul.f32 %v6701, %v6432
  %v6734 = vmul.f32 %v6702, %v6442
  %v6735 = vmul.f32 %v6703, %v6452
  %v6736 = vmul.f32 %v6704, %v6462
  %v6737 = vmul.f32 %v6705, %v6472
  %v6738 = vmul.f32 %v6706, %v6482
  %v6739 = vld [vmem:[%s6] sm:$0xff]
  %v6740 = vld [vmem:[%s6 + $0x8] sm:$0xff]
  %v6741 = vld [vmem:[%s6 + $0x10] sm:$0xff]
  %v6742 = vld [vmem:[%s6 + $0x18] sm:$0xff]
  %v6743 = vld [vmem:[%s6 + $0x20] sm:$0xff]
  %v6744 = vld [vmem:[%s6 + $0x28] sm:$0xff]
  %v6745 = vld [vmem:[%s6 + $0x30] sm:$0xff]
  %v6746 = vld [vmem:[%s6 + $0x38] sm:$0xff]
  %v6747 = vld [vmem:[%s6 + $0x40] sm:$0xff]
  %v6748 = vld [vmem:[%s6 + $0x48] sm:$0xff]
  %v6749 = vld [vmem:[%s6 + $0x50] sm:$0xff]
  %v6750 = vld [vmem:[%s6 + $0x58] sm:$0xff]
  %v6751 = vld [vmem:[%s6 + $0x60] sm:$0xff]
  %v6752 = vld [vmem:[%s6 + $0x68] sm:$0xff]
  %v6753 = vld [vmem:[%s6 + $0x70] sm:$0xff]
  %v6754 = vld [vmem:[%s6 + $0x78] sm:$0xff]
  %v6755 = vld [vmem:[%s6 + $0x80] sm:$0xff]
  %v6756 = vld [vmem:[%s6 + $0x88] sm:$0xff]
  %v6757 = vld [vmem:[%s6 + $0x90] sm:$0xff]
  %v6758 = vld [vmem:[%s6 + $0x98] sm:$0xff]
  %v6759 = vld [vmem:[%s6 + $0xa0] sm:$0xff]
  %v6760 = vld [vmem:[%s6 + $0xa8] sm:$0xff]
  %v6761 = vld [vmem:[%s6 + $0xb0] sm:$0xff]
  %v6762 = vld [vmem:[%s6 + $0xb8] sm:$0xff]
  %v6763 = vld [vmem:[%s6 + $0xc0] sm:$0xff]
  %v6764 = vld [vmem:[%s6 + $0xc8] sm:$0xff]
  %v6765 = vld [vmem:[%s6 + $0xd0] sm:$0xff]
  %v6766 = vld [vmem:[%s6 + $0xd8] sm:$0xff]
  %v6767 = vld [vmem:[%s6 + $0xe0] sm:$0xff]
  %v6768 = vld [vmem:[%s6 + $0xe8] sm:$0xff]
  %v6769 = vld [vmem:[%s6 + $0xf0] sm:$0xff]
  %v6770 = vld [vmem:[%s6 + $0xf8] sm:$0xff]
  %6772 = vset.pattern.permute.xlu0 0
  %6773 = vperm.xlu0 %6772, %v6739
  %v6774 = vpop.permute.xlu0 %6773
  %6777 = vset.pattern.permute.xlu0 0
  %6778 = vperm.xlu0 %6777, %v6740
  %v6779 = vpop.permute.xlu0 %6778
  %6782 = vset.pattern.permute.xlu0 0
  %6783 = vperm.xlu0 %6782, %v6741
  %v6784 = vpop.permute.xlu0 %6783
  %6787 = vset.pattern.permute.xlu0 0
  %6788 = vperm.xlu0 %6787, %v6742
  %v6789 = vpop.permute.xlu0 %6788
  %6792 = vset.pattern.permute.xlu0 0
  %6793 = vperm.xlu0 %6792, %v6743
  %v6794 = vpop.permute.xlu0 %6793
  %6797 = vset.pattern.permute.xlu0 0
  %6798 = vperm.xlu0 %6797, %v6744
  %v6799 = vpop.permute.xlu0 %6798
  %6802 = vset.pattern.permute.xlu0 0
  %6803 = vperm.xlu0 %6802, %v6745
  %v6804 = vpop.permute.xlu0 %6803
  %6807 = vset.pattern.permute.xlu0 0
  %6808 = vperm.xlu0 %6807, %v6746
  %v6809 = vpop.permute.xlu0 %6808
  %6812 = vset.pattern.permute.xlu0 0
  %6813 = vperm.xlu0 %6812, %v6747
  %v6814 = vpop.permute.xlu0 %6813
  %6817 = vset.pattern.permute.xlu0 0
  %6818 = vperm.xlu0 %6817, %v6748
  %v6819 = vpop.permute.xlu0 %6818
  %6822 = vset.pattern.permute.xlu0 0
  %6823 = vperm.xlu0 %6822, %v6749
  %v6824 = vpop.permute.xlu0 %6823
  %6827 = vset.pattern.permute.xlu0 0
  %6828 = vperm.xlu0 %6827, %v6750
  %v6829 = vpop.permute.xlu0 %6828
  %6832 = vset.pattern.permute.xlu0 0
  %6833 = vperm.xlu0 %6832, %v6751
  %v6834 = vpop.permute.xlu0 %6833
  %6837 = vset.pattern.permute.xlu0 0
  %6838 = vperm.xlu0 %6837, %v6752
  %v6839 = vpop.permute.xlu0 %6838
  %6842 = vset.pattern.permute.xlu0 0
  %6843 = vperm.xlu0 %6842, %v6753
  %v6844 = vpop.permute.xlu0 %6843
  %6847 = vset.pattern.permute.xlu0 0
  %6848 = vperm.xlu0 %6847, %v6754
  %v6849 = vpop.permute.xlu0 %6848
  %6852 = vset.pattern.permute.xlu0 0
  %6853 = vperm.xlu0 %6852, %v6755
  %v6854 = vpop.permute.xlu0 %6853
  %6857 = vset.pattern.permute.xlu0 0
  %6858 = vperm.xlu0 %6857, %v6756
  %v6859 = vpop.permute.xlu0 %6858
  %6862 = vset.pattern.permute.xlu0 0
  %6863 = vperm.xlu0 %6862, %v6757
  %v6864 = vpop.permute.xlu0 %6863
  %6867 = vset.pattern.permute.xlu0 0
  %6868 = vperm.xlu0 %6867, %v6758
  %v6869 = vpop.permute.xlu0 %6868
  %6872 = vset.pattern.permute.xlu0 0
  %6873 = vperm.xlu0 %6872, %v6759
  %v6874 = vpop.permute.xlu0 %6873
  %6877 = vset.pattern.permute.xlu0 0
  %6878 = vperm.xlu0 %6877, %v6760
  %v6879 = vpop.permute.xlu0 %6878
  %6882 = vset.pattern.permute.xlu0 0
  %6883 = vperm.xlu0 %6882, %v6761
  %v6884 = vpop.permute.xlu0 %6883
  %6887 = vset.pattern.permute.xlu0 0
  %6888 = vperm.xlu0 %6887, %v6762
  %v6889 = vpop.permute.xlu0 %6888
  %6892 = vset.pattern.permute.xlu0 0
  %6893 = vperm.xlu0 %6892, %v6763
  %v6894 = vpop.permute.xlu0 %6893
  %6897 = vset.pattern.permute.xlu0 0
  %6898 = vperm.xlu0 %6897, %v6764
  %v6899 = vpop.permute.xlu0 %6898
  %6902 = vset.pattern.permute.xlu0 0
  %6903 = vperm.xlu0 %6902, %v6765
  %v6904 = vpop.permute.xlu0 %6903
  %6907 = vset.pattern.permute.xlu0 0
  %6908 = vperm.xlu0 %6907, %v6766
  %v6909 = vpop.permute.xlu0 %6908
  %6912 = vset.pattern.permute.xlu0 0
  %6913 = vperm.xlu0 %6912, %v6767
  %v6914 = vpop.permute.xlu0 %6913
  %6917 = vset.pattern.permute.xlu0 0
  %6918 = vperm.xlu0 %6917, %v6768
  %v6919 = vpop.permute.xlu0 %6918
  %6922 = vset.pattern.permute.xlu0 0
  %6923 = vperm.xlu0 %6922, %v6769
  %v6924 = vpop.permute.xlu0 %6923
  %6927 = vset.pattern.permute.xlu0 0
  %6928 = vperm.xlu0 %6927, %v6770
  %v6929 = vpop.permute.xlu0 %6928
  %v6931 = vadd.f32 %v6707, %v6774
  %v6932 = vadd.f32 %v6708, %v6779
  %v6933 = vadd.f32 %v6709, %v6784
  %v6934 = vadd.f32 %v6710, %v6789
  %v6935 = vadd.f32 %v6711, %v6794
  %v6936 = vadd.f32 %v6712, %v6799
  %v6937 = vadd.f32 %v6713, %v6804
  %v6938 = vadd.f32 %v6714, %v6809
  %v6939 = vadd.f32 %v6715, %v6814
  %v6940 = vadd.f32 %v6716, %v6819
  %v6941 = vadd.f32 %v6717, %v6824
  %v6942 = vadd.f32 %v6718, %v6829
  %v6943 = vadd.f32 %v6719, %v6834
  %v6944 = vadd.f32 %v6720, %v6839
  %v6945 = vadd.f32 %v6721, %v6844
  %v6946 = vadd.f32 %v6722, %v6849
  %v6947 = vadd.f32 %v6723, %v6854
  %v6948 = vadd.f32 %v6724, %v6859
  %v6949 = vadd.f32 %v6725, %v6864
  %v6950 = vadd.f32 %v6726, %v6869
  %v6951 = vadd.f32 %v6727, %v6874
  %v6952 = vadd.f32 %v6728, %v6879
  %v6953 = vadd.f32 %v6729, %v6884
  %v6954 = vadd.f32 %v6730, %v6889
  %v6955 = vadd.f32 %v6731, %v6894
  %v6956 = vadd.f32 %v6732, %v6899
  %v6957 = vadd.f32 %v6733, %v6904
  %v6958 = vadd.f32 %v6734, %v6909
  %v6959 = vadd.f32 %v6735, %v6914
  %v6960 = vadd.f32 %v6736, %v6919
  %v6961 = vadd.f32 %v6737, %v6924
  %v6962 = vadd.f32 %v6738, %v6929
  %6963 = vst.msk [vmem:[%s7] sm:$0xff] %vm5803, %v6931
  %6964 = vst.msk [vmem:[%s7 + $0x8] sm:$0xff] %vm5803, %v6932
  %6965 = vst.msk [vmem:[%s7 + $0x10] sm:$0xff] %vm5803, %v6933
  %6966 = vst.msk [vmem:[%s7 + $0x18] sm:$0xff] %vm5803, %v6934
  %6967 = vst.msk [vmem:[%s7 + $0x20] sm:$0xff] %vm5803, %v6935
  %6968 = vst.msk [vmem:[%s7 + $0x28] sm:$0xff] %vm5803, %v6936
  %6969 = vst.msk [vmem:[%s7 + $0x30] sm:$0xff] %vm5803, %v6937
  %6970 = vst.msk [vmem:[%s7 + $0x38] sm:$0xff] %vm5803, %v6938
  %6971 = vst.msk [vmem:[%s7 + $0x40] sm:$0xff] %vm5803, %v6939
  %6972 = vst.msk [vmem:[%s7 + $0x48] sm:$0xff] %vm5803, %v6940
  %6973 = vst.msk [vmem:[%s7 + $0x50] sm:$0xff] %vm5803, %v6941
  %6974 = vst.msk [vmem:[%s7 + $0x58] sm:$0xff] %vm5803, %v6942
  %6975 = vst.msk [vmem:[%s7 + $0x60] sm:$0xff] %vm5803, %v6943
  %6976 = vst.msk [vmem:[%s7 + $0x68] sm:$0xff] %vm5803, %v6944
  %6977 = vst.msk [vmem:[%s7 + $0x70] sm:$0xff] %vm5803, %v6945
  %6978 = vst.msk [vmem:[%s7 + $0x78] sm:$0xff] %vm5803, %v6946
  %6979 = vst.msk [vmem:[%s7 + $0x80] sm:$0xff] %vm5803, %v6947
  %6980 = vst.msk [vmem:[%s7 + $0x88] sm:$0xff] %vm5803, %v6948
  %6981 = vst.msk [vmem:[%s7 + $0x90] sm:$0xff] %vm5803, %v6949
  %6982 = vst.msk [vmem:[%s7 + $0x98] sm:$0xff] %vm5803, %v6950
  %6983 = vst.msk [vmem:[%s7 + $0xa0] sm:$0xff] %vm5803, %v6951
  %6984 = vst.msk [vmem:[%s7 + $0xa8] sm:$0xff] %vm5803, %v6952
  %6985 = vst.msk [vmem:[%s7 + $0xb0] sm:$0xff] %vm5803, %v6953
  %6986 = vst.msk [vmem:[%s7 + $0xb8] sm:$0xff] %vm5803, %v6954
  %6987 = vst.msk [vmem:[%s7 + $0xc0] sm:$0xff] %vm5803, %v6955
  %6988 = vst.msk [vmem:[%s7 + $0xc8] sm:$0xff] %vm5803, %v6956
  %6989 = vst.msk [vmem:[%s7 + $0xd0] sm:$0xff] %vm5803, %v6957
  %6990 = vst.msk [vmem:[%s7 + $0xd8] sm:$0xff] %vm5803, %v6958
  %6991 = vst.msk [vmem:[%s7 + $0xe0] sm:$0xff] %vm5803, %v6959
  %6992 = vst.msk [vmem:[%s7 + $0xe8] sm:$0xff] %vm5803, %v6960
  %6993 = vst.msk [vmem:[%s7 + $0xf0] sm:$0xff] %vm5803, %v6961
  %6994 = vst.msk [vmem:[%s7 + $0xf8] sm:$0xff] %vm5803, %v6962
  // Predicated region
  $region30: #{module_m_forward.1} parent=0 // pred_check
    _
  $region31: #{module_m_forward.1} parent=0 // pred_check_branch
    %6996 = sbr.rel (0) target = $region33
  $region32: #{module_m_forward.1} parent=0 // pred_region
    _
  $region33: #{module_m_forward.1} parent=0 // pred_fallthru
    _
  // Predicated region
  $region34: #{module_m_forward.1} parent=0 // pred_check
    _
  $region35: #{module_m_forward.1} parent=0 // pred_check_branch
    %6998 = sbr.rel (0) target = $region37
  $region36: #{module_m_forward.1} parent=0 // pred_region
    _
  $region37: #{module_m_forward.1} parent=0 // pred_fallthru
    _

</llo_original>
